<compile_context>
chip_gen: v7x
topology: tpu7x:2x2x1
jax: 0.10.0
libtpu: 0.0.40
codegen_flags: <defaults>
</compile_context>

<pallas_src>
import functools

import jax
import jax.numpy as jnp
from jax.experimental import pallas as pl
from jax.experimental.pallas import tpu as pltpu


def _round_up(x, m):
    return (x + m - 1) // m * m


# ----------------------------- fused Pallas kernel ---------------------------


def _make_fused_kernel(num_layers, T, Bp, Hp):
    """Builds the fused LSTM+FC kernel for static (num_layers, T, Bp, Hp).

    Ref order: x, (wih, whh, bias) * num_layers, fc_w, fc_b, out,
               seq_scratch (T,Bp,Hp), xproj_scratch (T,Bp,4Hp).
    Weights are pre-transposed/padded so gate k occupies lanes [k*Hp,(k+1)*Hp).
    """

    def kernel(*refs):
        x_ref = refs[0]
        layer_refs = refs[1:1 + 3 * num_layers]
        fcw_ref = refs[1 + 3 * num_layers]
        fcb_ref = refs[2 + 3 * num_layers]
        out_ref = refs[3 + 3 * num_layers]
        seq_ref = refs[4 + 3 * num_layers]   # (T, Bp, Hp)    inter-layer hiddens
        xp_ref = refs[5 + 3 * num_layers]    # (T, Bp, 4*Hp)  hoisted input proj

        h_last = jnp.zeros((Bp, Hp), jnp.float32)

        for layer in range(num_layers):
            wih_ref, whh_ref, b_ref = layer_refs[3 * layer:3 * layer + 3]

            # Hoisted input projection for ALL time steps: one big MXU matmul
            # (M = T*Bp fills sublanes instead of M = Bp per step).
            if layer == 0:
                xin = x_ref[...].reshape(T * Bp, x_ref.shape[-1])
            else:
                xin = seq_ref[...].reshape(T * Bp, Hp)
            xp = jnp.dot(xin, wih_ref[...], preferred_element_type=jnp.float32)
            xp_ref[...] = (xp + b_ref[...]).reshape(T, Bp, 4 * Hp)

            whh = whh_ref[...]  # keep resident across the time loop

            def step(t, carry, whh=whh):
                h, c = carry
                # One matmul per step on the serial critical path.
                gates = xp_ref[t] + jnp.dot(
                    h, whh, preferred_element_type=jnp.float32)
                # Lane-aligned gate slices (each gate owns a 128-lane tile).
                i_g = jax.nn.sigmoid(gates[:, 0:Hp])
                f_g = jax.nn.sigmoid(gates[:, Hp:2 * Hp])
                g_g = jnp.tanh(gates[:, 2 * Hp:3 * Hp])
                o_g = jax.nn.sigmoid(gates[:, 3 * Hp:4 * Hp])
                c = f_g * c + i_g * g_g
                h = o_g * jnp.tanh(c)
                seq_ref[t] = h
                return (h, c)

            zeros = jnp.zeros((Bp, Hp), jnp.float32)
            h_last, _ = jax.lax.fori_loop(0, T, step, (zeros, zeros),
                                          unroll=True)

        # FC head on the last hidden state of the last layer (lane-dense out).
        out_ref[...] = (
            jnp.dot(h_last, fcw_ref[...], preferred_element_type=jnp.float32)
            + fcb_ref[...]
        )

    return kernel


# ----------------------------- host-side weight prep --------------------------


def _pad_gate_weight(w, H, Hp, din, din_p):
    """PyTorch (4H, din) weight -> (din_p, 4*Hp); gate k in lanes [k*Hp, k*Hp+H)."""
    w4 = w.reshape(4, H, din)                       # gate-major rows (i,f,g,o)
    w4 = jnp.transpose(w4, (0, 2, 1))               # (4, din, H)
    w4p = jnp.zeros((4, din_p, Hp), jnp.float32).at[:, :din, :H].set(w4)
    return jnp.transpose(w4p, (1, 0, 2)).reshape(din_p, 4 * Hp)


def _pad_gate_bias(b, H, Hp):
    b4 = b.reshape(4, H)
    b4p = jnp.zeros((4, Hp), jnp.float32).at[:, :H].set(b4)
    return b4p.reshape(1, 4 * Hp)


@functools.partial(jax.jit, static_argnames=("ahead", "output_size"))
def lstm_forward(x, lstm_params, fc_w, fc_b, *, ahead, output_size):
    """Matches LSTM.forward: x (B, T, input_size) -> (B, ahead, output_size)."""
    B, T, Din = x.shape
    H = lstm_params[0][1].shape[1]        # w_hh: (4H, H)
    num_layers = len(lstm_params)
    F = output_size * ahead

    Bp = _round_up(B, 8)                  # f32 sublane granularity
    Hp = _round_up(H, 128)                # one 128-lane tile per gate
    Dp = _round_up(Din, 128)
    Fp = _round_up(F, 128)

    # (B, T, Din) -> (T, Bp, Dp), zero padded, time-major for the recurrence.
    x_tbd = jnp.transpose(x.astype(jnp.float32), (1, 0, 2))
    x_pad = jnp.zeros((T, Bp, Dp), jnp.float32).at[:, :B, :Din].set(x_tbd)

    vmem_spec = pl.BlockSpec(memory_space=pltpu.MemorySpace.VMEM)

    args = [x_pad]
    in_specs = [vmem_spec]
    for layer, (w_ih, w_hh, b_ih, b_hh) in enumerate(lstm_params):
        din = Din if layer == 0 else H
        din_p = Dp if layer == 0 else Hp
        args.append(_pad_gate_weight(w_ih, H, Hp, din, din_p))   # (din_p, 4Hp)
        args.append(_pad_gate_weight(w_hh, H, Hp, H, Hp))        # (Hp, 4Hp)
        args.append(_pad_gate_bias(b_ih + b_hh, H, Hp))          # (1, 4Hp)
        in_specs += [vmem_spec] * 3

    fc_w_pad = jnp.zeros((Hp, Fp), jnp.float32).at[:H, :F].set(
        jnp.transpose(fc_w))
    fc_b_pad = jnp.zeros((1, Fp), jnp.float32).at[0, :F].set(fc_b)
    args += [fc_w_pad, fc_b_pad]
    in_specs += [vmem_spec] * 2

    kernel = _make_fused_kernel(num_layers, T, Bp, Hp)
    y_pad = pl.pallas_call(
        kernel,
        out_shape=jax.ShapeDtypeStruct((Bp, Fp), jnp.float32),
        in_specs=in_specs,
        out_specs=vmem_spec,
        scratch_shapes=[
            pltpu.VMEM((T, Bp, Hp), jnp.float32),       # inter-layer sequence
            pltpu.VMEM((T, Bp, 4 * Hp), jnp.float32),   # hoisted input projection
        ],
    )(*args)

    return y_pad[:B, :F].reshape(B, ahead, output_size)


# ----------------------------- pure-JAX reference ----------------------------


def lstm_reference(x, lstm_params, fc_w, fc_b, *, ahead, output_size):
    B = x.shape[0]
    inp = x
    for (w_ih, w_hh, b_ih, b_hh) in lstm_params:
        H = w_hh.shape[1]

        def step(carry, x_t, w_ih=w_ih, w_hh=w_hh, b_ih=b_ih, b_hh=b_hh):
            h, c = carry
            gates = x_t @ w_ih.T + h @ w_hh.T + b_ih + b_hh
            i, f, g, o = jnp.split(gates, 4, axis=-1)
            i = jax.nn.sigmoid(i)
            f = jax.nn.sigmoid(f)
            g = jnp.tanh(g)
            o = jax.nn.sigmoid(o)
            c = f * c + i * g
            h = o * jnp.tanh(c)
            return (h, c), h

        h0 = jnp.zeros((B, H), jnp.float32)
        c0 = jnp.zeros((B, H), jnp.float32)
        _, hs = jax.lax.scan(step, (h0, c0), jnp.transpose(inp, (1, 0, 2)))
        inp = jnp.transpose(hs, (1, 0, 2))
    last = inp[:, -1, :]
    y = last @ fc_w.T + fc_b
    return y.reshape(-1, ahead, output_size)


# ----------------------------- main -------------------------------------------


if __name__ == "__main__":
    B, T = 4, 8
    input_size, hidden_size = 8, 32
    output_size, ahead, num_layers = 3, 2, 2

    key = jax.random.PRNGKey(0)
    k_x, key = jax.random.split(key)
    x = jax.random.normal(k_x, (B, T, input_size), dtype=jnp.float32)

    # Deterministic parameter init (PyTorch default: U(-1/sqrt(H), 1/sqrt(H))).
    bound = 1.0 / jnp.sqrt(jnp.float32(hidden_size))
    lstm_params = []
    for layer in range(num_layers):
        din = input_size if layer == 0 else hidden_size
        keys = jax.random.split(jax.random.fold_in(key, layer), 4)
        w_ih = jax.random.uniform(keys[0], (4 * hidden_size, din),
                                  minval=-bound, maxval=bound, dtype=jnp.float32)
        w_hh = jax.random.uniform(keys[1], (4 * hidden_size, hidden_size),
                                  minval=-bound, maxval=bound, dtype=jnp.float32)
        b_ih = jax.random.uniform(keys[2], (4 * hidden_size,),
                                  minval=-bound, maxval=bound, dtype=jnp.float32)
        b_hh = jax.random.uniform(keys[3], (4 * hidden_size,),
                                  minval=-bound, maxval=bound, dtype=jnp.float32)
        lstm_params.append((w_ih, w_hh, b_ih, b_hh))
    lstm_params = tuple(lstm_params)

    k_fw, k_fb = jax.random.split(jax.random.fold_in(key, 1000))
    fc_bound = 1.0 / jnp.sqrt(jnp.float32(hidden_size))
    fc_w = jax.random.uniform(k_fw, (output_size * ahead, hidden_size),
                              minval=-fc_bound, maxval=fc_bound, dtype=jnp.float32)
    fc_b = jax.random.uniform(k_fb, (output_size * ahead,),
                              minval=-fc_bound, maxval=fc_bound, dtype=jnp.float32)

    out = lstm_forward(x, lstm_params, fc_w, fc_b,
                       ahead=ahead, output_size=output_size)
    out = jax.block_until_ready(out)

    ref = lstm_reference(x, lstm_params, fc_w, fc_b,
                         ahead=ahead, output_size=output_size)
    assert out.shape == (B, ahead, output_size), out.shape
    assert jnp.allclose(out, ref, atol=1e-5, rtol=1e-5), \
        f"max abs err {jnp.max(jnp.abs(out - ref))}"

    print("KERNEL_OK")
</pallas_src>

<mosaic_0001>
module attributes {stable_mosaic.version = 11 : i64} {
  func.func @kernel(%arg0: memref<8x8x128xf32, #tpu.memory_space<vmem>>, %arg1: memref<128x512xf32, #tpu.memory_space<vmem>>, %arg2: memref<128x512xf32, #tpu.memory_space<vmem>>, %arg3: memref<1x512xf32, #tpu.memory_space<vmem>>, %arg4: memref<128x512xf32, #tpu.memory_space<vmem>>, %arg5: memref<128x512xf32, #tpu.memory_space<vmem>>, %arg6: memref<1x512xf32, #tpu.memory_space<vmem>>, %arg7: memref<128x128xf32, #tpu.memory_space<vmem>>, %arg8: memref<1x128xf32, #tpu.memory_space<vmem>>, %arg9: memref<8x128xf32, #tpu.memory_space<vmem>>, %arg10: memref<8x8x128xf32, #tpu.memory_space<vmem>>, %arg11: memref<8x8x512xf32, #tpu.memory_space<vmem>>) attributes {dimension_semantics = [], scalar_prefetch = 0 : i64, scratch_operands = 2 : i64, tpu.core_type = #tpu.core_type<tc>} {
    %c0 = arith.constant 0 : index
    %c0_0 = arith.constant 0 : index
    %c0_1 = arith.constant 0 : index
    %0 = vector.load %arg0[%c0, %c0_0, %c0_1] : memref<8x8x128xf32, #tpu.memory_space<vmem>>, vector<8x8x128xf32>
    %1 = vector.shape_cast %0 : vector<8x8x128xf32> to vector<64x128xf32>
    %c0_2 = arith.constant 0 : index
    %c0_3 = arith.constant 0 : index
    %2 = vector.load %arg1[%c0_2, %c0_3] : memref<128x512xf32, #tpu.memory_space<vmem>>, vector<128x512xf32>
    %cst = arith.constant dense<0.000000e+00> : vector<64x512xf32>
    %3 = tpu.matmul %1, %2, %cst {dimension_numbers = #tpu.dot_dimension_numbers<[1], [0], [0], [1], [0, 0, 1, 1], [], []>} : vector<64x128xf32>, vector<128x512xf32>, vector<64x512xf32> -> vector<64x512xf32>
    %c0_4 = arith.constant 0 : index
    %c0_5 = arith.constant 0 : index
    %4 = vector.load %arg3[%c0_4, %c0_5] : memref<1x512xf32, #tpu.memory_space<vmem>>, vector<1x512xf32>
    %5 = vector.broadcast %4 : vector<1x512xf32> to vector<64x512xf32>
    %6 = arith.addf %3, %5 : vector<64x512xf32>
    %7 = vector.shape_cast %6 : vector<64x512xf32> to vector<8x8x512xf32>
    %c0_6 = arith.constant 0 : index
    %c0_7 = arith.constant 0 : index
    %c0_8 = arith.constant 0 : index
    %8 = vector.load %arg11[%c0_6, %c0_7, %c0_8] : memref<8x8x512xf32, #tpu.memory_space<vmem>>, vector<8x8x512xf32>
    tpu.vector_store %arg11[%c0_6, %c0_7, %c0_8], %7 {strides = array<i32>} : memref<8x8x512xf32, #tpu.memory_space<vmem>>, vector<8x8x512xf32>,
    %c0_9 = arith.constant 0 : index
    %c0_10 = arith.constant 0 : index
    %9 = vector.load %arg2[%c0_9, %c0_10] : memref<128x512xf32, #tpu.memory_space<vmem>>, vector<128x512xf32>
    %cst_11 = arith.constant 0.000000e+00 : f32
    %10 = vector.broadcast %cst_11 : f32 to vector<8x128xf32>
    %c0_i32 = arith.constant 0 : i32
    %11 = arith.index_cast %c0_i32 : i32 to index
    %c0_12 = arith.constant 0 : index
    %c0_13 = arith.constant 0 : index
    %12 = vector.load %arg11[%11, %c0_12, %c0_13] : memref<8x8x512xf32, #tpu.memory_space<vmem>>, vector<1x8x512xf32>
    %13 = vector.shape_cast %12 : vector<1x8x512xf32> to vector<8x512xf32>
    %cst_14 = arith.constant dense<0.000000e+00> : vector<8x512xf32>
    %14 = tpu.matmul %10, %9, %cst_14 {dimension_numbers = #tpu.dot_dimension_numbers<[1], [0], [0], [1], [0, 0, 1, 1], [], []>} : vector<8x128xf32>, vector<128x512xf32>, vector<8x512xf32> -> vector<8x512xf32>
    %15 = arith.addf %13, %14 : vector<8x512xf32>
    %16 = vector.extract_strided_slice %15 {offsets = [0, 0], sizes = [8, 128], strides = [1, 1]} : vector<8x512xf32> to vector<8x128xf32>
    %17 = arith.negf %16 : vector<8x128xf32>
    %18 = math.exp %17 : vector<8x128xf32>
    %cst_15 = arith.constant 1.000000e+00 : f32
    %19 = vector.broadcast %cst_15 : f32 to vector<8x128xf32>
    %20 = arith.addf %19, %18 : vector<8x128xf32>
    %21 = arith.divf %19, %20 : vector<8x128xf32>
    %22 = vector.extract_strided_slice %15 {offsets = [0, 128], sizes = [8, 128], strides = [1, 1]} : vector<8x512xf32> to vector<8x128xf32>
    %23 = arith.negf %22 : vector<8x128xf32>
    %24 = math.exp %23 : vector<8x128xf32>
    %cst_16 = arith.constant 1.000000e+00 : f32
    %25 = vector.broadcast %cst_16 : f32 to vector<8x128xf32>
    %26 = arith.addf %25, %24 : vector<8x128xf32>
    %27 = arith.divf %25, %26 : vector<8x128xf32>
    %28 = vector.extract_strided_slice %15 {offsets = [0, 256], sizes = [8, 128], strides = [1, 1]} : vector<8x512xf32> to vector<8x128xf32>
    %29 = math.tanh %28 : vector<8x128xf32>
    %30 = vector.extract_strided_slice %15 {offsets = [0, 384], sizes = [8, 128], strides = [1, 1]} : vector<8x512xf32> to vector<8x128xf32>
    %31 = arith.negf %30 : vector<8x128xf32>
    %32 = math.exp %31 : vector<8x128xf32>
    %cst_17 = arith.constant 1.000000e+00 : f32
    %33 = vector.broadcast %cst_17 : f32 to vector<8x128xf32>
    %34 = arith.addf %33, %32 : vector<8x128xf32>
    %35 = arith.divf %33, %34 : vector<8x128xf32>
    %36 = arith.mulf %27, %10 : vector<8x128xf32>
    %37 = arith.mulf %21, %29 : vector<8x128xf32>
    %38 = arith.addf %36, %37 : vector<8x128xf32>
    %39 = math.tanh %38 : vector<8x128xf32>
    %40 = arith.mulf %35, %39 : vector<8x128xf32>
    %41 = arith.index_cast %c0_i32 : i32 to index
    %c0_18 = arith.constant 0 : index
    %c0_19 = arith.constant 0 : index
    %42 = vector.load %arg10[%41, %c0_18, %c0_19] : memref<8x8x128xf32, #tpu.memory_space<vmem>>, vector<1x8x128xf32>
    %43 = vector.shape_cast %42 : vector<1x8x128xf32> to vector<8x128xf32>
    %44 = vector.shape_cast %40 : vector<8x128xf32> to vector<1x8x128xf32>
    tpu.vector_store %arg10[%41, %c0_18, %c0_19], %44 {strides = array<i32>} : memref<8x8x128xf32, #tpu.memory_space<vmem>>, vector<1x8x128xf32>,
    %c1_i32 = arith.constant 1 : i32
    %45 = arith.index_cast %c1_i32 : i32 to index
    %c0_20 = arith.constant 0 : index
    %c0_21 = arith.constant 0 : index
    %46 = vector.load %arg11[%45, %c0_20, %c0_21] : memref<8x8x512xf32, #tpu.memory_space<vmem>>, vector<1x8x512xf32>
    %47 = vector.shape_cast %46 : vector<1x8x512xf32> to vector<8x512xf32>
    %cst_22 = arith.constant dense<0.000000e+00> : vector<8x512xf32>
    %48 = tpu.matmul %40, %9, %cst_22 {dimension_numbers = #tpu.dot_dimension_numbers<[1], [0], [0], [1], [0, 0, 1, 1], [], []>} : vector<8x128xf32>, vector<128x512xf32>, vector<8x512xf32> -> vector<8x512xf32>
    %49 = arith.addf %47, %48 : vector<8x512xf32>
    %50 = vector.extract_strided_slice %49 {offsets = [0, 0], sizes = [8, 128], strides = [1, 1]} : vector<8x512xf32> to vector<8x128xf32>
    %51 = arith.negf %50 : vector<8x128xf32>
    %52 = math.exp %51 : vector<8x128xf32>
    %cst_23 = arith.constant 1.000000e+00 : f32
    %53 = vector.broadcast %cst_23 : f32 to vector<8x128xf32>
    %54 = arith.addf %53, %52 : vector<8x128xf32>
    %55 = arith.divf %53, %54 : vector<8x128xf32>
    %56 = vector.extract_strided_slice %49 {offsets = [0, 128], sizes = [8, 128], strides = [1, 1]} : vector<8x512xf32> to vector<8x128xf32>
    %57 = arith.negf %56 : vector<8x128xf32>
    %58 = math.exp %57 : vector<8x128xf32>
    %cst_24 = arith.constant 1.000000e+00 : f32
    %59 = vector.broadcast %cst_24 : f32 to vector<8x128xf32>
    %60 = arith.addf %59, %58 : vector<8x128xf32>
    %61 = arith.divf %59, %60 : vector<8x128xf32>
    %62 = vector.extract_strided_slice %49 {offsets = [0, 256], sizes = [8, 128], strides = [1, 1]} : vector<8x512xf32> to vector<8x128xf32>
    %63 = math.tanh %62 : vector<8x128xf32>
    %64 = vector.extract_strided_slice %49 {offsets = [0, 384], sizes = [8, 128], strides = [1, 1]} : vector<8x512xf32> to vector<8x128xf32>
    %65 = arith.negf %64 : vector<8x128xf32>
    %66 = math.exp %65 : vector<8x128xf32>
    %cst_25 = arith.constant 1.000000e+00 : f32
    %67 = vector.broadcast %cst_25 : f32 to vector<8x128xf32>
    %68 = arith.addf %67, %66 : vector<8x128xf32>
    %69 = arith.divf %67, %68 : vector<8x128xf32>
    %70 = arith.mulf %61, %38 : vector<8x128xf32>
    %71 = arith.mulf %55, %63 : vector<8x128xf32>
    %72 = arith.addf %70, %71 : vector<8x128xf32>
    %73 = math.tanh %72 : vector<8x128xf32>
    %74 = arith.mulf %69, %73 : vector<8x128xf32>
    %75 = arith.index_cast %c1_i32 : i32 to index
    %c0_26 = arith.constant 0 : index
    %c0_27 = arith.constant 0 : index
    %76 = vector.load %arg10[%75, %c0_26, %c0_27] : memref<8x8x128xf32, #tpu.memory_space<vmem>>, vector<1x8x128xf32>
    %77 = vector.shape_cast %76 : vector<1x8x128xf32> to vector<8x128xf32>
    %78 = vector.shape_cast %74 : vector<8x128xf32> to vector<1x8x128xf32>
    tpu.vector_store %arg10[%75, %c0_26, %c0_27], %78 {strides = array<i32>} : memref<8x8x128xf32, #tpu.memory_space<vmem>>, vector<1x8x128xf32>,
    %c2_i32 = arith.constant 2 : i32
    %79 = arith.index_cast %c2_i32 : i32 to index
    %c0_28 = arith.constant 0 : index
    %c0_29 = arith.constant 0 : index
    %80 = vector.load %arg11[%79, %c0_28, %c0_29] : memref<8x8x512xf32, #tpu.memory_space<vmem>>, vector<1x8x512xf32>
    %81 = vector.shape_cast %80 : vector<1x8x512xf32> to vector<8x512xf32>
    %cst_30 = arith.constant dense<0.000000e+00> : vector<8x512xf32>
    %82 = tpu.matmul %74, %9, %cst_30 {dimension_numbers = #tpu.dot_dimension_numbers<[1], [0], [0], [1], [0, 0, 1, 1], [], []>} : vector<8x128xf32>, vector<128x512xf32>, vector<8x512xf32> -> vector<8x512xf32>
    %83 = arith.addf %81, %82 : vector<8x512xf32>
    %84 = vector.extract_strided_slice %83 {offsets = [0, 0], sizes = [8, 128], strides = [1, 1]} : vector<8x512xf32> to vector<8x128xf32>
    %85 = arith.negf %84 : vector<8x128xf32>
    %86 = math.exp %85 : vector<8x128xf32>
    %cst_31 = arith.constant 1.000000e+00 : f32
    %87 = vector.broadcast %cst_31 : f32 to vector<8x128xf32>
    %88 = arith.addf %87, %86 : vector<8x128xf32>
    %89 = arith.divf %87, %88 : vector<8x128xf32>
    %90 = vector.extract_strided_slice %83 {offsets = [0, 128], sizes = [8, 128], strides = [1, 1]} : vector<8x512xf32> to vector<8x128xf32>
    %91 = arith.negf %90 : vector<8x128xf32>
    %92 = math.exp %91 : vector<8x128xf32>
    %cst_32 = arith.constant 1.000000e+00 : f32
    %93 = vector.broadcast %cst_32 : f32 to vector<8x128xf32>
    %94 = arith.addf %93, %92 : vector<8x128xf32>
    %95 = arith.divf %93, %94 : vector<8x128xf32>
    %96 = vector.extract_strided_slice %83 {offsets = [0, 256], sizes = [8, 128], strides = [1, 1]} : vector<8x512xf32> to vector<8x128xf32>
    %97 = math.tanh %96 : vector<8x128xf32>
    %98 = vector.extract_strided_slice %83 {offsets = [0, 384], sizes = [8, 128], strides = [1, 1]} : vector<8x512xf32> to vector<8x128xf32>
    %99 = arith.negf %98 : vector<8x128xf32>
    %100 = math.exp %99 : vector<8x128xf32>
    %cst_33 = arith.constant 1.000000e+00 : f32
    %101 = vector.broadcast %cst_33 : f32 to vector<8x128xf32>
    %102 = arith.addf %101, %100 : vector<8x128xf32>
    %103 = arith.divf %101, %102 : vector<8x128xf32>
    %104 = arith.mulf %95, %72 : vector<8x128xf32>
    %105 = arith.mulf %89, %97 : vector<8x128xf32>
    %106 = arith.addf %104, %105 : vector<8x128xf32>
    %107 = math.tanh %106 : vector<8x128xf32>
    %108 = arith.mulf %103, %107 : vector<8x128xf32>
    %109 = arith.index_cast %c2_i32 : i32 to index
    %c0_34 = arith.constant 0 : index
    %c0_35 = arith.constant 0 : index
    %110 = vector.load %arg10[%109, %c0_34, %c0_35] : memref<8x8x128xf32, #tpu.memory_space<vmem>>, vector<1x8x128xf32>
    %111 = vector.shape_cast %110 : vector<1x8x128xf32> to vector<8x128xf32>
    %112 = vector.shape_cast %108 : vector<8x128xf32> to vector<1x8x128xf32>
    tpu.vector_store %arg10[%109, %c0_34, %c0_35], %112 {strides = array<i32>} : memref<8x8x128xf32, #tpu.memory_space<vmem>>, vector<1x8x128xf32>,
    %c3_i32 = arith.constant 3 : i32
    %113 = arith.index_cast %c3_i32 : i32 to index
    %c0_36 = arith.constant 0 : index
    %c0_37 = arith.constant 0 : index
    %114 = vector.load %arg11[%113, %c0_36, %c0_37] : memref<8x8x512xf32, #tpu.memory_space<vmem>>, vector<1x8x512xf32>
    %115 = vector.shape_cast %114 : vector<1x8x512xf32> to vector<8x512xf32>
    %cst_38 = arith.constant dense<0.000000e+00> : vector<8x512xf32>
    %116 = tpu.matmul %108, %9, %cst_38 {dimension_numbers = #tpu.dot_dimension_numbers<[1], [0], [0], [1], [0, 0, 1, 1], [], []>} : vector<8x128xf32>, vector<128x512xf32>, vector<8x512xf32> -> vector<8x512xf32>
    %117 = arith.addf %115, %116 : vector<8x512xf32>
    %118 = vector.extract_strided_slice %117 {offsets = [0, 0], sizes = [8, 128], strides = [1, 1]} : vector<8x512xf32> to vector<8x128xf32>
    %119 = arith.negf %118 : vector<8x128xf32>
    %120 = math.exp %119 : vector<8x128xf32>
    %cst_39 = arith.constant 1.000000e+00 : f32
    %121 = vector.broadcast %cst_39 : f32 to vector<8x128xf32>
    %122 = arith.addf %121, %120 : vector<8x128xf32>
    %123 = arith.divf %121, %122 : vector<8x128xf32>
    %124 = vector.extract_strided_slice %117 {offsets = [0, 128], sizes = [8, 128], strides = [1, 1]} : vector<8x512xf32> to vector<8x128xf32>
    %125 = arith.negf %124 : vector<8x128xf32>
    %126 = math.exp %125 : vector<8x128xf32>
    %cst_40 = arith.constant 1.000000e+00 : f32
    %127 = vector.broadcast %cst_40 : f32 to vector<8x128xf32>
    %128 = arith.addf %127, %126 : vector<8x128xf32>
    %129 = arith.divf %127, %128 : vector<8x128xf32>
    %130 = vector.extract_strided_slice %117 {offsets = [0, 256], sizes = [8, 128], strides = [1, 1]} : vector<8x512xf32> to vector<8x128xf32>
    %131 = math.tanh %130 : vector<8x128xf32>
    %132 = vector.extract_strided_slice %117 {offsets = [0, 384], sizes = [8, 128], strides = [1, 1]} : vector<8x512xf32> to vector<8x128xf32>
    %133 = arith.negf %132 : vector<8x128xf32>
    %134 = math.exp %133 : vector<8x128xf32>
    %cst_41 = arith.constant 1.000000e+00 : f32
    %135 = vector.broadcast %cst_41 : f32 to vector<8x128xf32>
    %136 = arith.addf %135, %134 : vector<8x128xf32>
    %137 = arith.divf %135, %136 : vector<8x128xf32>
    %138 = arith.mulf %129, %106 : vector<8x128xf32>
    %139 = arith.mulf %123, %131 : vector<8x128xf32>
    %140 = arith.addf %138, %139 : vector<8x128xf32>
    %141 = math.tanh %140 : vector<8x128xf32>
    %142 = arith.mulf %137, %141 : vector<8x128xf32>
    %143 = arith.index_cast %c3_i32 : i32 to index
    %c0_42 = arith.constant 0 : index
    %c0_43 = arith.constant 0 : index
    %144 = vector.load %arg10[%143, %c0_42, %c0_43] : memref<8x8x128xf32, #tpu.memory_space<vmem>>, vector<1x8x128xf32>
    %145 = vector.shape_cast %144 : vector<1x8x128xf32> to vector<8x128xf32>
    %146 = vector.shape_cast %142 : vector<8x128xf32> to vector<1x8x128xf32>
    tpu.vector_store %arg10[%143, %c0_42, %c0_43], %146 {strides = array<i32>} : memref<8x8x128xf32, #tpu.memory_space<vmem>>, vector<1x8x128xf32>,
    %c4_i32 = arith.constant 4 : i32
    %147 = arith.index_cast %c4_i32 : i32 to index
    %c0_44 = arith.constant 0 : index
    %c0_45 = arith.constant 0 : index
    %148 = vector.load %arg11[%147, %c0_44, %c0_45] : memref<8x8x512xf32, #tpu.memory_space<vmem>>, vector<1x8x512xf32>
    %149 = vector.shape_cast %148 : vector<1x8x512xf32> to vector<8x512xf32>
    %cst_46 = arith.constant dense<0.000000e+00> : vector<8x512xf32>
    %150 = tpu.matmul %142, %9, %cst_46 {dimension_numbers = #tpu.dot_dimension_numbers<[1], [0], [0], [1], [0, 0, 1, 1], [], []>} : vector<8x128xf32>, vector<128x512xf32>, vector<8x512xf32> -> vector<8x512xf32>
    %151 = arith.addf %149, %150 : vector<8x512xf32>
    %152 = vector.extract_strided_slice %151 {offsets = [0, 0], sizes = [8, 128], strides = [1, 1]} : vector<8x512xf32> to vector<8x128xf32>
    %153 = arith.negf %152 : vector<8x128xf32>
    %154 = math.exp %153 : vector<8x128xf32>
    %cst_47 = arith.constant 1.000000e+00 : f32
    %155 = vector.broadcast %cst_47 : f32 to vector<8x128xf32>
    %156 = arith.addf %155, %154 : vector<8x128xf32>
    %157 = arith.divf %155, %156 : vector<8x128xf32>
    %158 = vector.extract_strided_slice %151 {offsets = [0, 128], sizes = [8, 128], strides = [1, 1]} : vector<8x512xf32> to vector<8x128xf32>
    %159 = arith.negf %158 : vector<8x128xf32>
    %160 = math.exp %159 : vector<8x128xf32>
    %cst_48 = arith.constant 1.000000e+00 : f32
    %161 = vector.broadcast %cst_48 : f32 to vector<8x128xf32>
    %162 = arith.addf %161, %160 : vector<8x128xf32>
    %163 = arith.divf %161, %162 : vector<8x128xf32>
    %164 = vector.extract_strided_slice %151 {offsets = [0, 256], sizes = [8, 128], strides = [1, 1]} : vector<8x512xf32> to vector<8x128xf32>
    %165 = math.tanh %164 : vector<8x128xf32>
    %166 = vector.extract_strided_slice %151 {offsets = [0, 384], sizes = [8, 128], strides = [1, 1]} : vector<8x512xf32> to vector<8x128xf32>
    %167 = arith.negf %166 : vector<8x128xf32>
    %168 = math.exp %167 : vector<8x128xf32>
    %cst_49 = arith.constant 1.000000e+00 : f32
    %169 = vector.broadcast %cst_49 : f32 to vector<8x128xf32>
    %170 = arith.addf %169, %168 : vector<8x128xf32>
    %171 = arith.divf %169, %170 : vector<8x128xf32>
    %172 = arith.mulf %163, %140 : vector<8x128xf32>
    %173 = arith.mulf %157, %165 : vector<8x128xf32>
    %174 = arith.addf %172, %173 : vector<8x128xf32>
    %175 = math.tanh %174 : vector<8x128xf32>
    %176 = arith.mulf %171, %175 : vector<8x128xf32>
    %177 = arith.index_cast %c4_i32 : i32 to index
    %c0_50 = arith.constant 0 : index
    %c0_51 = arith.constant 0 : index
    %178 = vector.load %arg10[%177, %c0_50, %c0_51] : memref<8x8x128xf32, #tpu.memory_space<vmem>>, vector<1x8x128xf32>
    %179 = vector.shape_cast %178 : vector<1x8x128xf32> to vector<8x128xf32>
    %180 = vector.shape_cast %176 : vector<8x128xf32> to vector<1x8x128xf32>
    tpu.vector_store %arg10[%177, %c0_50, %c0_51], %180 {strides = array<i32>} : memref<8x8x128xf32, #tpu.memory_space<vmem>>, vector<1x8x128xf32>,
    %c5_i32 = arith.constant 5 : i32
    %181 = arith.index_cast %c5_i32 : i32 to index
    %c0_52 = arith.constant 0 : index
    %c0_53 = arith.constant 0 : index
    %182 = vector.load %arg11[%181, %c0_52, %c0_53] : memref<8x8x512xf32, #tpu.memory_space<vmem>>, vector<1x8x512xf32>
    %183 = vector.shape_cast %182 : vector<1x8x512xf32> to vector<8x512xf32>
    %cst_54 = arith.constant dense<0.000000e+00> : vector<8x512xf32>
    %184 = tpu.matmul %176, %9, %cst_54 {dimension_numbers = #tpu.dot_dimension_numbers<[1], [0], [0], [1], [0, 0, 1, 1], [], []>} : vector<8x128xf32>, vector<128x512xf32>, vector<8x512xf32> -> vector<8x512xf32>
    %185 = arith.addf %183, %184 : vector<8x512xf32>
    %186 = vector.extract_strided_slice %185 {offsets = [0, 0], sizes = [8, 128], strides = [1, 1]} : vector<8x512xf32> to vector<8x128xf32>
    %187 = arith.negf %186 : vector<8x128xf32>
    %188 = math.exp %187 : vector<8x128xf32>
    %cst_55 = arith.constant 1.000000e+00 : f32
    %189 = vector.broadcast %cst_55 : f32 to vector<8x128xf32>
    %190 = arith.addf %189, %188 : vector<8x128xf32>
    %191 = arith.divf %189, %190 : vector<8x128xf32>
    %192 = vector.extract_strided_slice %185 {offsets = [0, 128], sizes = [8, 128], strides = [1, 1]} : vector<8x512xf32> to vector<8x128xf32>
    %193 = arith.negf %192 : vector<8x128xf32>
    %194 = math.exp %193 : vector<8x128xf32>
    %cst_56 = arith.constant 1.000000e+00 : f32
    %195 = vector.broadcast %cst_56 : f32 to vector<8x128xf32>
    %196 = arith.addf %195, %194 : vector<8x128xf32>
    %197 = arith.divf %195, %196 : vector<8x128xf32>
    %198 = vector.extract_strided_slice %185 {offsets = [0, 256], sizes = [8, 128], strides = [1, 1]} : vector<8x512xf32> to vector<8x128xf32>
    %199 = math.tanh %198 : vector<8x128xf32>
    %200 = vector.extract_strided_slice %185 {offsets = [0, 384], sizes = [8, 128], strides = [1, 1]} : vector<8x512xf32> to vector<8x128xf32>
    %201 = arith.negf %200 : vector<8x128xf32>
    %202 = math.exp %201 : vector<8x128xf32>
    %cst_57 = arith.constant 1.000000e+00 : f32
    %203 = vector.broadcast %cst_57 : f32 to vector<8x128xf32>
    %204 = arith.addf %203, %202 : vector<8x128xf32>
    %205 = arith.divf %203, %204 : vector<8x128xf32>
    %206 = arith.mulf %197, %174 : vector<8x128xf32>
    %207 = arith.mulf %191, %199 : vector<8x128xf32>
    %208 = arith.addf %206, %207 : vector<8x128xf32>
    %209 = math.tanh %208 : vector<8x128xf32>
    %210 = arith.mulf %205, %209 : vector<8x128xf32>
    %211 = arith.index_cast %c5_i32 : i32 to index
    %c0_58 = arith.constant 0 : index
    %c0_59 = arith.constant 0 : index
    %212 = vector.load %arg10[%211, %c0_58, %c0_59] : memref<8x8x128xf32, #tpu.memory_space<vmem>>, vector<1x8x128xf32>
    %213 = vector.shape_cast %212 : vector<1x8x128xf32> to vector<8x128xf32>
    %214 = vector.shape_cast %210 : vector<8x128xf32> to vector<1x8x128xf32>
    tpu.vector_store %arg10[%211, %c0_58, %c0_59], %214 {strides = array<i32>} : memref<8x8x128xf32, #tpu.memory_space<vmem>>, vector<1x8x128xf32>,
    %c6_i32 = arith.constant 6 : i32
    %215 = arith.index_cast %c6_i32 : i32 to index
    %c0_60 = arith.constant 0 : index
    %c0_61 = arith.constant 0 : index
    %216 = vector.load %arg11[%215, %c0_60, %c0_61] : memref<8x8x512xf32, #tpu.memory_space<vmem>>, vector<1x8x512xf32>
    %217 = vector.shape_cast %216 : vector<1x8x512xf32> to vector<8x512xf32>
    %cst_62 = arith.constant dense<0.000000e+00> : vector<8x512xf32>
    %218 = tpu.matmul %210, %9, %cst_62 {dimension_numbers = #tpu.dot_dimension_numbers<[1], [0], [0], [1], [0, 0, 1, 1], [], []>} : vector<8x128xf32>, vector<128x512xf32>, vector<8x512xf32> -> vector<8x512xf32>
    %219 = arith.addf %217, %218 : vector<8x512xf32>
    %220 = vector.extract_strided_slice %219 {offsets = [0, 0], sizes = [8, 128], strides = [1, 1]} : vector<8x512xf32> to vector<8x128xf32>
    %221 = arith.negf %220 : vector<8x128xf32>
    %222 = math.exp %221 : vector<8x128xf32>
    %cst_63 = arith.constant 1.000000e+00 : f32
    %223 = vector.broadcast %cst_63 : f32 to vector<8x128xf32>
    %224 = arith.addf %223, %222 : vector<8x128xf32>
    %225 = arith.divf %223, %224 : vector<8x128xf32>
    %226 = vector.extract_strided_slice %219 {offsets = [0, 128], sizes = [8, 128], strides = [1, 1]} : vector<8x512xf32> to vector<8x128xf32>
    %227 = arith.negf %226 : vector<8x128xf32>
    %228 = math.exp %227 : vector<8x128xf32>
    %cst_64 = arith.constant 1.000000e+00 : f32
    %229 = vector.broadcast %cst_64 : f32 to vector<8x128xf32>
    %230 = arith.addf %229, %228 : vector<8x128xf32>
    %231 = arith.divf %229, %230 : vector<8x128xf32>
    %232 = vector.extract_strided_slice %219 {offsets = [0, 256], sizes = [8, 128], strides = [1, 1]} : vector<8x512xf32> to vector<8x128xf32>
    %233 = math.tanh %232 : vector<8x128xf32>
    %234 = vector.extract_strided_slice %219 {offsets = [0, 384], sizes = [8, 128], strides = [1, 1]} : vector<8x512xf32> to vector<8x128xf32>
    %235 = arith.negf %234 : vector<8x128xf32>
    %236 = math.exp %235 : vector<8x128xf32>
    %cst_65 = arith.constant 1.000000e+00 : f32
    %237 = vector.broadcast %cst_65 : f32 to vector<8x128xf32>
    %238 = arith.addf %237, %236 : vector<8x128xf32>
    %239 = arith.divf %237, %238 : vector<8x128xf32>
    %240 = arith.mulf %231, %208 : vector<8x128xf32>
    %241 = arith.mulf %225, %233 : vector<8x128xf32>
    %242 = arith.addf %240, %241 : vector<8x128xf32>
    %243 = math.tanh %242 : vector<8x128xf32>
    %244 = arith.mulf %239, %243 : vector<8x128xf32>
    %245 = arith.index_cast %c6_i32 : i32 to index
    %c0_66 = arith.constant 0 : index
    %c0_67 = arith.constant 0 : index
    %246 = vector.load %arg10[%245, %c0_66, %c0_67] : memref<8x8x128xf32, #tpu.memory_space<vmem>>, vector<1x8x128xf32>
    %247 = vector.shape_cast %246 : vector<1x8x128xf32> to vector<8x128xf32>
    %248 = vector.shape_cast %244 : vector<8x128xf32> to vector<1x8x128xf32>
    tpu.vector_store %arg10[%245, %c0_66, %c0_67], %248 {strides = array<i32>} : memref<8x8x128xf32, #tpu.memory_space<vmem>>, vector<1x8x128xf32>,
    %c7_i32 = arith.constant 7 : i32
    %249 = arith.index_cast %c7_i32 : i32 to index
    %c0_68 = arith.constant 0 : index
    %c0_69 = arith.constant 0 : index
    %250 = vector.load %arg11[%249, %c0_68, %c0_69] : memref<8x8x512xf32, #tpu.memory_space<vmem>>, vector<1x8x512xf32>
    %251 = vector.shape_cast %250 : vector<1x8x512xf32> to vector<8x512xf32>
    %cst_70 = arith.constant dense<0.000000e+00> : vector<8x512xf32>
    %252 = tpu.matmul %244, %9, %cst_70 {dimension_numbers = #tpu.dot_dimension_numbers<[1], [0], [0], [1], [0, 0, 1, 1], [], []>} : vector<8x128xf32>, vector<128x512xf32>, vector<8x512xf32> -> vector<8x512xf32>
    %253 = arith.addf %251, %252 : vector<8x512xf32>
    %254 = vector.extract_strided_slice %253 {offsets = [0, 0], sizes = [8, 128], strides = [1, 1]} : vector<8x512xf32> to vector<8x128xf32>
    %255 = arith.negf %254 : vector<8x128xf32>
    %256 = math.exp %255 : vector<8x128xf32>
    %cst_71 = arith.constant 1.000000e+00 : f32
    %257 = vector.broadcast %cst_71 : f32 to vector<8x128xf32>
    %258 = arith.addf %257, %256 : vector<8x128xf32>
    %259 = arith.divf %257, %258 : vector<8x128xf32>
    %260 = vector.extract_strided_slice %253 {offsets = [0, 128], sizes = [8, 128], strides = [1, 1]} : vector<8x512xf32> to vector<8x128xf32>
    %261 = arith.negf %260 : vector<8x128xf32>
    %262 = math.exp %261 : vector<8x128xf32>
    %cst_72 = arith.constant 1.000000e+00 : f32
    %263 = vector.broadcast %cst_72 : f32 to vector<8x128xf32>
    %264 = arith.addf %263, %262 : vector<8x128xf32>
    %265 = arith.divf %263, %264 : vector<8x128xf32>
    %266 = vector.extract_strided_slice %253 {offsets = [0, 256], sizes = [8, 128], strides = [1, 1]} : vector<8x512xf32> to vector<8x128xf32>
    %267 = math.tanh %266 : vector<8x128xf32>
    %268 = vector.extract_strided_slice %253 {offsets = [0, 384], sizes = [8, 128], strides = [1, 1]} : vector<8x512xf32> to vector<8x128xf32>
    %269 = arith.negf %268 : vector<8x128xf32>
    %270 = math.exp %269 : vector<8x128xf32>
    %cst_73 = arith.constant 1.000000e+00 : f32
    %271 = vector.broadcast %cst_73 : f32 to vector<8x128xf32>
    %272 = arith.addf %271, %270 : vector<8x128xf32>
    %273 = arith.divf %271, %272 : vector<8x128xf32>
    %274 = arith.mulf %265, %242 : vector<8x128xf32>
    %275 = arith.mulf %259, %267 : vector<8x128xf32>
    %276 = arith.addf %274, %275 : vector<8x128xf32>
    %277 = math.tanh %276 : vector<8x128xf32>
    %278 = arith.mulf %273, %277 : vector<8x128xf32>
    %279 = arith.index_cast %c7_i32 : i32 to index
    %c0_74 = arith.constant 0 : index
    %c0_75 = arith.constant 0 : index
    %280 = vector.load %arg10[%279, %c0_74, %c0_75] : memref<8x8x128xf32, #tpu.memory_space<vmem>>, vector<1x8x128xf32>
    %281 = vector.shape_cast %280 : vector<1x8x128xf32> to vector<8x128xf32>
    %282 = vector.shape_cast %278 : vector<8x128xf32> to vector<1x8x128xf32>
    tpu.vector_store %arg10[%279, %c0_74, %c0_75], %282 {strides = array<i32>} : memref<8x8x128xf32, #tpu.memory_space<vmem>>, vector<1x8x128xf32>,
    %c8_i32 = arith.constant 8 : i32
    %c0_76 = arith.constant 0 : index
    %c0_77 = arith.constant 0 : index
    %c0_78 = arith.constant 0 : index
    %283 = vector.load %arg10[%c0_76, %c0_77, %c0_78] : memref<8x8x128xf32, #tpu.memory_space<vmem>>, vector<8x8x128xf32>
    %284 = vector.shape_cast %283 : vector<8x8x128xf32> to vector<64x128xf32>
    %c0_79 = arith.constant 0 : index
    %c0_80 = arith.constant 0 : index
    %285 = vector.load %arg4[%c0_79, %c0_80] : memref<128x512xf32, #tpu.memory_space<vmem>>, vector<128x512xf32>
    %cst_81 = arith.constant dense<0.000000e+00> : vector<64x512xf32>
    %286 = tpu.matmul %284, %285, %cst_81 {dimension_numbers = #tpu.dot_dimension_numbers<[1], [0], [0], [1], [0, 0, 1, 1], [], []>} : vector<64x128xf32>, vector<128x512xf32>, vector<64x512xf32> -> vector<64x512xf32>
    %c0_82 = arith.constant 0 : index
    %c0_83 = arith.constant 0 : index
    %287 = vector.load %arg6[%c0_82, %c0_83] : memref<1x512xf32, #tpu.memory_space<vmem>>, vector<1x512xf32>
    %288 = vector.broadcast %287 : vector<1x512xf32> to vector<64x512xf32>
    %289 = arith.addf %286, %288 : vector<64x512xf32>
    %290 = vector.shape_cast %289 : vector<64x512xf32> to vector<8x8x512xf32>
    %c0_84 = arith.constant 0 : index
    %c0_85 = arith.constant 0 : index
    %c0_86 = arith.constant 0 : index
    %291 = vector.load %arg11[%c0_84, %c0_85, %c0_86] : memref<8x8x512xf32, #tpu.memory_space<vmem>>, vector<8x8x512xf32>
    tpu.vector_store %arg11[%c0_84, %c0_85, %c0_86], %290 {strides = array<i32>} : memref<8x8x512xf32, #tpu.memory_space<vmem>>, vector<8x8x512xf32>,
    %c0_87 = arith.constant 0 : index
    %c0_88 = arith.constant 0 : index
    %292 = vector.load %arg5[%c0_87, %c0_88] : memref<128x512xf32, #tpu.memory_space<vmem>>, vector<128x512xf32>
    %cst_89 = arith.constant 0.000000e+00 : f32
    %293 = vector.broadcast %cst_89 : f32 to vector<8x128xf32>
    %c0_i32_90 = arith.constant 0 : i32
    %294 = arith.index_cast %c0_i32_90 : i32 to index
    %c0_91 = arith.constant 0 : index
    %c0_92 = arith.constant 0 : index
    %295 = vector.load %arg11[%294, %c0_91, %c0_92] : memref<8x8x512xf32, #tpu.memory_space<vmem>>, vector<1x8x512xf32>
    %296 = vector.shape_cast %295 : vector<1x8x512xf32> to vector<8x512xf32>
    %cst_93 = arith.constant dense<0.000000e+00> : vector<8x512xf32>
    %297 = tpu.matmul %293, %292, %cst_93 {dimension_numbers = #tpu.dot_dimension_numbers<[1], [0], [0], [1], [0, 0, 1, 1], [], []>} : vector<8x128xf32>, vector<128x512xf32>, vector<8x512xf32> -> vector<8x512xf32>
    %298 = arith.addf %296, %297 : vector<8x512xf32>
    %299 = vector.extract_strided_slice %298 {offsets = [0, 0], sizes = [8, 128], strides = [1, 1]} : vector<8x512xf32> to vector<8x128xf32>
    %300 = arith.negf %299 : vector<8x128xf32>
    %301 = math.exp %300 : vector<8x128xf32>
    %cst_94 = arith.constant 1.000000e+00 : f32
    %302 = vector.broadcast %cst_94 : f32 to vector<8x128xf32>
    %303 = arith.addf %302, %301 : vector<8x128xf32>
    %304 = arith.divf %302, %303 : vector<8x128xf32>
    %305 = vector.extract_strided_slice %298 {offsets = [0, 128], sizes = [8, 128], strides = [1, 1]} : vector<8x512xf32> to vector<8x128xf32>
    %306 = arith.negf %305 : vector<8x128xf32>
    %307 = math.exp %306 : vector<8x128xf32>
    %cst_95 = arith.constant 1.000000e+00 : f32
    %308 = vector.broadcast %cst_95 : f32 to vector<8x128xf32>
    %309 = arith.addf %308, %307 : vector<8x128xf32>
    %310 = arith.divf %308, %309 : vector<8x128xf32>
    %311 = vector.extract_strided_slice %298 {offsets = [0, 256], sizes = [8, 128], strides = [1, 1]} : vector<8x512xf32> to vector<8x128xf32>
    %312 = math.tanh %311 : vector<8x128xf32>
    %313 = vector.extract_strided_slice %298 {offsets = [0, 384], sizes = [8, 128], strides = [1, 1]} : vector<8x512xf32> to vector<8x128xf32>
    %314 = arith.negf %313 : vector<8x128xf32>
    %315 = math.exp %314 : vector<8x128xf32>
    %cst_96 = arith.constant 1.000000e+00 : f32
    %316 = vector.broadcast %cst_96 : f32 to vector<8x128xf32>
    %317 = arith.addf %316, %315 : vector<8x128xf32>
    %318 = arith.divf %316, %317 : vector<8x128xf32>
    %319 = arith.mulf %310, %293 : vector<8x128xf32>
    %320 = arith.mulf %304, %312 : vector<8x128xf32>
    %321 = arith.addf %319, %320 : vector<8x128xf32>
    %322 = math.tanh %321 : vector<8x128xf32>
    %323 = arith.mulf %318, %322 : vector<8x128xf32>
    %324 = arith.index_cast %c0_i32_90 : i32 to index
    %c0_97 = arith.constant 0 : index
    %c0_98 = arith.constant 0 : index
    %325 = vector.load %arg10[%324, %c0_97, %c0_98] : memref<8x8x128xf32, #tpu.memory_space<vmem>>, vector<1x8x128xf32>
    %326 = vector.shape_cast %325 : vector<1x8x128xf32> to vector<8x128xf32>
    %327 = vector.shape_cast %323 : vector<8x128xf32> to vector<1x8x128xf32>
    tpu.vector_store %arg10[%324, %c0_97, %c0_98], %327 {strides = array<i32>} : memref<8x8x128xf32, #tpu.memory_space<vmem>>, vector<1x8x128xf32>,
    %c1_i32_99 = arith.constant 1 : i32
    %328 = arith.index_cast %c1_i32_99 : i32 to index
    %c0_100 = arith.constant 0 : index
    %c0_101 = arith.constant 0 : index
    %329 = vector.load %arg11[%328, %c0_100, %c0_101] : memref<8x8x512xf32, #tpu.memory_space<vmem>>, vector<1x8x512xf32>
    %330 = vector.shape_cast %329 : vector<1x8x512xf32> to vector<8x512xf32>
    %cst_102 = arith.constant dense<0.000000e+00> : vector<8x512xf32>
    %331 = tpu.matmul %323, %292, %cst_102 {dimension_numbers = #tpu.dot_dimension_numbers<[1], [0], [0], [1], [0, 0, 1, 1], [], []>} : vector<8x128xf32>, vector<128x512xf32>, vector<8x512xf32> -> vector<8x512xf32>
    %332 = arith.addf %330, %331 : vector<8x512xf32>
    %333 = vector.extract_strided_slice %332 {offsets = [0, 0], sizes = [8, 128], strides = [1, 1]} : vector<8x512xf32> to vector<8x128xf32>
    %334 = arith.negf %333 : vector<8x128xf32>
    %335 = math.exp %334 : vector<8x128xf32>
    %cst_103 = arith.constant 1.000000e+00 : f32
    %336 = vector.broadcast %cst_103 : f32 to vector<8x128xf32>
    %337 = arith.addf %336, %335 : vector<8x128xf32>
    %338 = arith.divf %336, %337 : vector<8x128xf32>
    %339 = vector.extract_strided_slice %332 {offsets = [0, 128], sizes = [8, 128], strides = [1, 1]} : vector<8x512xf32> to vector<8x128xf32>
    %340 = arith.negf %339 : vector<8x128xf32>
    %341 = math.exp %340 : vector<8x128xf32>
    %cst_104 = arith.constant 1.000000e+00 : f32
    %342 = vector.broadcast %cst_104 : f32 to vector<8x128xf32>
    %343 = arith.addf %342, %341 : vector<8x128xf32>
    %344 = arith.divf %342, %343 : vector<8x128xf32>
    %345 = vector.extract_strided_slice %332 {offsets = [0, 256], sizes = [8, 128], strides = [1, 1]} : vector<8x512xf32> to vector<8x128xf32>
    %346 = math.tanh %345 : vector<8x128xf32>
    %347 = vector.extract_strided_slice %332 {offsets = [0, 384], sizes = [8, 128], strides = [1, 1]} : vector<8x512xf32> to vector<8x128xf32>
    %348 = arith.negf %347 : vector<8x128xf32>
    %349 = math.exp %348 : vector<8x128xf32>
    %cst_105 = arith.constant 1.000000e+00 : f32
    %350 = vector.broadcast %cst_105 : f32 to vector<8x128xf32>
    %351 = arith.addf %350, %349 : vector<8x128xf32>
    %352 = arith.divf %350, %351 : vector<8x128xf32>
    %353 = arith.mulf %344, %321 : vector<8x128xf32>
    %354 = arith.mulf %338, %346 : vector<8x128xf32>
    %355 = arith.addf %353, %354 : vector<8x128xf32>
    %356 = math.tanh %355 : vector<8x128xf32>
    %357 = arith.mulf %352, %356 : vector<8x128xf32>
    %358 = arith.index_cast %c1_i32_99 : i32 to index
    %c0_106 = arith.constant 0 : index
    %c0_107 = arith.constant 0 : index
    %359 = vector.load %arg10[%358, %c0_106, %c0_107] : memref<8x8x128xf32, #tpu.memory_space<vmem>>, vector<1x8x128xf32>
    %360 = vector.shape_cast %359 : vector<1x8x128xf32> to vector<8x128xf32>
    %361 = vector.shape_cast %357 : vector<8x128xf32> to vector<1x8x128xf32>
    tpu.vector_store %arg10[%358, %c0_106, %c0_107], %361 {strides = array<i32>} : memref<8x8x128xf32, #tpu.memory_space<vmem>>, vector<1x8x128xf32>,
    %c2_i32_108 = arith.constant 2 : i32
    %362 = arith.index_cast %c2_i32_108 : i32 to index
    %c0_109 = arith.constant 0 : index
    %c0_110 = arith.constant 0 : index
    %363 = vector.load %arg11[%362, %c0_109, %c0_110] : memref<8x8x512xf32, #tpu.memory_space<vmem>>, vector<1x8x512xf32>
    %364 = vector.shape_cast %363 : vector<1x8x512xf32> to vector<8x512xf32>
    %cst_111 = arith.constant dense<0.000000e+00> : vector<8x512xf32>
    %365 = tpu.matmul %357, %292, %cst_111 {dimension_numbers = #tpu.dot_dimension_numbers<[1], [0], [0], [1], [0, 0, 1, 1], [], []>} : vector<8x128xf32>, vector<128x512xf32>, vector<8x512xf32> -> vector<8x512xf32>
    %366 = arith.addf %364, %365 : vector<8x512xf32>
    %367 = vector.extract_strided_slice %366 {offsets = [0, 0], sizes = [8, 128], strides = [1, 1]} : vector<8x512xf32> to vector<8x128xf32>
    %368 = arith.negf %367 : vector<8x128xf32>
    %369 = math.exp %368 : vector<8x128xf32>
    %cst_112 = arith.constant 1.000000e+00 : f32
    %370 = vector.broadcast %cst_112 : f32 to vector<8x128xf32>
    %371 = arith.addf %370, %369 : vector<8x128xf32>
    %372 = arith.divf %370, %371 : vector<8x128xf32>
    %373 = vector.extract_strided_slice %366 {offsets = [0, 128], sizes = [8, 128], strides = [1, 1]} : vector<8x512xf32> to vector<8x128xf32>
    %374 = arith.negf %373 : vector<8x128xf32>
    %375 = math.exp %374 : vector<8x128xf32>
    %cst_113 = arith.constant 1.000000e+00 : f32
    %376 = vector.broadcast %cst_113 : f32 to vector<8x128xf32>
    %377 = arith.addf %376, %375 : vector<8x128xf32>
    %378 = arith.divf %376, %377 : vector<8x128xf32>
    %379 = vector.extract_strided_slice %366 {offsets = [0, 256], sizes = [8, 128], strides = [1, 1]} : vector<8x512xf32> to vector<8x128xf32>
    %380 = math.tanh %379 : vector<8x128xf32>
    %381 = vector.extract_strided_slice %366 {offsets = [0, 384], sizes = [8, 128], strides = [1, 1]} : vector<8x512xf32> to vector<8x128xf32>
    %382 = arith.negf %381 : vector<8x128xf32>
    %383 = math.exp %382 : vector<8x128xf32>
    %cst_114 = arith.constant 1.000000e+00 : f32
    %384 = vector.broadcast %cst_114 : f32 to vector<8x128xf32>
    %385 = arith.addf %384, %383 : vector<8x128xf32>
    %386 = arith.divf %384, %385 : vector<8x128xf32>
    %387 = arith.mulf %378, %355 : vector<8x128xf32>
    %388 = arith.mulf %372, %380 : vector<8x128xf32>
    %389 = arith.addf %387, %388 : vector<8x128xf32>
    %390 = math.tanh %389 : vector<8x128xf32>
    %391 = arith.mulf %386, %390 : vector<8x128xf32>
    %392 = arith.index_cast %c2_i32_108 : i32 to index
    %c0_115 = arith.constant 0 : index
    %c0_116 = arith.constant 0 : index
    %393 = vector.load %arg10[%392, %c0_115, %c0_116] : memref<8x8x128xf32, #tpu.memory_space<vmem>>, vector<1x8x128xf32>
    %394 = vector.shape_cast %393 : vector<1x8x128xf32> to vector<8x128xf32>
    %395 = vector.shape_cast %391 : vector<8x128xf32> to vector<1x8x128xf32>
    tpu.vector_store %arg10[%392, %c0_115, %c0_116], %395 {strides = array<i32>} : memref<8x8x128xf32, #tpu.memory_space<vmem>>, vector<1x8x128xf32>,
    %c3_i32_117 = arith.constant 3 : i32
    %396 = arith.index_cast %c3_i32_117 : i32 to index
    %c0_118 = arith.constant 0 : index
    %c0_119 = arith.constant 0 : index
    %397 = vector.load %arg11[%396, %c0_118, %c0_119] : memref<8x8x512xf32, #tpu.memory_space<vmem>>, vector<1x8x512xf32>
    %398 = vector.shape_cast %397 : vector<1x8x512xf32> to vector<8x512xf32>
    %cst_120 = arith.constant dense<0.000000e+00> : vector<8x512xf32>
    %399 = tpu.matmul %391, %292, %cst_120 {dimension_numbers = #tpu.dot_dimension_numbers<[1], [0], [0], [1], [0, 0, 1, 1], [], []>} : vector<8x128xf32>, vector<128x512xf32>, vector<8x512xf32> -> vector<8x512xf32>
    %400 = arith.addf %398, %399 : vector<8x512xf32>
    %401 = vector.extract_strided_slice %400 {offsets = [0, 0], sizes = [8, 128], strides = [1, 1]} : vector<8x512xf32> to vector<8x128xf32>
    %402 = arith.negf %401 : vector<8x128xf32>
    %403 = math.exp %402 : vector<8x128xf32>
    %cst_121 = arith.constant 1.000000e+00 : f32
    %404 = vector.broadcast %cst_121 : f32 to vector<8x128xf32>
    %405 = arith.addf %404, %403 : vector<8x128xf32>
    %406 = arith.divf %404, %405 : vector<8x128xf32>
    %407 = vector.extract_strided_slice %400 {offsets = [0, 128], sizes = [8, 128], strides = [1, 1]} : vector<8x512xf32> to vector<8x128xf32>
    %408 = arith.negf %407 : vector<8x128xf32>
    %409 = math.exp %408 : vector<8x128xf32>
    %cst_122 = arith.constant 1.000000e+00 : f32
    %410 = vector.broadcast %cst_122 : f32 to vector<8x128xf32>
    %411 = arith.addf %410, %409 : vector<8x128xf32>
    %412 = arith.divf %410, %411 : vector<8x128xf32>
    %413 = vector.extract_strided_slice %400 {offsets = [0, 256], sizes = [8, 128], strides = [1, 1]} : vector<8x512xf32> to vector<8x128xf32>
    %414 = math.tanh %413 : vector<8x128xf32>
    %415 = vector.extract_strided_slice %400 {offsets = [0, 384], sizes = [8, 128], strides = [1, 1]} : vector<8x512xf32> to vector<8x128xf32>
    %416 = arith.negf %415 : vector<8x128xf32>
    %417 = math.exp %416 : vector<8x128xf32>
    %cst_123 = arith.constant 1.000000e+00 : f32
    %418 = vector.broadcast %cst_123 : f32 to vector<8x128xf32>
    %419 = arith.addf %418, %417 : vector<8x128xf32>
    %420 = arith.divf %418, %419 : vector<8x128xf32>
    %421 = arith.mulf %412, %389 : vector<8x128xf32>
    %422 = arith.mulf %406, %414 : vector<8x128xf32>
    %423 = arith.addf %421, %422 : vector<8x128xf32>
    %424 = math.tanh %423 : vector<8x128xf32>
    %425 = arith.mulf %420, %424 : vector<8x128xf32>
    %426 = arith.index_cast %c3_i32_117 : i32 to index
    %c0_124 = arith.constant 0 : index
    %c0_125 = arith.constant 0 : index
    %427 = vector.load %arg10[%426, %c0_124, %c0_125] : memref<8x8x128xf32, #tpu.memory_space<vmem>>, vector<1x8x128xf32>
    %428 = vector.shape_cast %427 : vector<1x8x128xf32> to vector<8x128xf32>
    %429 = vector.shape_cast %425 : vector<8x128xf32> to vector<1x8x128xf32>
    tpu.vector_store %arg10[%426, %c0_124, %c0_125], %429 {strides = array<i32>} : memref<8x8x128xf32, #tpu.memory_space<vmem>>, vector<1x8x128xf32>,
    %c4_i32_126 = arith.constant 4 : i32
    %430 = arith.index_cast %c4_i32_126 : i32 to index
    %c0_127 = arith.constant 0 : index
    %c0_128 = arith.constant 0 : index
    %431 = vector.load %arg11[%430, %c0_127, %c0_128] : memref<8x8x512xf32, #tpu.memory_space<vmem>>, vector<1x8x512xf32>
    %432 = vector.shape_cast %431 : vector<1x8x512xf32> to vector<8x512xf32>
    %cst_129 = arith.constant dense<0.000000e+00> : vector<8x512xf32>
    %433 = tpu.matmul %425, %292, %cst_129 {dimension_numbers = #tpu.dot_dimension_numbers<[1], [0], [0], [1], [0, 0, 1, 1], [], []>} : vector<8x128xf32>, vector<128x512xf32>, vector<8x512xf32> -> vector<8x512xf32>
    %434 = arith.addf %432, %433 : vector<8x512xf32>
    %435 = vector.extract_strided_slice %434 {offsets = [0, 0], sizes = [8, 128], strides = [1, 1]} : vector<8x512xf32> to vector<8x128xf32>
    %436 = arith.negf %435 : vector<8x128xf32>
    %437 = math.exp %436 : vector<8x128xf32>
    %cst_130 = arith.constant 1.000000e+00 : f32
    %438 = vector.broadcast %cst_130 : f32 to vector<8x128xf32>
    %439 = arith.addf %438, %437 : vector<8x128xf32>
    %440 = arith.divf %438, %439 : vector<8x128xf32>
    %441 = vector.extract_strided_slice %434 {offsets = [0, 128], sizes = [8, 128], strides = [1, 1]} : vector<8x512xf32> to vector<8x128xf32>
    %442 = arith.negf %441 : vector<8x128xf32>
    %443 = math.exp %442 : vector<8x128xf32>
    %cst_131 = arith.constant 1.000000e+00 : f32
    %444 = vector.broadcast %cst_131 : f32 to vector<8x128xf32>
    %445 = arith.addf %444, %443 : vector<8x128xf32>
    %446 = arith.divf %444, %445 : vector<8x128xf32>
    %447 = vector.extract_strided_slice %434 {offsets = [0, 256], sizes = [8, 128], strides = [1, 1]} : vector<8x512xf32> to vector<8x128xf32>
    %448 = math.tanh %447 : vector<8x128xf32>
    %449 = vector.extract_strided_slice %434 {offsets = [0, 384], sizes = [8, 128], strides = [1, 1]} : vector<8x512xf32> to vector<8x128xf32>
    %450 = arith.negf %449 : vector<8x128xf32>
    %451 = math.exp %450 : vector<8x128xf32>
    %cst_132 = arith.constant 1.000000e+00 : f32
    %452 = vector.broadcast %cst_132 : f32 to vector<8x128xf32>
    %453 = arith.addf %452, %451 : vector<8x128xf32>
    %454 = arith.divf %452, %453 : vector<8x128xf32>
    %455 = arith.mulf %446, %423 : vector<8x128xf32>
    %456 = arith.mulf %440, %448 : vector<8x128xf32>
    %457 = arith.addf %455, %456 : vector<8x128xf32>
    %458 = math.tanh %457 : vector<8x128xf32>
    %459 = arith.mulf %454, %458 : vector<8x128xf32>
    %460 = arith.index_cast %c4_i32_126 : i32 to index
    %c0_133 = arith.constant 0 : index
    %c0_134 = arith.constant 0 : index
    %461 = vector.load %arg10[%460, %c0_133, %c0_134] : memref<8x8x128xf32, #tpu.memory_space<vmem>>, vector<1x8x128xf32>
    %462 = vector.shape_cast %461 : vector<1x8x128xf32> to vector<8x128xf32>
    %463 = vector.shape_cast %459 : vector<8x128xf32> to vector<1x8x128xf32>
    tpu.vector_store %arg10[%460, %c0_133, %c0_134], %463 {strides = array<i32>} : memref<8x8x128xf32, #tpu.memory_space<vmem>>, vector<1x8x128xf32>,
    %c5_i32_135 = arith.constant 5 : i32
    %464 = arith.index_cast %c5_i32_135 : i32 to index
    %c0_136 = arith.constant 0 : index
    %c0_137 = arith.constant 0 : index
    %465 = vector.load %arg11[%464, %c0_136, %c0_137] : memref<8x8x512xf32, #tpu.memory_space<vmem>>, vector<1x8x512xf32>
    %466 = vector.shape_cast %465 : vector<1x8x512xf32> to vector<8x512xf32>
    %cst_138 = arith.constant dense<0.000000e+00> : vector<8x512xf32>
    %467 = tpu.matmul %459, %292, %cst_138 {dimension_numbers = #tpu.dot_dimension_numbers<[1], [0], [0], [1], [0, 0, 1, 1], [], []>} : vector<8x128xf32>, vector<128x512xf32>, vector<8x512xf32> -> vector<8x512xf32>
    %468 = arith.addf %466, %467 : vector<8x512xf32>
    %469 = vector.extract_strided_slice %468 {offsets = [0, 0], sizes = [8, 128], strides = [1, 1]} : vector<8x512xf32> to vector<8x128xf32>
    %470 = arith.negf %469 : vector<8x128xf32>
    %471 = math.exp %470 : vector<8x128xf32>
    %cst_139 = arith.constant 1.000000e+00 : f32
    %472 = vector.broadcast %cst_139 : f32 to vector<8x128xf32>
    %473 = arith.addf %472, %471 : vector<8x128xf32>
    %474 = arith.divf %472, %473 : vector<8x128xf32>
    %475 = vector.extract_strided_slice %468 {offsets = [0, 128], sizes = [8, 128], strides = [1, 1]} : vector<8x512xf32> to vector<8x128xf32>
    %476 = arith.negf %475 : vector<8x128xf32>
    %477 = math.exp %476 : vector<8x128xf32>
    %cst_140 = arith.constant 1.000000e+00 : f32
    %478 = vector.broadcast %cst_140 : f32 to vector<8x128xf32>
    %479 = arith.addf %478, %477 : vector<8x128xf32>
    %480 = arith.divf %478, %479 : vector<8x128xf32>
    %481 = vector.extract_strided_slice %468 {offsets = [0, 256], sizes = [8, 128], strides = [1, 1]} : vector<8x512xf32> to vector<8x128xf32>
    %482 = math.tanh %481 : vector<8x128xf32>
    %483 = vector.extract_strided_slice %468 {offsets = [0, 384], sizes = [8, 128], strides = [1, 1]} : vector<8x512xf32> to vector<8x128xf32>
    %484 = arith.negf %483 : vector<8x128xf32>
    %485 = math.exp %484 : vector<8x128xf32>
    %cst_141 = arith.constant 1.000000e+00 : f32
    %486 = vector.broadcast %cst_141 : f32 to vector<8x128xf32>
    %487 = arith.addf %486, %485 : vector<8x128xf32>
    %488 = arith.divf %486, %487 : vector<8x128xf32>
    %489 = arith.mulf %480, %457 : vector<8x128xf32>
    %490 = arith.mulf %474, %482 : vector<8x128xf32>
    %491 = arith.addf %489, %490 : vector<8x128xf32>
    %492 = math.tanh %491 : vector<8x128xf32>
    %493 = arith.mulf %488, %492 : vector<8x128xf32>
    %494 = arith.index_cast %c5_i32_135 : i32 to index
    %c0_142 = arith.constant 0 : index
    %c0_143 = arith.constant 0 : index
    %495 = vector.load %arg10[%494, %c0_142, %c0_143] : memref<8x8x128xf32, #tpu.memory_space<vmem>>, vector<1x8x128xf32>
    %496 = vector.shape_cast %495 : vector<1x8x128xf32> to vector<8x128xf32>
    %497 = vector.shape_cast %493 : vector<8x128xf32> to vector<1x8x128xf32>
    tpu.vector_store %arg10[%494, %c0_142, %c0_143], %497 {strides = array<i32>} : memref<8x8x128xf32, #tpu.memory_space<vmem>>, vector<1x8x128xf32>,
    %c6_i32_144 = arith.constant 6 : i32
    %498 = arith.index_cast %c6_i32_144 : i32 to index
    %c0_145 = arith.constant 0 : index
    %c0_146 = arith.constant 0 : index
    %499 = vector.load %arg11[%498, %c0_145, %c0_146] : memref<8x8x512xf32, #tpu.memory_space<vmem>>, vector<1x8x512xf32>
    %500 = vector.shape_cast %499 : vector<1x8x512xf32> to vector<8x512xf32>
    %cst_147 = arith.constant dense<0.000000e+00> : vector<8x512xf32>
    %501 = tpu.matmul %493, %292, %cst_147 {dimension_numbers = #tpu.dot_dimension_numbers<[1], [0], [0], [1], [0, 0, 1, 1], [], []>} : vector<8x128xf32>, vector<128x512xf32>, vector<8x512xf32> -> vector<8x512xf32>
    %502 = arith.addf %500, %501 : vector<8x512xf32>
    %503 = vector.extract_strided_slice %502 {offsets = [0, 0], sizes = [8, 128], strides = [1, 1]} : vector<8x512xf32> to vector<8x128xf32>
    %504 = arith.negf %503 : vector<8x128xf32>
    %505 = math.exp %504 : vector<8x128xf32>
    %cst_148 = arith.constant 1.000000e+00 : f32
    %506 = vector.broadcast %cst_148 : f32 to vector<8x128xf32>
    %507 = arith.addf %506, %505 : vector<8x128xf32>
    %508 = arith.divf %506, %507 : vector<8x128xf32>
    %509 = vector.extract_strided_slice %502 {offsets = [0, 128], sizes = [8, 128], strides = [1, 1]} : vector<8x512xf32> to vector<8x128xf32>
    %510 = arith.negf %509 : vector<8x128xf32>
    %511 = math.exp %510 : vector<8x128xf32>
    %cst_149 = arith.constant 1.000000e+00 : f32
    %512 = vector.broadcast %cst_149 : f32 to vector<8x128xf32>
    %513 = arith.addf %512, %511 : vector<8x128xf32>
    %514 = arith.divf %512, %513 : vector<8x128xf32>
    %515 = vector.extract_strided_slice %502 {offsets = [0, 256], sizes = [8, 128], strides = [1, 1]} : vector<8x512xf32> to vector<8x128xf32>
    %516 = math.tanh %515 : vector<8x128xf32>
    %517 = vector.extract_strided_slice %502 {offsets = [0, 384], sizes = [8, 128], strides = [1, 1]} : vector<8x512xf32> to vector<8x128xf32>
    %518 = arith.negf %517 : vector<8x128xf32>
    %519 = math.exp %518 : vector<8x128xf32>
    %cst_150 = arith.constant 1.000000e+00 : f32
    %520 = vector.broadcast %cst_150 : f32 to vector<8x128xf32>
    %521 = arith.addf %520, %519 : vector<8x128xf32>
    %522 = arith.divf %520, %521 : vector<8x128xf32>
    %523 = arith.mulf %514, %491 : vector<8x128xf32>
    %524 = arith.mulf %508, %516 : vector<8x128xf32>
    %525 = arith.addf %523, %524 : vector<8x128xf32>
    %526 = math.tanh %525 : vector<8x128xf32>
    %527 = arith.mulf %522, %526 : vector<8x128xf32>
    %528 = arith.index_cast %c6_i32_144 : i32 to index
    %c0_151 = arith.constant 0 : index
    %c0_152 = arith.constant 0 : index
    %529 = vector.load %arg10[%528, %c0_151, %c0_152] : memref<8x8x128xf32, #tpu.memory_space<vmem>>, vector<1x8x128xf32>
    %530 = vector.shape_cast %529 : vector<1x8x128xf32> to vector<8x128xf32>
    %531 = vector.shape_cast %527 : vector<8x128xf32> to vector<1x8x128xf32>
    tpu.vector_store %arg10[%528, %c0_151, %c0_152], %531 {strides = array<i32>} : memref<8x8x128xf32, #tpu.memory_space<vmem>>, vector<1x8x128xf32>,
    %c7_i32_153 = arith.constant 7 : i32
    %532 = arith.index_cast %c7_i32_153 : i32 to index
    %c0_154 = arith.constant 0 : index
    %c0_155 = arith.constant 0 : index
    %533 = vector.load %arg11[%532, %c0_154, %c0_155] : memref<8x8x512xf32, #tpu.memory_space<vmem>>, vector<1x8x512xf32>
    %534 = vector.shape_cast %533 : vector<1x8x512xf32> to vector<8x512xf32>
    %cst_156 = arith.constant dense<0.000000e+00> : vector<8x512xf32>
    %535 = tpu.matmul %527, %292, %cst_156 {dimension_numbers = #tpu.dot_dimension_numbers<[1], [0], [0], [1], [0, 0, 1, 1], [], []>} : vector<8x128xf32>, vector<128x512xf32>, vector<8x512xf32> -> vector<8x512xf32>
    %536 = arith.addf %534, %535 : vector<8x512xf32>
    %537 = vector.extract_strided_slice %536 {offsets = [0, 0], sizes = [8, 128], strides = [1, 1]} : vector<8x512xf32> to vector<8x128xf32>
    %538 = arith.negf %537 : vector<8x128xf32>
    %539 = math.exp %538 : vector<8x128xf32>
    %cst_157 = arith.constant 1.000000e+00 : f32
    %540 = vector.broadcast %cst_157 : f32 to vector<8x128xf32>
    %541 = arith.addf %540, %539 : vector<8x128xf32>
    %542 = arith.divf %540, %541 : vector<8x128xf32>
    %543 = vector.extract_strided_slice %536 {offsets = [0, 128], sizes = [8, 128], strides = [1, 1]} : vector<8x512xf32> to vector<8x128xf32>
    %544 = arith.negf %543 : vector<8x128xf32>
    %545 = math.exp %544 : vector<8x128xf32>
    %cst_158 = arith.constant 1.000000e+00 : f32
    %546 = vector.broadcast %cst_158 : f32 to vector<8x128xf32>
    %547 = arith.addf %546, %545 : vector<8x128xf32>
    %548 = arith.divf %546, %547 : vector<8x128xf32>
    %549 = vector.extract_strided_slice %536 {offsets = [0, 256], sizes = [8, 128], strides = [1, 1]} : vector<8x512xf32> to vector<8x128xf32>
    %550 = math.tanh %549 : vector<8x128xf32>
    %551 = vector.extract_strided_slice %536 {offsets = [0, 384], sizes = [8, 128], strides = [1, 1]} : vector<8x512xf32> to vector<8x128xf32>
    %552 = arith.negf %551 : vector<8x128xf32>
    %553 = math.exp %552 : vector<8x128xf32>
    %cst_159 = arith.constant 1.000000e+00 : f32
    %554 = vector.broadcast %cst_159 : f32 to vector<8x128xf32>
    %555 = arith.addf %554, %553 : vector<8x128xf32>
    %556 = arith.divf %554, %555 : vector<8x128xf32>
    %557 = arith.mulf %548, %525 : vector<8x128xf32>
    %558 = arith.mulf %542, %550 : vector<8x128xf32>
    %559 = arith.addf %557, %558 : vector<8x128xf32>
    %560 = math.tanh %559 : vector<8x128xf32>
    %561 = arith.mulf %556, %560 : vector<8x128xf32>
    %562 = arith.index_cast %c7_i32_153 : i32 to index
    %c0_160 = arith.constant 0 : index
    %c0_161 = arith.constant 0 : index
    %563 = vector.load %arg10[%562, %c0_160, %c0_161] : memref<8x8x128xf32, #tpu.memory_space<vmem>>, vector<1x8x128xf32>
    %564 = vector.shape_cast %563 : vector<1x8x128xf32> to vector<8x128xf32>
    %565 = vector.shape_cast %561 : vector<8x128xf32> to vector<1x8x128xf32>
    tpu.vector_store %arg10[%562, %c0_160, %c0_161], %565 {strides = array<i32>} : memref<8x8x128xf32, #tpu.memory_space<vmem>>, vector<1x8x128xf32>,
    %c8_i32_162 = arith.constant 8 : i32
    %c0_163 = arith.constant 0 : index
    %c0_164 = arith.constant 0 : index
    %566 = vector.load %arg7[%c0_163, %c0_164] : memref<128x128xf32, #tpu.memory_space<vmem>>, vector<128x128xf32>
    %cst_165 = arith.constant dense<0.000000e+00> : vector<8x128xf32>
    %567 = tpu.matmul %561, %566, %cst_165 {dimension_numbers = #tpu.dot_dimension_numbers<[1], [0], [0], [1], [0, 0, 1, 1], [], []>} : vector<8x128xf32>, vector<128x128xf32>, vector<8x128xf32> -> vector<8x128xf32>
    %c0_166 = arith.constant 0 : index
    %c0_167 = arith.constant 0 : index
    %568 = vector.load %arg8[%c0_166, %c0_167] : memref<1x128xf32, #tpu.memory_space<vmem>>, vector<1x128xf32>
    %569 = vector.broadcast %568 : vector<1x128xf32> to vector<8x128xf32>
    %570 = arith.addf %567, %569 : vector<8x128xf32>
    %c0_168 = arith.constant 0 : index
    %c0_169 = arith.constant 0 : index
    %571 = vector.load %arg9[%c0_168, %c0_169] : memref<8x128xf32, #tpu.memory_space<vmem>>, vector<8x128xf32>
    tpu.vector_store %arg9[%c0_168, %c0_169], %570 {strides = array<i32>} : memref<8x128xf32, #tpu.memory_space<vmem>>, vector<8x128xf32>,
    return
  }
}

</mosaic_0001>

<llo_original>
// kernel: lstm_forward.1
$region0: #{lstm_forward.1}
  #allocation0 [shape = 'u32[]', space=smem, size = 0x4, offset = 0x4, fixed_abs, tag = 'smem constant byte address 0x4 - core index']
  #allocation1 [shape = 'u32[144,128]{1,0:T(1,128)}', space=vmem, size = 0x12000, scoped, tag = 'internal scratch']
  #allocation2 [shape = 'f32[8,8,128]{2,1,0:T(8,128)}', space=vmem, size = 0x8000, scoped, tag = 'scratch operand']
  #allocation3 [shape = 'f32[8,8,512]{2,1,0:T(8,128)}', space=vmem, size = 0x20000, scoped, tag = 'scratch operand']
  %s0 = inlined_call_operand.vmem [shape: f32[8,8,128], index: 0, kind: input, shape index: {}]
  %s1 = inlined_call_operand.vmem [shape: f32[128,512], index: 1, kind: input, shape index: {}]
  %s2 = inlined_call_operand.vmem [shape: f32[128,512], index: 2, kind: input, shape index: {}]
  %s3 = inlined_call_operand.vmem [shape: f32[1,512], index: 3, kind: input, shape index: {}]
  %s4 = inlined_call_operand.vmem [shape: f32[128,512], index: 4, kind: input, shape index: {}]
  %s5 = inlined_call_operand.vmem [shape: f32[128,512], index: 5, kind: input, shape index: {}]
  %s6 = inlined_call_operand.vmem [shape: f32[1,512], index: 6, kind: input, shape index: {}]
  %s7 = inlined_call_operand.vmem [shape: f32[128,128], index: 7, kind: input, shape index: {}]
  %s8 = inlined_call_operand.vmem [shape: f32[1,128], index: 8, kind: input, shape index: {}]
  %s9 = inlined_call_operand.vmem [shape: f32[8,128], index: 9, kind: output, shape index: {}]
  %s10 = sld [smem:[#allocation0]]
  $region46: #{lstm_forward.1} parent=0
    _
  %s12 = ssub.s32 1, %s10
  %s13 = scalar_select 0, %s12, %s10
  // Predicated region
  $region2: #{lstm_forward.1} parent=0 // pred_check
    _
  $region3: #{lstm_forward.1} parent=0 // pred_check_branch
    %15 = sbr.rel (0) target = $region5
  $region4: #{lstm_forward.1} parent=0 // pred_region
    _
  $region5: #{lstm_forward.1} parent=0 // pred_fallthru
    _
  // Predicated region
  $region6: #{lstm_forward.1} parent=0 // pred_check
    _
  $region7: #{lstm_forward.1} parent=0 // pred_check_branch
    %17 = sbr.rel (0) target = $region9
  $region8: #{lstm_forward.1} parent=0 // pred_region
    _
  $region9: #{lstm_forward.1} parent=0 // pred_fallthru
    _
  // Predicated region
  $region10: #{lstm_forward.1} parent=0 // pred_check
    _
  $region11: #{lstm_forward.1} parent=0 // pred_check_branch
    %19 = sbr.rel (0) target = $region13
  $region12: #{lstm_forward.1} parent=0 // pred_region
    _
  $region13: #{lstm_forward.1} parent=0 // pred_fallthru
    _
  // Predicated region
  $region14: #{lstm_forward.1} parent=0 // pred_check
    _
  $region15: #{lstm_forward.1} parent=0 // pred_check_branch
    %21 = sbr.rel (0) target = $region17
  $region16: #{lstm_forward.1} parent=0 // pred_region
    _
  $region17: #{lstm_forward.1} parent=0 // pred_fallthru
    _
  // Predicated region
  $region18: #{lstm_forward.1} parent=0 // pred_check
    _
  $region19: #{lstm_forward.1} parent=0 // pred_check_branch
    %23 = sbr.rel (0) target = $region21
  $region20: #{lstm_forward.1} parent=0 // pred_region
    _
  $region21: #{lstm_forward.1} parent=0 // pred_fallthru
    _
  // Predicated region
  $region22: #{lstm_forward.1} parent=0 // pred_check
    _
  $region23: #{lstm_forward.1} parent=0 // pred_check_branch
    %25 = sbr.rel (0) target = $region25
  $region24: #{lstm_forward.1} parent=0 // pred_region
    _
  $region25: #{lstm_forward.1} parent=0 // pred_fallthru
    _
  // Predicated region
  $region26: #{lstm_forward.1} parent=0 // pred_check
    _
  $region27: #{lstm_forward.1} parent=0 // pred_check_branch
    %27 = sbr.rel (0) target = $region29
  $region28: #{lstm_forward.1} parent=0 // pred_region
    _
  $region29: #{lstm_forward.1} parent=0 // pred_fallthru
    _
  // Predicated region
  $region30: #{lstm_forward.1} parent=0 // pred_check
    _
  $region31: #{lstm_forward.1} parent=0 // pred_check_branch
    %29 = sbr.rel (0) target = $region33
  $region32: #{lstm_forward.1} parent=0 // pred_region
    _
  $region33: #{lstm_forward.1} parent=0 // pred_fallthru
    _
  // Predicated region
  $region34: #{lstm_forward.1} parent=0 // pred_check
    _
  $region35: #{lstm_forward.1} parent=0 // pred_check_branch
    %31 = sbr.rel (0) target = $region37
  $region36: #{lstm_forward.1} parent=0 // pred_region
    _
  $region37: #{lstm_forward.1} parent=0 // pred_fallthru
    _
  %v32 = vld [vmem:[%s0] sm:$0xff]
  %v33 = vld [vmem:[%s0 + $0x8] sm:$0xff]
  %v34 = vld [vmem:[%s0 + $0x10] sm:$0xff]
  %v35 = vld [vmem:[%s0 + $0x18] sm:$0xff]
  %v36 = vld [vmem:[%s0 + $0x20] sm:$0xff]
  %v37 = vld [vmem:[%s0 + $0x28] sm:$0xff]
  %v38 = vld [vmem:[%s0 + $0x30] sm:$0xff]
  %v39 = vld [vmem:[%s0 + $0x38] sm:$0xff]
  %v40 = vld [vmem:[%s1] sm:$0xff]
  %v41 = vld [vmem:[%s1 + $0x8] sm:$0xff]
  %v42 = vld [vmem:[%s1 + $0x10] sm:$0xff]
  %v43 = vld [vmem:[%s1 + $0x18] sm:$0xff]
  %v44 = vld [vmem:[%s1 + $0x20] sm:$0xff]
  %v45 = vld [vmem:[%s1 + $0x28] sm:$0xff]
  %v46 = vld [vmem:[%s1 + $0x30] sm:$0xff]
  %v47 = vld [vmem:[%s1 + $0x38] sm:$0xff]
  %v48 = vld [vmem:[%s1 + $0x40] sm:$0xff]
  %v49 = vld [vmem:[%s1 + $0x48] sm:$0xff]
  %v50 = vld [vmem:[%s1 + $0x50] sm:$0xff]
  %v51 = vld [vmem:[%s1 + $0x58] sm:$0xff]
  %v52 = vld [vmem:[%s1 + $0x60] sm:$0xff]
  %v53 = vld [vmem:[%s1 + $0x68] sm:$0xff]
  %v54 = vld [vmem:[%s1 + $0x70] sm:$0xff]
  %v55 = vld [vmem:[%s1 + $0x78] sm:$0xff]
  %v56 = vld [vmem:[%s1 + $0x80] sm:$0xff]
  %v57 = vld [vmem:[%s1 + $0x88] sm:$0xff]
  %v58 = vld [vmem:[%s1 + $0x90] sm:$0xff]
  %v59 = vld [vmem:[%s1 + $0x98] sm:$0xff]
  %v60 = vld [vmem:[%s1 + $0xa0] sm:$0xff]
  %v61 = vld [vmem:[%s1 + $0xa8] sm:$0xff]
  %v62 = vld [vmem:[%s1 + $0xb0] sm:$0xff]
  %v63 = vld [vmem:[%s1 + $0xb8] sm:$0xff]
  %v64 = vld [vmem:[%s1 + $0xc0] sm:$0xff]
  %v65 = vld [vmem:[%s1 + $0xc8] sm:$0xff]
  %v66 = vld [vmem:[%s1 + $0xd0] sm:$0xff]
  %v67 = vld [vmem:[%s1 + $0xd8] sm:$0xff]
  %v68 = vld [vmem:[%s1 + $0xe0] sm:$0xff]
  %v69 = vld [vmem:[%s1 + $0xe8] sm:$0xff]
  %v70 = vld [vmem:[%s1 + $0xf0] sm:$0xff]
  %v71 = vld [vmem:[%s1 + $0xf8] sm:$0xff]
  %v72 = vld [vmem:[%s1 + $0x100] sm:$0xff]
  %v73 = vld [vmem:[%s1 + $0x108] sm:$0xff]
  %v74 = vld [vmem:[%s1 + $0x110] sm:$0xff]
  %v75 = vld [vmem:[%s1 + $0x118] sm:$0xff]
  %v76 = vld [vmem:[%s1 + $0x120] sm:$0xff]
  %v77 = vld [vmem:[%s1 + $0x128] sm:$0xff]
  %v78 = vld [vmem:[%s1 + $0x130] sm:$0xff]
  %v79 = vld [vmem:[%s1 + $0x138] sm:$0xff]
  %v80 = vld [vmem:[%s1 + $0x140] sm:$0xff]
  %v81 = vld [vmem:[%s1 + $0x148] sm:$0xff]
  %v82 = vld [vmem:[%s1 + $0x150] sm:$0xff]
  %v83 = vld [vmem:[%s1 + $0x158] sm:$0xff]
  %v84 = vld [vmem:[%s1 + $0x160] sm:$0xff]
  %v85 = vld [vmem:[%s1 + $0x168] sm:$0xff]
  %v86 = vld [vmem:[%s1 + $0x170] sm:$0xff]
  %v87 = vld [vmem:[%s1 + $0x178] sm:$0xff]
  %v88 = vld [vmem:[%s1 + $0x180] sm:$0xff]
  %v89 = vld [vmem:[%s1 + $0x188] sm:$0xff]
  %v90 = vld [vmem:[%s1 + $0x190] sm:$0xff]
  %v91 = vld [vmem:[%s1 + $0x198] sm:$0xff]
  %v92 = vld [vmem:[%s1 + $0x1a0] sm:$0xff]
  %v93 = vld [vmem:[%s1 + $0x1a8] sm:$0xff]
  %v94 = vld [vmem:[%s1 + $0x1b0] sm:$0xff]
  %v95 = vld [vmem:[%s1 + $0x1b8] sm:$0xff]
  %v96 = vld [vmem:[%s1 + $0x1c0] sm:$0xff]
  %v97 = vld [vmem:[%s1 + $0x1c8] sm:$0xff]
  %v98 = vld [vmem:[%s1 + $0x1d0] sm:$0xff]
  %v99 = vld [vmem:[%s1 + $0x1d8] sm:$0xff]
  %v100 = vld [vmem:[%s1 + $0x1e0] sm:$0xff]
  %v101 = vld [vmem:[%s1 + $0x1e8] sm:$0xff]
  %v102 = vld [vmem:[%s1 + $0x1f0] sm:$0xff]
  %v103 = vld [vmem:[%s1 + $0x1f8] sm:$0xff]
  %v104 = vld [vmem:[%s3] sm:$0xf]
  %v106 = vlaneseq
  %v107 = vshrl.u32 %v106, 7
  %v108 = vsub.s32 0, %v107
  %v109 = vrot.slane %v104, %v108
  %v110 = vlaneseq
  %v111 = vshrl.u32 %v110, 7
  %v112 = vsub.s32 1, %v111
  %v113 = vrot.slane %v104, %v112
  %v114 = vlaneseq
  %v115 = vshrl.u32 %v114, 7
  %v116 = vsub.s32 2, %v115
  %v117 = vrot.slane %v104, %v116
  %v118 = vlaneseq
  %v119 = vshrl.u32 %v118, 7
  %v120 = vsub.s32 3, %v119
  %v121 = vrot.slane %v104, %v120
  %126 = vmatprep.subr.mxu0 %v41
  %127 = vmatpush1.msra.mxu0 %v40
  %128 = vmatprep.subr.mxu0 %v45
  %129 = vmatpush1.msra.mxu0 %v44
  %130 = vmatprep.subr.mxu0 %v49
  %131 = vmatpush1.msra.mxu0 %v48
  %132 = vmatprep.subr.mxu0 %v53
  %133 = vmatpush1.msra.mxu0 %v52
  %134 = vmatprep.subr.mxu0 %v57
  %135 = vmatpush1.msra.mxu0 %v56
  %136 = vmatprep.subr.mxu0 %v61
  %137 = vmatpush1.msra.mxu0 %v60
  %138 = vmatprep.subr.mxu0 %v65
  %139 = vmatpush1.msra.mxu0 %v64
  %140 = vmatprep.subr.mxu0 %v69
  %141 = vmatpush1.msra.mxu0 %v68
  %142 = vmatprep.subr.mxu0 %v73
  %143 = vmatpush1.msra.mxu0 %v72
  %144 = vmatprep.subr.mxu0 %v77
  %145 = vmatpush1.msra.mxu0 %v76
  %146 = vmatprep.subr.mxu0 %v81
  %147 = vmatpush1.msra.mxu0 %v80
  %148 = vmatprep.subr.mxu0 %v85
  %149 = vmatpush1.msra.mxu0 %v84
  %150 = vmatprep.subr.mxu0 %v89
  %151 = vmatpush1.msra.mxu0 %v88
  %152 = vmatprep.subr.mxu0 %v93
  %153 = vmatpush1.msra.mxu0 %v92
  %154 = vmatprep.subr.mxu0 %v97
  %155 = vmatpush1.msra.mxu0 %v96
  %156 = vmatprep.subr.mxu0 %v101
  %157 = vmatpush1.msra.mxu0 %v100
  %158 = vmatprep.subr.mxu0 0.0
  %159 = vmatpush1.msra.mxu0 0.0
  %160 = vmatprep.subr.mxu0 0.0
  %161 = vmatpush1.msra.mxu0 0.0
  %162 = vmatprep.subr.mxu0 0.0
  %163 = vmatpush1.msra.mxu0 0.0
  %164 = vmatprep.subr.mxu0 0.0
  %165 = vmatpush1.msra.mxu0 0.0
  %166 = vmatprep.subr.mxu0 0.0
  %167 = vmatpush1.msra.mxu0 0.0
  %168 = vmatprep.subr.mxu0 0.0
  %169 = vmatpush1.msra.mxu0 0.0
  %170 = vmatprep.subr.mxu0 0.0
  %171 = vmatpush1.msra.mxu0 0.0
  %172 = vmatprep.subr.mxu0 0.0
  %173 = vmatpush1.msra.mxu0 0.0
  %174 = vmatprep.subr.mxu0 0.0
  %175 = vmatpush1.msra.mxu0 0.0
  %176 = vmatprep.subr.mxu0 0.0
  %177 = vmatpush1.msra.mxu0 0.0
  %178 = vmatprep.subr.mxu0 0.0
  %179 = vmatpush1.msra.mxu0 0.0
  %180 = vmatprep.subr.mxu0 0.0
  %181 = vmatpush1.msra.mxu0 0.0
  %182 = vmatprep.subr.mxu0 0.0
  %183 = vmatpush1.msra.mxu0 0.0
  %184 = vmatprep.subr.mxu0 0.0
  %185 = vmatpush1.msra.mxu0 0.0
  %186 = vmatprep.subr.mxu0 0.0
  %187 = vmatpush1.msra.mxu0 0.0
  %188 = vmatprep.subr.mxu0 0.0
  %189 = vmatpush1.msra.mxu0 0.0
  %190 = vmatprep.mubr.f32.mxu0 0.0
  %191 = vmatmul.mubr.f32.gmra.mrb[0].mxu0 %v32
  %v192 = vpop.f32.mrb[0].mxu0
  %v193 = vadd.f32 %v109, %v192
  %v194 = vpop.f32.mrb[0].mxu0
  %v195 = vadd.f32 %v113, %v194
  %196 = vmatprep.mubr.f32.mxu0 0.0
  %197 = vmatmul.mubr.f32.gmra.mrb[0].mxu0 %v33
  %v198 = vpop.f32.mrb[0].mxu0
  %v199 = vadd.f32 %v109, %v198
  %v200 = vpop.f32.mrb[0].mxu0
  %v201 = vadd.f32 %v113, %v200
  %202 = vmatprep.mubr.f32.mxu0 0.0
  %203 = vmatmul.mubr.f32.gmra.mrb[0].mxu0 %v34
  %v204 = vpop.f32.mrb[0].mxu0
  %v205 = vadd.f32 %v109, %v204
  %v206 = vpop.f32.mrb[0].mxu0
  %v207 = vadd.f32 %v113, %v206
  %208 = vmatprep.mubr.f32.mxu0 0.0
  %209 = vmatmul.mubr.f32.gmra.mrb[0].mxu0 %v35
  %v210 = vpop.f32.mrb[0].mxu0
  %v211 = vadd.f32 %v109, %v210
  %v212 = vpop.f32.mrb[0].mxu0
  %v213 = vadd.f32 %v113, %v212
  %214 = vmatprep.mubr.f32.mxu0 0.0
  %215 = vmatmul.mubr.f32.gmra.mrb[0].mxu0 %v36
  %v216 = vpop.f32.mrb[0].mxu0
  %v217 = vadd.f32 %v109, %v216
  %v218 = vpop.f32.mrb[0].mxu0
  %v219 = vadd.f32 %v113, %v218
  %220 = vmatprep.mubr.f32.mxu0 0.0
  %221 = vmatmul.mubr.f32.gmra.mrb[0].mxu0 %v37
  %v222 = vpop.f32.mrb[0].mxu0
  %v223 = vadd.f32 %v109, %v222
  %v224 = vpop.f32.mrb[0].mxu0
  %v225 = vadd.f32 %v113, %v224
  %226 = vmatprep.mubr.f32.mxu0 0.0
  %227 = vmatmul.mubr.f32.gmra.mrb[0].mxu0 %v38
  %v228 = vpop.f32.mrb[0].mxu0
  %v229 = vadd.f32 %v109, %v228
  %v230 = vpop.f32.mrb[0].mxu0
  %v231 = vadd.f32 %v113, %v230
  %232 = vmatprep.mubr.f32.mxu0 0.0
  %233 = vmatmul.mubr.f32.gmra.mrb[0].mxu0 %v39
  %v234 = vpop.f32.mrb[0].mxu0
  %v235 = vadd.f32 %v109, %v234
  %v236 = vpop.f32.mrb[0].mxu0
  %v237 = vadd.f32 %v113, %v236
  %238 = vdwg.mxu0
  %239 = vmatprep.subr.mxu0 %v43
  %240 = vmatpush1.msra.mxu0 %v42
  %241 = vmatprep.subr.mxu0 %v47
  %242 = vmatpush1.msra.mxu0 %v46
  %243 = vmatprep.subr.mxu0 %v51
  %244 = vmatpush1.msra.mxu0 %v50
  %245 = vmatprep.subr.mxu0 %v55
  %246 = vmatpush1.msra.mxu0 %v54
  %247 = vmatprep.subr.mxu0 %v59
  %248 = vmatpush1.msra.mxu0 %v58
  %249 = vmatprep.subr.mxu0 %v63
  %250 = vmatpush1.msra.mxu0 %v62
  %251 = vmatprep.subr.mxu0 %v67
  %252 = vmatpush1.msra.mxu0 %v66
  %253 = vmatprep.subr.mxu0 %v71
  %254 = vmatpush1.msra.mxu0 %v70
  %255 = vmatprep.subr.mxu0 %v75
  %256 = vmatpush1.msra.mxu0 %v74
  %257 = vmatprep.subr.mxu0 %v79
  %258 = vmatpush1.msra.mxu0 %v78
  %259 = vmatprep.subr.mxu0 %v83
  %260 = vmatpush1.msra.mxu0 %v82
  %261 = vmatprep.subr.mxu0 %v87
  %262 = vmatpush1.msra.mxu0 %v86
  %263 = vmatprep.subr.mxu0 %v91
  %264 = vmatpush1.msra.mxu0 %v90
  %265 = vmatprep.subr.mxu0 %v95
  %266 = vmatpush1.msra.mxu0 %v94
  %267 = vmatprep.subr.mxu0 %v99
  %268 = vmatpush1.msra.mxu0 %v98
  %269 = vmatprep.subr.mxu0 %v103
  %270 = vmatpush1.msra.mxu0 %v102
  %271 = vmatprep.subr.mxu0 0.0
  %272 = vmatpush1.msra.mxu0 0.0
  %273 = vmatprep.subr.mxu0 0.0
  %274 = vmatpush1.msra.mxu0 0.0
  %275 = vmatprep.subr.mxu0 0.0
  %276 = vmatpush1.msra.mxu0 0.0
  %277 = vmatprep.subr.mxu0 0.0
  %278 = vmatpush1.msra.mxu0 0.0
  %279 = vmatprep.subr.mxu0 0.0
  %280 = vmatpush1.msra.mxu0 0.0
  %281 = vmatprep.subr.mxu0 0.0
  %282 = vmatpush1.msra.mxu0 0.0
  %283 = vmatprep.subr.mxu0 0.0
  %284 = vmatpush1.msra.mxu0 0.0
  %285 = vmatprep.subr.mxu0 0.0
  %286 = vmatpush1.msra.mxu0 0.0
  %287 = vmatprep.subr.mxu0 0.0
  %288 = vmatpush1.msra.mxu0 0.0
  %289 = vmatprep.subr.mxu0 0.0
  %290 = vmatpush1.msra.mxu0 0.0
  %291 = vmatprep.subr.mxu0 0.0
  %292 = vmatpush1.msra.mxu0 0.0
  %293 = vmatprep.subr.mxu0 0.0
  %294 = vmatpush1.msra.mxu0 0.0
  %295 = vmatprep.subr.mxu0 0.0
  %296 = vmatpush1.msra.mxu0 0.0
  %297 = vmatprep.subr.mxu0 0.0
  %298 = vmatpush1.msra.mxu0 0.0
  %299 = vmatprep.subr.mxu0 0.0
  %300 = vmatpush1.msra.mxu0 0.0
  %301 = vmatprep.subr.mxu0 0.0
  %302 = vmatpush1.msra.mxu0 0.0
  %303 = vmatprep.mubr.f32.mxu0 0.0
  %304 = vmatmul.mubr.f32.gmra.mrb[0].mxu0 %v32
  %v305 = vpop.f32.mrb[0].mxu0
  %v306 = vadd.f32 %v117, %v305
  %v307 = vpop.f32.mrb[0].mxu0
  %v308 = vadd.f32 %v121, %v307
  %309 = vmatprep.mubr.f32.mxu0 0.0
  %310 = vmatmul.mubr.f32.gmra.mrb[0].mxu0 %v33
  %v311 = vpop.f32.mrb[0].mxu0
  %v312 = vadd.f32 %v117, %v311
  %v313 = vpop.f32.mrb[0].mxu0
  %v314 = vadd.f32 %v121, %v313
  %315 = vmatprep.mubr.f32.mxu0 0.0
  %316 = vmatmul.mubr.f32.gmra.mrb[0].mxu0 %v34
  %v317 = vpop.f32.mrb[0].mxu0
  %v318 = vadd.f32 %v117, %v317
  %v319 = vpop.f32.mrb[0].mxu0
  %v320 = vadd.f32 %v121, %v319
  %321 = vmatprep.mubr.f32.mxu0 0.0
  %322 = vmatmul.mubr.f32.gmra.mrb[0].mxu0 %v35
  %v323 = vpop.f32.mrb[0].mxu0
  %v324 = vadd.f32 %v117, %v323
  %v325 = vpop.f32.mrb[0].mxu0
  %v326 = vadd.f32 %v121, %v325
  %327 = vmatprep.mubr.f32.mxu0 0.0
  %328 = vmatmul.mubr.f32.gmra.mrb[0].mxu0 %v36
  %v329 = vpop.f32.mrb[0].mxu0
  %v330 = vadd.f32 %v117, %v329
  %v331 = vpop.f32.mrb[0].mxu0
  %v332 = vadd.f32 %v121, %v331
  %333 = vmatprep.mubr.f32.mxu0 0.0
  %334 = vmatmul.mubr.f32.gmra.mrb[0].mxu0 %v37
  %v335 = vpop.f32.mrb[0].mxu0
  %v336 = vadd.f32 %v117, %v335
  %v337 = vpop.f32.mrb[0].mxu0
  %v338 = vadd.f32 %v121, %v337
  %339 = vmatprep.mubr.f32.mxu0 0.0
  %340 = vmatmul.mubr.f32.gmra.mrb[0].mxu0 %v38
  %v341 = vpop.f32.mrb[0].mxu0
  %v342 = vadd.f32 %v117, %v341
  %v343 = vpop.f32.mrb[0].mxu0
  %v344 = vadd.f32 %v121, %v343
  %345 = vmatprep.mubr.f32.mxu0 0.0
  %346 = vmatmul.mubr.f32.gmra.mrb[0].mxu0 %v39
  %v347 = vpop.f32.mrb[0].mxu0
  %v348 = vadd.f32 %v117, %v347
  %v349 = vpop.f32.mrb[0].mxu0
  %v350 = vadd.f32 %v121, %v349
  %351 = vdwg.mxu0
  %352 = vst [vmem:[#allocation3] sm:$0xff] %v193
  %353 = vst [vmem:[#allocation3 + $0x8] sm:$0xff] %v195
  %354 = vst [vmem:[#allocation3 + $0x10] sm:$0xff] %v306
  %355 = vst [vmem:[#allocation3 + $0x18] sm:$0xff] %v308
  %356 = vst [vmem:[#allocation3 + $0x20] sm:$0xff] %v199
  %357 = vst [vmem:[#allocation3 + $0x28] sm:$0xff] %v201
  %358 = vst [vmem:[#allocation3 + $0x30] sm:$0xff] %v312
  %359 = vst [vmem:[#allocation3 + $0x38] sm:$0xff] %v314
  %360 = vst [vmem:[#allocation3 + $0x40] sm:$0xff] %v205
  %361 = vst [vmem:[#allocation3 + $0x48] sm:$0xff] %v207
  %362 = vst [vmem:[#allocation3 + $0x50] sm:$0xff] %v318
  %363 = vst [vmem:[#allocation3 + $0x58] sm:$0xff] %v320
  %364 = vst [vmem:[#allocation3 + $0x60] sm:$0xff] %v211
  %365 = vst [vmem:[#allocation3 + $0x68] sm:$0xff] %v213
  %366 = vst [vmem:[#allocation3 + $0x70] sm:$0xff] %v324
  %367 = vst [vmem:[#allocation3 + $0x78] sm:$0xff] %v326
  %368 = vst [vmem:[#allocation3 + $0x80] sm:$0xff] %v217
  %369 = vst [vmem:[#allocation3 + $0x88] sm:$0xff] %v219
  %370 = vst [vmem:[#allocation3 + $0x90] sm:$0xff] %v330
  %371 = vst [vmem:[#allocation3 + $0x98] sm:$0xff] %v332
  %372 = vst [vmem:[#allocation3 + $0xa0] sm:$0xff] %v223
  %373 = vst [vmem:[#allocation3 + $0xa8] sm:$0xff] %v225
  %374 = vst [vmem:[#allocation3 + $0xb0] sm:$0xff] %v336
  %375 = vst [vmem:[#allocation3 + $0xb8] sm:$0xff] %v338
  %376 = vst [vmem:[#allocation3 + $0xc0] sm:$0xff] %v229
  %377 = vst [vmem:[#allocation3 + $0xc8] sm:$0xff] %v231
  %378 = vst [vmem:[#allocation3 + $0xd0] sm:$0xff] %v342
  %379 = vst [vmem:[#allocation3 + $0xd8] sm:$0xff] %v344
  %380 = vst [vmem:[#allocation3 + $0xe0] sm:$0xff] %v235
  %381 = vst [vmem:[#allocation3 + $0xe8] sm:$0xff] %v237
  %382 = vst [vmem:[#allocation3 + $0xf0] sm:$0xff] %v348
  %383 = vst [vmem:[#allocation3 + $0xf8] sm:$0xff] %v350
  %v384 = vld [vmem:[%s2] sm:$0xff]
  %v385 = vld [vmem:[%s2 + $0x8] sm:$0xff]
  %v386 = vld [vmem:[%s2 + $0x10] sm:$0xff]
  %v387 = vld [vmem:[%s2 + $0x18] sm:$0xff]
  %v388 = vld [vmem:[%s2 + $0x20] sm:$0xff]
  %v389 = vld [vmem:[%s2 + $0x28] sm:$0xff]
  %v390 = vld [vmem:[%s2 + $0x30] sm:$0xff]
  %v391 = vld [vmem:[%s2 + $0x38] sm:$0xff]
  %v392 = vld [vmem:[%s2 + $0x40] sm:$0xff]
  %v393 = vld [vmem:[%s2 + $0x48] sm:$0xff]
  %v394 = vld [vmem:[%s2 + $0x50] sm:$0xff]
  %v395 = vld [vmem:[%s2 + $0x58] sm:$0xff]
  %v396 = vld [vmem:[%s2 + $0x60] sm:$0xff]
  %v397 = vld [vmem:[%s2 + $0x68] sm:$0xff]
  %v398 = vld [vmem:[%s2 + $0x70] sm:$0xff]
  %v399 = vld [vmem:[%s2 + $0x78] sm:$0xff]
  %v400 = vld [vmem:[%s2 + $0x80] sm:$0xff]
  %v401 = vld [vmem:[%s2 + $0x88] sm:$0xff]
  %v402 = vld [vmem:[%s2 + $0x90] sm:$0xff]
  %v403 = vld [vmem:[%s2 + $0x98] sm:$0xff]
  %v404 = vld [vmem:[%s2 + $0xa0] sm:$0xff]
  %v405 = vld [vmem:[%s2 + $0xa8] sm:$0xff]
  %v406 = vld [vmem:[%s2 + $0xb0] sm:$0xff]
  %v407 = vld [vmem:[%s2 + $0xb8] sm:$0xff]
  %v408 = vld [vmem:[%s2 + $0xc0] sm:$0xff]
  %v409 = vld [vmem:[%s2 + $0xc8] sm:$0xff]
  %v410 = vld [vmem:[%s2 + $0xd0] sm:$0xff]
  %v411 = vld [vmem:[%s2 + $0xd8] sm:$0xff]
  %v412 = vld [vmem:[%s2 + $0xe0] sm:$0xff]
  %v413 = vld [vmem:[%s2 + $0xe8] sm:$0xff]
  %v414 = vld [vmem:[%s2 + $0xf0] sm:$0xff]
  %v415 = vld [vmem:[%s2 + $0xf8] sm:$0xff]
  %v416 = vld [vmem:[%s2 + $0x100] sm:$0xff]
  %v417 = vld [vmem:[%s2 + $0x108] sm:$0xff]
  %v418 = vld [vmem:[%s2 + $0x110] sm:$0xff]
  %v419 = vld [vmem:[%s2 + $0x118] sm:$0xff]
  %v420 = vld [vmem:[%s2 + $0x120] sm:$0xff]
  %v421 = vld [vmem:[%s2 + $0x128] sm:$0xff]
  %v422 = vld [vmem:[%s2 + $0x130] sm:$0xff]
  %v423 = vld [vmem:[%s2 + $0x138] sm:$0xff]
  %v424 = vld [vmem:[%s2 + $0x140] sm:$0xff]
  %v425 = vld [vmem:[%s2 + $0x148] sm:$0xff]
  %v426 = vld [vmem:[%s2 + $0x150] sm:$0xff]
  %v427 = vld [vmem:[%s2 + $0x158] sm:$0xff]
  %v428 = vld [vmem:[%s2 + $0x160] sm:$0xff]
  %v429 = vld [vmem:[%s2 + $0x168] sm:$0xff]
  %v430 = vld [vmem:[%s2 + $0x170] sm:$0xff]
  %v431 = vld [vmem:[%s2 + $0x178] sm:$0xff]
  %v432 = vld [vmem:[%s2 + $0x180] sm:$0xff]
  %v433 = vld [vmem:[%s2 + $0x188] sm:$0xff]
  %v434 = vld [vmem:[%s2 + $0x190] sm:$0xff]
  %v435 = vld [vmem:[%s2 + $0x198] sm:$0xff]
  %v436 = vld [vmem:[%s2 + $0x1a0] sm:$0xff]
  %v437 = vld [vmem:[%s2 + $0x1a8] sm:$0xff]
  %v438 = vld [vmem:[%s2 + $0x1b0] sm:$0xff]
  %v439 = vld [vmem:[%s2 + $0x1b8] sm:$0xff]
  %v440 = vld [vmem:[%s2 + $0x1c0] sm:$0xff]
  %v441 = vld [vmem:[%s2 + $0x1c8] sm:$0xff]
  %v442 = vld [vmem:[%s2 + $0x1d0] sm:$0xff]
  %v443 = vld [vmem:[%s2 + $0x1d8] sm:$0xff]
  %v444 = vld [vmem:[%s2 + $0x1e0] sm:$0xff]
  %v445 = vld [vmem:[%s2 + $0x1e8] sm:$0xff]
  %v446 = vld [vmem:[%s2 + $0x1f0] sm:$0xff]
  %v447 = vld [vmem:[%s2 + $0x1f8] sm:$0xff]
  %v448 = vld [vmem:[#allocation3] sm:$0xff]
  %v449 = vld [vmem:[#allocation3 + $0x8] sm:$0xff]
  %v450 = vld [vmem:[#allocation3 + $0x10] sm:$0xff]
  %v451 = vld [vmem:[#allocation3 + $0x18] sm:$0xff]
  %452 = vmatprep.subr.mxu0 %v385
  %453 = vmatpush1.msra.mxu0 %v384
  %454 = vmatprep.subr.mxu0 %v389
  %455 = vmatpush1.msra.mxu0 %v388
  %456 = vmatprep.subr.mxu0 %v393
  %457 = vmatpush1.msra.mxu0 %v392
  %458 = vmatprep.subr.mxu0 %v397
  %459 = vmatpush1.msra.mxu0 %v396
  %460 = vmatprep.subr.mxu0 %v401
  %461 = vmatpush1.msra.mxu0 %v400
  %462 = vmatprep.subr.mxu0 %v405
  %463 = vmatpush1.msra.mxu0 %v404
  %464 = vmatprep.subr.mxu0 %v409
  %465 = vmatpush1.msra.mxu0 %v408
  %466 = vmatprep.subr.mxu0 %v413
  %467 = vmatpush1.msra.mxu0 %v412
  %468 = vmatprep.subr.mxu0 %v417
  %469 = vmatpush1.msra.mxu0 %v416
  %470 = vmatprep.subr.mxu0 %v421
  %471 = vmatpush1.msra.mxu0 %v420
  %472 = vmatprep.subr.mxu0 %v425
  %473 = vmatpush1.msra.mxu0 %v424
  %474 = vmatprep.subr.mxu0 %v429
  %475 = vmatpush1.msra.mxu0 %v428
  %476 = vmatprep.subr.mxu0 %v433
  %477 = vmatpush1.msra.mxu0 %v432
  %478 = vmatprep.subr.mxu0 %v437
  %479 = vmatpush1.msra.mxu0 %v436
  %480 = vmatprep.subr.mxu0 %v441
  %481 = vmatpush1.msra.mxu0 %v440
  %482 = vmatprep.subr.mxu0 %v445
  %483 = vmatpush1.msra.mxu0 %v444
  %484 = vmatprep.subr.mxu0 0.0
  %485 = vmatpush1.msra.mxu0 0.0
  %486 = vmatprep.subr.mxu0 0.0
  %487 = vmatpush1.msra.mxu0 0.0
  %488 = vmatprep.subr.mxu0 0.0
  %489 = vmatpush1.msra.mxu0 0.0
  %490 = vmatprep.subr.mxu0 0.0
  %491 = vmatpush1.msra.mxu0 0.0
  %492 = vmatprep.subr.mxu0 0.0
  %493 = vmatpush1.msra.mxu0 0.0
  %494 = vmatprep.subr.mxu0 0.0
  %495 = vmatpush1.msra.mxu0 0.0
  %496 = vmatprep.subr.mxu0 0.0
  %497 = vmatpush1.msra.mxu0 0.0
  %498 = vmatprep.subr.mxu0 0.0
  %499 = vmatpush1.msra.mxu0 0.0
  %500 = vmatprep.subr.mxu0 0.0
  %501 = vmatpush1.msra.mxu0 0.0
  %502 = vmatprep.subr.mxu0 0.0
  %503 = vmatpush1.msra.mxu0 0.0
  %504 = vmatprep.subr.mxu0 0.0
  %505 = vmatpush1.msra.mxu0 0.0
  %506 = vmatprep.subr.mxu0 0.0
  %507 = vmatpush1.msra.mxu0 0.0
  %508 = vmatprep.subr.mxu0 0.0
  %509 = vmatpush1.msra.mxu0 0.0
  %510 = vmatprep.subr.mxu0 0.0
  %511 = vmatpush1.msra.mxu0 0.0
  %512 = vmatprep.subr.mxu0 0.0
  %513 = vmatpush1.msra.mxu0 0.0
  %514 = vmatprep.subr.mxu0 0.0
  %515 = vmatpush1.msra.mxu0 0.0
  %516 = vmatprep.mubr.f32.mxu0 0.0
  %517 = vmatmul.mubr.f32.gmra.mrb[0].mxu0 0.0
  %v518 = vpop.f32.mrb[0].mxu0
  %v519 = vadd.f32 0.0, %v518
  %v520 = vpop.f32.mrb[0].mxu0
  %v521 = vadd.f32 0.0, %v520
  %522 = vdwg.mxu0
  %523 = vmatprep.subr.mxu0 %v387
  %524 = vmatpush1.msra.mxu0 %v386
  %525 = vmatprep.subr.mxu0 %v391
  %526 = vmatpush1.msra.mxu0 %v390
  %527 = vmatprep.subr.mxu0 %v395
  %528 = vmatpush1.msra.mxu0 %v394
  %529 = vmatprep.subr.mxu0 %v399
  %530 = vmatpush1.msra.mxu0 %v398
  %531 = vmatprep.subr.mxu0 %v403
  %532 = vmatpush1.msra.mxu0 %v402
  %533 = vmatprep.subr.mxu0 %v407
  %534 = vmatpush1.msra.mxu0 %v406
  %535 = vmatprep.subr.mxu0 %v411
  %536 = vmatpush1.msra.mxu0 %v410
  %537 = vmatprep.subr.mxu0 %v415
  %538 = vmatpush1.msra.mxu0 %v414
  %539 = vmatprep.subr.mxu0 %v419
  %540 = vmatpush1.msra.mxu0 %v418
  %541 = vmatprep.subr.mxu0 %v423
  %542 = vmatpush1.msra.mxu0 %v422
  %543 = vmatprep.subr.mxu0 %v427
  %544 = vmatpush1.msra.mxu0 %v426
  %545 = vmatprep.subr.mxu0 %v431
  %546 = vmatpush1.msra.mxu0 %v430
  %547 = vmatprep.subr.mxu0 %v435
  %548 = vmatpush1.msra.mxu0 %v434
  %549 = vmatprep.subr.mxu0 %v439
  %550 = vmatpush1.msra.mxu0 %v438
  %551 = vmatprep.subr.mxu0 %v443
  %552 = vmatpush1.msra.mxu0 %v442
  %553 = vmatprep.subr.mxu0 %v447
  %554 = vmatpush1.msra.mxu0 %v446
  %555 = vmatprep.subr.mxu0 0.0
  %556 = vmatpush1.msra.mxu0 0.0
  %557 = vmatprep.subr.mxu0 0.0
  %558 = vmatpush1.msra.mxu0 0.0
  %559 = vmatprep.subr.mxu0 0.0
  %560 = vmatpush1.msra.mxu0 0.0
  %561 = vmatprep.subr.mxu0 0.0
  %562 = vmatpush1.msra.mxu0 0.0
  %563 = vmatprep.subr.mxu0 0.0
  %564 = vmatpush1.msra.mxu0 0.0
  %565 = vmatprep.subr.mxu0 0.0
  %566 = vmatpush1.msra.mxu0 0.0
  %567 = vmatprep.subr.mxu0 0.0
  %568 = vmatpush1.msra.mxu0 0.0
  %569 = vmatprep.subr.mxu0 0.0
  %570 = vmatpush1.msra.mxu0 0.0
  %571 = vmatprep.subr.mxu0 0.0
  %572 = vmatpush1.msra.mxu0 0.0
  %573 = vmatprep.subr.mxu0 0.0
  %574 = vmatpush1.msra.mxu0 0.0
  %575 = vmatprep.subr.mxu0 0.0
  %576 = vmatpush1.msra.mxu0 0.0
  %577 = vmatprep.subr.mxu0 0.0
  %578 = vmatpush1.msra.mxu0 0.0
  %579 = vmatprep.subr.mxu0 0.0
  %580 = vmatpush1.msra.mxu0 0.0
  %581 = vmatprep.subr.mxu0 0.0
  %582 = vmatpush1.msra.mxu0 0.0
  %583 = vmatprep.subr.mxu0 0.0
  %584 = vmatpush1.msra.mxu0 0.0
  %585 = vmatprep.subr.mxu0 0.0
  %586 = vmatpush1.msra.mxu0 0.0
  %587 = vmatprep.mubr.f32.mxu0 0.0
  %588 = vmatmul.mubr.f32.gmra.mrb[0].mxu0 0.0
  %v589 = vpop.f32.mrb[0].mxu0
  %v590 = vadd.f32 0.0, %v589
  %v591 = vpop.f32.mrb[0].mxu0
  %v592 = vadd.f32 0.0, %v591
  %593 = vdwg.mxu0
  %v594 = vadd.f32 %v448, %v519
  %v595 = vadd.f32 %v449, %v521
  %v596 = vadd.f32 %v450, %v590
  %v597 = vadd.f32 %v451, %v592
  %v598 = vxor.u32 %v594, 2147483648
  %v599 = vmul.f32 %v598, 1.442695
  %v600 = vpow.pop %v599
  %v601 = vadd.f32 %v600, 1.0
  %v602 = vrcp.pop %v601
  %v603 = vmul.f32 1.0, %v602
  %v604 = vxor.u32 %v595, 2147483648
  %v605 = vmul.f32 %v604, 1.442695
  %v606 = vpow.pop %v605
  %v607 = vadd.f32 %v606, 1.0
  %v608 = vrcp.pop %v607
  %v609 = vmul.f32 1.0, %v608
  %v610 = vtanh.pop %v596
  %v611 = vxor.u32 %v597, 2147483648
  %v612 = vmul.f32 %v611, 1.442695
  %v613 = vpow.pop %v612
  %v614 = vadd.f32 %v613, 1.0
  %v615 = vrcp.pop %v614
  %v616 = vmul.f32 1.0, %v615
  %v617 = vmul.f32 %v609, 0.0
  %v618 = vmul.f32 %v603, %v610
  %v619 = vadd.f32 %v617, %v618
  %v620 = vtanh.pop %v619
  %v621 = vmul.f32 %v616, %v620
  %622 = vst [vmem:[#allocation2] sm:$0xff] %v621
  %s623 = scalar_lea.vmem [#allocation3], 32
  %v624 = vld [vmem:[%s623] sm:$0xff]
  %v625 = vld [vmem:[%s623 + $0x8] sm:$0xff]
  %v626 = vld [vmem:[%s623 + $0x10] sm:$0xff]
  %v627 = vld [vmem:[%s623 + $0x18] sm:$0xff]
  %628 = vmatprep.subr.mxu0 %v385
  %629 = vmatpush1.msra.mxu0 %v384
  %630 = vmatprep.subr.mxu0 %v389
  %631 = vmatpush1.msra.mxu0 %v388
  %632 = vmatprep.subr.mxu0 %v393
  %633 = vmatpush1.msra.mxu0 %v392
  %634 = vmatprep.subr.mxu0 %v397
  %635 = vmatpush1.msra.mxu0 %v396
  %636 = vmatprep.subr.mxu0 %v401
  %637 = vmatpush1.msra.mxu0 %v400
  %638 = vmatprep.subr.mxu0 %v405
  %639 = vmatpush1.msra.mxu0 %v404
  %640 = vmatprep.subr.mxu0 %v409
  %641 = vmatpush1.msra.mxu0 %v408
  %642 = vmatprep.subr.mxu0 %v413
  %643 = vmatpush1.msra.mxu0 %v412
  %644 = vmatprep.subr.mxu0 %v417
  %645 = vmatpush1.msra.mxu0 %v416
  %646 = vmatprep.subr.mxu0 %v421
  %647 = vmatpush1.msra.mxu0 %v420
  %648 = vmatprep.subr.mxu0 %v425
  %649 = vmatpush1.msra.mxu0 %v424
  %650 = vmatprep.subr.mxu0 %v429
  %651 = vmatpush1.msra.mxu0 %v428
  %652 = vmatprep.subr.mxu0 %v433
  %653 = vmatpush1.msra.mxu0 %v432
  %654 = vmatprep.subr.mxu0 %v437
  %655 = vmatpush1.msra.mxu0 %v436
  %656 = vmatprep.subr.mxu0 %v441
  %657 = vmatpush1.msra.mxu0 %v440
  %658 = vmatprep.subr.mxu0 %v445
  %659 = vmatpush1.msra.mxu0 %v444
  %660 = vmatprep.subr.mxu0 0.0
  %661 = vmatpush1.msra.mxu0 0.0
  %662 = vmatprep.subr.mxu0 0.0
  %663 = vmatpush1.msra.mxu0 0.0
  %664 = vmatprep.subr.mxu0 0.0
  %665 = vmatpush1.msra.mxu0 0.0
  %666 = vmatprep.subr.mxu0 0.0
  %667 = vmatpush1.msra.mxu0 0.0
  %668 = vmatprep.subr.mxu0 0.0
  %669 = vmatpush1.msra.mxu0 0.0
  %670 = vmatprep.subr.mxu0 0.0
  %671 = vmatpush1.msra.mxu0 0.0
  %672 = vmatprep.subr.mxu0 0.0
  %673 = vmatpush1.msra.mxu0 0.0
  %674 = vmatprep.subr.mxu0 0.0
  %675 = vmatpush1.msra.mxu0 0.0
  %676 = vmatprep.subr.mxu0 0.0
  %677 = vmatpush1.msra.mxu0 0.0
  %678 = vmatprep.subr.mxu0 0.0
  %679 = vmatpush1.msra.mxu0 0.0
  %680 = vmatprep.subr.mxu0 0.0
  %681 = vmatpush1.msra.mxu0 0.0
  %682 = vmatprep.subr.mxu0 0.0
  %683 = vmatpush1.msra.mxu0 0.0
  %684 = vmatprep.subr.mxu0 0.0
  %685 = vmatpush1.msra.mxu0 0.0
  %686 = vmatprep.subr.mxu0 0.0
  %687 = vmatpush1.msra.mxu0 0.0
  %688 = vmatprep.subr.mxu0 0.0
  %689 = vmatpush1.msra.mxu0 0.0
  %690 = vmatprep.subr.mxu0 0.0
  %691 = vmatpush1.msra.mxu0 0.0
  %692 = vmatprep.mubr.f32.mxu0 0.0
  %693 = vmatmul.mubr.f32.gmra.mrb[0].mxu0 %v621
  %v694 = vpop.f32.mrb[0].mxu0
  %v695 = vadd.f32 0.0, %v694
  %v696 = vpop.f32.mrb[0].mxu0
  %v697 = vadd.f32 0.0, %v696
  %698 = vdwg.mxu0
  %699 = vmatprep.subr.mxu0 %v387
  %700 = vmatpush1.msra.mxu0 %v386
  %701 = vmatprep.subr.mxu0 %v391
  %702 = vmatpush1.msra.mxu0 %v390
  %703 = vmatprep.subr.mxu0 %v395
  %704 = vmatpush1.msra.mxu0 %v394
  %705 = vmatprep.subr.mxu0 %v399
  %706 = vmatpush1.msra.mxu0 %v398
  %707 = vmatprep.subr.mxu0 %v403
  %708 = vmatpush1.msra.mxu0 %v402
  %709 = vmatprep.subr.mxu0 %v407
  %710 = vmatpush1.msra.mxu0 %v406
  %711 = vmatprep.subr.mxu0 %v411
  %712 = vmatpush1.msra.mxu0 %v410
  %713 = vmatprep.subr.mxu0 %v415
  %714 = vmatpush1.msra.mxu0 %v414
  %715 = vmatprep.subr.mxu0 %v419
  %716 = vmatpush1.msra.mxu0 %v418
  %717 = vmatprep.subr.mxu0 %v423
  %718 = vmatpush1.msra.mxu0 %v422
  %719 = vmatprep.subr.mxu0 %v427
  %720 = vmatpush1.msra.mxu0 %v426
  %721 = vmatprep.subr.mxu0 %v431
  %722 = vmatpush1.msra.mxu0 %v430
  %723 = vmatprep.subr.mxu0 %v435
  %724 = vmatpush1.msra.mxu0 %v434
  %725 = vmatprep.subr.mxu0 %v439
  %726 = vmatpush1.msra.mxu0 %v438
  %727 = vmatprep.subr.mxu0 %v443
  %728 = vmatpush1.msra.mxu0 %v442
  %729 = vmatprep.subr.mxu0 %v447
  %730 = vmatpush1.msra.mxu0 %v446
  %731 = vmatprep.subr.mxu0 0.0
  %732 = vmatpush1.msra.mxu0 0.0
  %733 = vmatprep.subr.mxu0 0.0
  %734 = vmatpush1.msra.mxu0 0.0
  %735 = vmatprep.subr.mxu0 0.0
  %736 = vmatpush1.msra.mxu0 0.0
  %737 = vmatprep.subr.mxu0 0.0
  %738 = vmatpush1.msra.mxu0 0.0
  %739 = vmatprep.subr.mxu0 0.0
  %740 = vmatpush1.msra.mxu0 0.0
  %741 = vmatprep.subr.mxu0 0.0
  %742 = vmatpush1.msra.mxu0 0.0
  %743 = vmatprep.subr.mxu0 0.0
  %744 = vmatpush1.msra.mxu0 0.0
  %745 = vmatprep.subr.mxu0 0.0
  %746 = vmatpush1.msra.mxu0 0.0
  %747 = vmatprep.subr.mxu0 0.0
  %748 = vmatpush1.msra.mxu0 0.0
  %749 = vmatprep.subr.mxu0 0.0
  %750 = vmatpush1.msra.mxu0 0.0
  %751 = vmatprep.subr.mxu0 0.0
  %752 = vmatpush1.msra.mxu0 0.0
  %753 = vmatprep.subr.mxu0 0.0
  %754 = vmatpush1.msra.mxu0 0.0
  %755 = vmatprep.subr.mxu0 0.0
  %756 = vmatpush1.msra.mxu0 0.0
  %757 = vmatprep.subr.mxu0 0.0
  %758 = vmatpush1.msra.mxu0 0.0
  %759 = vmatprep.subr.mxu0 0.0
  %760 = vmatpush1.msra.mxu0 0.0
  %761 = vmatprep.subr.mxu0 0.0
  %762 = vmatpush1.msra.mxu0 0.0
  %763 = vmatprep.mubr.f32.mxu0 0.0
  %764 = vmatmul.mubr.f32.gmra.mrb[0].mxu0 %v621
  %v765 = vpop.f32.mrb[0].mxu0
  %v766 = vadd.f32 0.0, %v765
  %v767 = vpop.f32.mrb[0].mxu0
  %v768 = vadd.f32 0.0, %v767
  %769 = vdwg.mxu0
  %v770 = vadd.f32 %v624, %v695
  %v771 = vadd.f32 %v625, %v697
  %v772 = vadd.f32 %v626, %v766
  %v773 = vadd.f32 %v627, %v768
  %v774 = vxor.u32 %v770, 2147483648
  %v775 = vmul.f32 %v774, 1.442695
  %v776 = vpow.pop %v775
  %v777 = vadd.f32 %v776, 1.0
  %v778 = vrcp.pop %v777
  %v779 = vmul.f32 1.0, %v778
  %v780 = vxor.u32 %v771, 2147483648
  %v781 = vmul.f32 %v780, 1.442695
  %v782 = vpow.pop %v781
  %v783 = vadd.f32 %v782, 1.0
  %v784 = vrcp.pop %v783
  %v785 = vmul.f32 1.0, %v784
  %v786 = vtanh.pop %v772
  %v787 = vxor.u32 %v773, 2147483648
  %v788 = vmul.f32 %v787, 1.442695
  %v789 = vpow.pop %v788
  %v790 = vadd.f32 %v789, 1.0
  %v791 = vrcp.pop %v790
  %v792 = vmul.f32 1.0, %v791
  %v793 = vmul.f32 %v785, %v619
  %v794 = vmul.f32 %v779, %v786
  %v795 = vadd.f32 %v793, %v794
  %v796 = vtanh.pop %v795
  %v797 = vmul.f32 %v792, %v796
  %s798 = scalar_lea.vmem [#allocation2], 8
  %799 = vst [vmem:[%s798] sm:$0xff] %v797
  %s800 = scalar_lea.vmem [#allocation3], 64
  %v801 = vld [vmem:[%s800] sm:$0xff]
  %v802 = vld [vmem:[%s800 + $0x8] sm:$0xff]
  %v803 = vld [vmem:[%s800 + $0x10] sm:$0xff]
  %v804 = vld [vmem:[%s800 + $0x18] sm:$0xff]
  %805 = vmatprep.subr.mxu0 %v385
  %806 = vmatpush1.msra.mxu0 %v384
  %807 = vmatprep.subr.mxu0 %v389
  %808 = vmatpush1.msra.mxu0 %v388
  %809 = vmatprep.subr.mxu0 %v393
  %810 = vmatpush1.msra.mxu0 %v392
  %811 = vmatprep.subr.mxu0 %v397
  %812 = vmatpush1.msra.mxu0 %v396
  %813 = vmatprep.subr.mxu0 %v401
  %814 = vmatpush1.msra.mxu0 %v400
  %815 = vmatprep.subr.mxu0 %v405
  %816 = vmatpush1.msra.mxu0 %v404
  %817 = vmatprep.subr.mxu0 %v409
  %818 = vmatpush1.msra.mxu0 %v408
  %819 = vmatprep.subr.mxu0 %v413
  %820 = vmatpush1.msra.mxu0 %v412
  %821 = vmatprep.subr.mxu0 %v417
  %822 = vmatpush1.msra.mxu0 %v416
  %823 = vmatprep.subr.mxu0 %v421
  %824 = vmatpush1.msra.mxu0 %v420
  %825 = vmatprep.subr.mxu0 %v425
  %826 = vmatpush1.msra.mxu0 %v424
  %827 = vmatprep.subr.mxu0 %v429
  %828 = vmatpush1.msra.mxu0 %v428
  %829 = vmatprep.subr.mxu0 %v433
  %830 = vmatpush1.msra.mxu0 %v432
  %831 = vmatprep.subr.mxu0 %v437
  %832 = vmatpush1.msra.mxu0 %v436
  %833 = vmatprep.subr.mxu0 %v441
  %834 = vmatpush1.msra.mxu0 %v440
  %835 = vmatprep.subr.mxu0 %v445
  %836 = vmatpush1.msra.mxu0 %v444
  %837 = vmatprep.subr.mxu0 0.0
  %838 = vmatpush1.msra.mxu0 0.0
  %839 = vmatprep.subr.mxu0 0.0
  %840 = vmatpush1.msra.mxu0 0.0
  %841 = vmatprep.subr.mxu0 0.0
  %842 = vmatpush1.msra.mxu0 0.0
  %843 = vmatprep.subr.mxu0 0.0
  %844 = vmatpush1.msra.mxu0 0.0
  %845 = vmatprep.subr.mxu0 0.0
  %846 = vmatpush1.msra.mxu0 0.0
  %847 = vmatprep.subr.mxu0 0.0
  %848 = vmatpush1.msra.mxu0 0.0
  %849 = vmatprep.subr.mxu0 0.0
  %850 = vmatpush1.msra.mxu0 0.0
  %851 = vmatprep.subr.mxu0 0.0
  %852 = vmatpush1.msra.mxu0 0.0
  %853 = vmatprep.subr.mxu0 0.0
  %854 = vmatpush1.msra.mxu0 0.0
  %855 = vmatprep.subr.mxu0 0.0
  %856 = vmatpush1.msra.mxu0 0.0
  %857 = vmatprep.subr.mxu0 0.0
  %858 = vmatpush1.msra.mxu0 0.0
  %859 = vmatprep.subr.mxu0 0.0
  %860 = vmatpush1.msra.mxu0 0.0
  %861 = vmatprep.subr.mxu0 0.0
  %862 = vmatpush1.msra.mxu0 0.0
  %863 = vmatprep.subr.mxu0 0.0
  %864 = vmatpush1.msra.mxu0 0.0
  %865 = vmatprep.subr.mxu0 0.0
  %866 = vmatpush1.msra.mxu0 0.0
  %867 = vmatprep.subr.mxu0 0.0
  %868 = vmatpush1.msra.mxu0 0.0
  %869 = vmatprep.mubr.f32.mxu0 0.0
  %870 = vmatmul.mubr.f32.gmra.mrb[0].mxu0 %v797
  %v871 = vpop.f32.mrb[0].mxu0
  %v872 = vadd.f32 0.0, %v871
  %v873 = vpop.f32.mrb[0].mxu0
  %v874 = vadd.f32 0.0, %v873
  %875 = vdwg.mxu0
  %876 = vmatprep.subr.mxu0 %v387
  %877 = vmatpush1.msra.mxu0 %v386
  %878 = vmatprep.subr.mxu0 %v391
  %879 = vmatpush1.msra.mxu0 %v390
  %880 = vmatprep.subr.mxu0 %v395
  %881 = vmatpush1.msra.mxu0 %v394
  %882 = vmatprep.subr.mxu0 %v399
  %883 = vmatpush1.msra.mxu0 %v398
  %884 = vmatprep.subr.mxu0 %v403
  %885 = vmatpush1.msra.mxu0 %v402
  %886 = vmatprep.subr.mxu0 %v407
  %887 = vmatpush1.msra.mxu0 %v406
  %888 = vmatprep.subr.mxu0 %v411
  %889 = vmatpush1.msra.mxu0 %v410
  %890 = vmatprep.subr.mxu0 %v415
  %891 = vmatpush1.msra.mxu0 %v414
  %892 = vmatprep.subr.mxu0 %v419
  %893 = vmatpush1.msra.mxu0 %v418
  %894 = vmatprep.subr.mxu0 %v423
  %895 = vmatpush1.msra.mxu0 %v422
  %896 = vmatprep.subr.mxu0 %v427
  %897 = vmatpush1.msra.mxu0 %v426
  %898 = vmatprep.subr.mxu0 %v431
  %899 = vmatpush1.msra.mxu0 %v430
  %900 = vmatprep.subr.mxu0 %v435
  %901 = vmatpush1.msra.mxu0 %v434
  %902 = vmatprep.subr.mxu0 %v439
  %903 = vmatpush1.msra.mxu0 %v438
  %904 = vmatprep.subr.mxu0 %v443
  %905 = vmatpush1.msra.mxu0 %v442
  %906 = vmatprep.subr.mxu0 %v447
  %907 = vmatpush1.msra.mxu0 %v446
  %908 = vmatprep.subr.mxu0 0.0
  %909 = vmatpush1.msra.mxu0 0.0
  %910 = vmatprep.subr.mxu0 0.0
  %911 = vmatpush1.msra.mxu0 0.0
  %912 = vmatprep.subr.mxu0 0.0
  %913 = vmatpush1.msra.mxu0 0.0
  %914 = vmatprep.subr.mxu0 0.0
  %915 = vmatpush1.msra.mxu0 0.0
  %916 = vmatprep.subr.mxu0 0.0
  %917 = vmatpush1.msra.mxu0 0.0
  %918 = vmatprep.subr.mxu0 0.0
  %919 = vmatpush1.msra.mxu0 0.0
  %920 = vmatprep.subr.mxu0 0.0
  %921 = vmatpush1.msra.mxu0 0.0
  %922 = vmatprep.subr.mxu0 0.0
  %923 = vmatpush1.msra.mxu0 0.0
  %924 = vmatprep.subr.mxu0 0.0
  %925 = vmatpush1.msra.mxu0 0.0
  %926 = vmatprep.subr.mxu0 0.0
  %927 = vmatpush1.msra.mxu0 0.0
  %928 = vmatprep.subr.mxu0 0.0
  %929 = vmatpush1.msra.mxu0 0.0
  %930 = vmatprep.subr.mxu0 0.0
  %931 = vmatpush1.msra.mxu0 0.0
  %932 = vmatprep.subr.mxu0 0.0
  %933 = vmatpush1.msra.mxu0 0.0
  %934 = vmatprep.subr.mxu0 0.0
  %935 = vmatpush1.msra.mxu0 0.0
  %936 = vmatprep.subr.mxu0 0.0
  %937 = vmatpush1.msra.mxu0 0.0
  %938 = vmatprep.subr.mxu0 0.0
  %939 = vmatpush1.msra.mxu0 0.0
  %940 = vmatprep.mubr.f32.mxu0 0.0
  %941 = vmatmul.mubr.f32.gmra.mrb[0].mxu0 %v797
  %v942 = vpop.f32.mrb[0].mxu0
  %v943 = vadd.f32 0.0, %v942
  %v944 = vpop.f32.mrb[0].mxu0
  %v945 = vadd.f32 0.0, %v944
  %946 = vdwg.mxu0
  %v947 = vadd.f32 %v801, %v872
  %v948 = vadd.f32 %v802, %v874
  %v949 = vadd.f32 %v803, %v943
  %v950 = vadd.f32 %v804, %v945
  %v951 = vxor.u32 %v947, 2147483648
  %v952 = vmul.f32 %v951, 1.442695
  %v953 = vpow.pop %v952
  %v954 = vadd.f32 %v953, 1.0
  %v955 = vrcp.pop %v954
  %v956 = vmul.f32 1.0, %v955
  %v957 = vxor.u32 %v948, 2147483648
  %v958 = vmul.f32 %v957, 1.442695
  %v959 = vpow.pop %v958
  %v960 = vadd.f32 %v959, 1.0
  %v961 = vrcp.pop %v960
  %v962 = vmul.f32 1.0, %v961
  %v963 = vtanh.pop %v949
  %v964 = vxor.u32 %v950, 2147483648
  %v965 = vmul.f32 %v964, 1.442695
  %v966 = vpow.pop %v965
  %v967 = vadd.f32 %v966, 1.0
  %v968 = vrcp.pop %v967
  %v969 = vmul.f32 1.0, %v968
  %v970 = vmul.f32 %v962, %v795
  %v971 = vmul.f32 %v956, %v963
  %v972 = vadd.f32 %v970, %v971
  %v973 = vtanh.pop %v972
  %v974 = vmul.f32 %v969, %v973
  %s975 = scalar_lea.vmem [#allocation2], 16
  %976 = vst [vmem:[%s975] sm:$0xff] %v974
  %s977 = scalar_lea.vmem [#allocation3], 96
  %v978 = vld [vmem:[%s977] sm:$0xff]
  %v979 = vld [vmem:[%s977 + $0x8] sm:$0xff]
  %v980 = vld [vmem:[%s977 + $0x10] sm:$0xff]
  %v981 = vld [vmem:[%s977 + $0x18] sm:$0xff]
  %982 = vmatprep.subr.mxu0 %v385
  %983 = vmatpush1.msra.mxu0 %v384
  %984 = vmatprep.subr.mxu0 %v389
  %985 = vmatpush1.msra.mxu0 %v388
  %986 = vmatprep.subr.mxu0 %v393
  %987 = vmatpush1.msra.mxu0 %v392
  %988 = vmatprep.subr.mxu0 %v397
  %989 = vmatpush1.msra.mxu0 %v396
  %990 = vmatprep.subr.mxu0 %v401
  %991 = vmatpush1.msra.mxu0 %v400
  %992 = vmatprep.subr.mxu0 %v405
  %993 = vmatpush1.msra.mxu0 %v404
  %994 = vmatprep.subr.mxu0 %v409
  %995 = vmatpush1.msra.mxu0 %v408
  %996 = vmatprep.subr.mxu0 %v413
  %997 = vmatpush1.msra.mxu0 %v412
  %998 = vmatprep.subr.mxu0 %v417
  %999 = vmatpush1.msra.mxu0 %v416
  %1000 = vmatprep.subr.mxu0 %v421
  %1001 = vmatpush1.msra.mxu0 %v420
  %1002 = vmatprep.subr.mxu0 %v425
  %1003 = vmatpush1.msra.mxu0 %v424
  %1004 = vmatprep.subr.mxu0 %v429
  %1005 = vmatpush1.msra.mxu0 %v428
  %1006 = vmatprep.subr.mxu0 %v433
  %1007 = vmatpush1.msra.mxu0 %v432
  %1008 = vmatprep.subr.mxu0 %v437
  %1009 = vmatpush1.msra.mxu0 %v436
  %1010 = vmatprep.subr.mxu0 %v441
  %1011 = vmatpush1.msra.mxu0 %v440
  %1012 = vmatprep.subr.mxu0 %v445
  %1013 = vmatpush1.msra.mxu0 %v444
  %1014 = vmatprep.subr.mxu0 0.0
  %1015 = vmatpush1.msra.mxu0 0.0
  %1016 = vmatprep.subr.mxu0 0.0
  %1017 = vmatpush1.msra.mxu0 0.0
  %1018 = vmatprep.subr.mxu0 0.0
  %1019 = vmatpush1.msra.mxu0 0.0
  %1020 = vmatprep.subr.mxu0 0.0
  %1021 = vmatpush1.msra.mxu0 0.0
  %1022 = vmatprep.subr.mxu0 0.0
  %1023 = vmatpush1.msra.mxu0 0.0
  %1024 = vmatprep.subr.mxu0 0.0
  %1025 = vmatpush1.msra.mxu0 0.0
  %1026 = vmatprep.subr.mxu0 0.0
  %1027 = vmatpush1.msra.mxu0 0.0
  %1028 = vmatprep.subr.mxu0 0.0
  %1029 = vmatpush1.msra.mxu0 0.0
  %1030 = vmatprep.subr.mxu0 0.0
  %1031 = vmatpush1.msra.mxu0 0.0
  %1032 = vmatprep.subr.mxu0 0.0
  %1033 = vmatpush1.msra.mxu0 0.0
  %1034 = vmatprep.subr.mxu0 0.0
  %1035 = vmatpush1.msra.mxu0 0.0
  %1036 = vmatprep.subr.mxu0 0.0
  %1037 = vmatpush1.msra.mxu0 0.0
  %1038 = vmatprep.subr.mxu0 0.0
  %1039 = vmatpush1.msra.mxu0 0.0
  %1040 = vmatprep.subr.mxu0 0.0
  %1041 = vmatpush1.msra.mxu0 0.0
  %1042 = vmatprep.subr.mxu0 0.0
  %1043 = vmatpush1.msra.mxu0 0.0
  %1044 = vmatprep.subr.mxu0 0.0
  %1045 = vmatpush1.msra.mxu0 0.0
  %1046 = vmatprep.mubr.f32.mxu0 0.0
  %1047 = vmatmul.mubr.f32.gmra.mrb[0].mxu0 %v974
  %v1048 = vpop.f32.mrb[0].mxu0
  %v1049 = vadd.f32 0.0, %v1048
  %v1050 = vpop.f32.mrb[0].mxu0
  %v1051 = vadd.f32 0.0, %v1050
  %1052 = vdwg.mxu0
  %1053 = vmatprep.subr.mxu0 %v387
  %1054 = vmatpush1.msra.mxu0 %v386
  %1055 = vmatprep.subr.mxu0 %v391
  %1056 = vmatpush1.msra.mxu0 %v390
  %1057 = vmatprep.subr.mxu0 %v395
  %1058 = vmatpush1.msra.mxu0 %v394
  %1059 = vmatprep.subr.mxu0 %v399
  %1060 = vmatpush1.msra.mxu0 %v398
  %1061 = vmatprep.subr.mxu0 %v403
  %1062 = vmatpush1.msra.mxu0 %v402
  %1063 = vmatprep.subr.mxu0 %v407
  %1064 = vmatpush1.msra.mxu0 %v406
  %1065 = vmatprep.subr.mxu0 %v411
  %1066 = vmatpush1.msra.mxu0 %v410
  %1067 = vmatprep.subr.mxu0 %v415
  %1068 = vmatpush1.msra.mxu0 %v414
  %1069 = vmatprep.subr.mxu0 %v419
  %1070 = vmatpush1.msra.mxu0 %v418
  %1071 = vmatprep.subr.mxu0 %v423
  %1072 = vmatpush1.msra.mxu0 %v422
  %1073 = vmatprep.subr.mxu0 %v427
  %1074 = vmatpush1.msra.mxu0 %v426
  %1075 = vmatprep.subr.mxu0 %v431
  %1076 = vmatpush1.msra.mxu0 %v430
  %1077 = vmatprep.subr.mxu0 %v435
  %1078 = vmatpush1.msra.mxu0 %v434
  %1079 = vmatprep.subr.mxu0 %v439
  %1080 = vmatpush1.msra.mxu0 %v438
  %1081 = vmatprep.subr.mxu0 %v443
  %1082 = vmatpush1.msra.mxu0 %v442
  %1083 = vmatprep.subr.mxu0 %v447
  %1084 = vmatpush1.msra.mxu0 %v446
  %1085 = vmatprep.subr.mxu0 0.0
  %1086 = vmatpush1.msra.mxu0 0.0
  %1087 = vmatprep.subr.mxu0 0.0
  %1088 = vmatpush1.msra.mxu0 0.0
  %1089 = vmatprep.subr.mxu0 0.0
  %1090 = vmatpush1.msra.mxu0 0.0
  %1091 = vmatprep.subr.mxu0 0.0
  %1092 = vmatpush1.msra.mxu0 0.0
  %1093 = vmatprep.subr.mxu0 0.0
  %1094 = vmatpush1.msra.mxu0 0.0
  %1095 = vmatprep.subr.mxu0 0.0
  %1096 = vmatpush1.msra.mxu0 0.0
  %1097 = vmatprep.subr.mxu0 0.0
  %1098 = vmatpush1.msra.mxu0 0.0
  %1099 = vmatprep.subr.mxu0 0.0
  %1100 = vmatpush1.msra.mxu0 0.0
  %1101 = vmatprep.subr.mxu0 0.0
  %1102 = vmatpush1.msra.mxu0 0.0
  %1103 = vmatprep.subr.mxu0 0.0
  %1104 = vmatpush1.msra.mxu0 0.0
  %1105 = vmatprep.subr.mxu0 0.0
  %1106 = vmatpush1.msra.mxu0 0.0
  %1107 = vmatprep.subr.mxu0 0.0
  %1108 = vmatpush1.msra.mxu0 0.0
  %1109 = vmatprep.subr.mxu0 0.0
  %1110 = vmatpush1.msra.mxu0 0.0
  %1111 = vmatprep.subr.mxu0 0.0
  %1112 = vmatpush1.msra.mxu0 0.0
  %1113 = vmatprep.subr.mxu0 0.0
  %1114 = vmatpush1.msra.mxu0 0.0
  %1115 = vmatprep.subr.mxu0 0.0
  %1116 = vmatpush1.msra.mxu0 0.0
  %1117 = vmatprep.mubr.f32.mxu0 0.0
  %1118 = vmatmul.mubr.f32.gmra.mrb[0].mxu0 %v974
  %v1119 = vpop.f32.mrb[0].mxu0
  %v1120 = vadd.f32 0.0, %v1119
  %v1121 = vpop.f32.mrb[0].mxu0
  %v1122 = vadd.f32 0.0, %v1121
  %1123 = vdwg.mxu0
  %v1124 = vadd.f32 %v978, %v1049
  %v1125 = vadd.f32 %v979, %v1051
  %v1126 = vadd.f32 %v980, %v1120
  %v1127 = vadd.f32 %v981, %v1122
  %v1128 = vxor.u32 %v1124, 2147483648
  %v1129 = vmul.f32 %v1128, 1.442695
  %v1130 = vpow.pop %v1129
  %v1131 = vadd.f32 %v1130, 1.0
  %v1132 = vrcp.pop %v1131
  %v1133 = vmul.f32 1.0, %v1132
  %v1134 = vxor.u32 %v1125, 2147483648
  %v1135 = vmul.f32 %v1134, 1.442695
  %v1136 = vpow.pop %v1135
  %v1137 = vadd.f32 %v1136, 1.0
  %v1138 = vrcp.pop %v1137
  %v1139 = vmul.f32 1.0, %v1138
  %v1140 = vtanh.pop %v1126
  %v1141 = vxor.u32 %v1127, 2147483648
  %v1142 = vmul.f32 %v1141, 1.442695
  %v1143 = vpow.pop %v1142
  %v1144 = vadd.f32 %v1143, 1.0
  %v1145 = vrcp.pop %v1144
  %v1146 = vmul.f32 1.0, %v1145
  %v1147 = vmul.f32 %v1139, %v972
  %v1148 = vmul.f32 %v1133, %v1140
  %v1149 = vadd.f32 %v1147, %v1148
  %v1150 = vtanh.pop %v1149
  %v1151 = vmul.f32 %v1146, %v1150
  %s1152 = scalar_lea.vmem [#allocation2], 24
  %1153 = vst [vmem:[%s1152] sm:$0xff] %v1151
  %s1154 = scalar_lea.vmem [#allocation3], 128
  %v1155 = vld [vmem:[%s1154] sm:$0xff]
  %v1156 = vld [vmem:[%s1154 + $0x8] sm:$0xff]
  %v1157 = vld [vmem:[%s1154 + $0x10] sm:$0xff]
  %v1158 = vld [vmem:[%s1154 + $0x18] sm:$0xff]
  %1159 = vmatprep.subr.mxu0 %v385
  %1160 = vmatpush1.msra.mxu0 %v384
  %1161 = vmatprep.subr.mxu0 %v389
  %1162 = vmatpush1.msra.mxu0 %v388
  %1163 = vmatprep.subr.mxu0 %v393
  %1164 = vmatpush1.msra.mxu0 %v392
  %1165 = vmatprep.subr.mxu0 %v397
  %1166 = vmatpush1.msra.mxu0 %v396
  %1167 = vmatprep.subr.mxu0 %v401
  %1168 = vmatpush1.msra.mxu0 %v400
  %1169 = vmatprep.subr.mxu0 %v405
  %1170 = vmatpush1.msra.mxu0 %v404
  %1171 = vmatprep.subr.mxu0 %v409
  %1172 = vmatpush1.msra.mxu0 %v408
  %1173 = vmatprep.subr.mxu0 %v413
  %1174 = vmatpush1.msra.mxu0 %v412
  %1175 = vmatprep.subr.mxu0 %v417
  %1176 = vmatpush1.msra.mxu0 %v416
  %1177 = vmatprep.subr.mxu0 %v421
  %1178 = vmatpush1.msra.mxu0 %v420
  %1179 = vmatprep.subr.mxu0 %v425
  %1180 = vmatpush1.msra.mxu0 %v424
  %1181 = vmatprep.subr.mxu0 %v429
  %1182 = vmatpush1.msra.mxu0 %v428
  %1183 = vmatprep.subr.mxu0 %v433
  %1184 = vmatpush1.msra.mxu0 %v432
  %1185 = vmatprep.subr.mxu0 %v437
  %1186 = vmatpush1.msra.mxu0 %v436
  %1187 = vmatprep.subr.mxu0 %v441
  %1188 = vmatpush1.msra.mxu0 %v440
  %1189 = vmatprep.subr.mxu0 %v445
  %1190 = vmatpush1.msra.mxu0 %v444
  %1191 = vmatprep.subr.mxu0 0.0
  %1192 = vmatpush1.msra.mxu0 0.0
  %1193 = vmatprep.subr.mxu0 0.0
  %1194 = vmatpush1.msra.mxu0 0.0
  %1195 = vmatprep.subr.mxu0 0.0
  %1196 = vmatpush1.msra.mxu0 0.0
  %1197 = vmatprep.subr.mxu0 0.0
  %1198 = vmatpush1.msra.mxu0 0.0
  %1199 = vmatprep.subr.mxu0 0.0
  %1200 = vmatpush1.msra.mxu0 0.0
  %1201 = vmatprep.subr.mxu0 0.0
  %1202 = vmatpush1.msra.mxu0 0.0
  %1203 = vmatprep.subr.mxu0 0.0
  %1204 = vmatpush1.msra.mxu0 0.0
  %1205 = vmatprep.subr.mxu0 0.0
  %1206 = vmatpush1.msra.mxu0 0.0
  %1207 = vmatprep.subr.mxu0 0.0
  %1208 = vmatpush1.msra.mxu0 0.0
  %1209 = vmatprep.subr.mxu0 0.0
  %1210 = vmatpush1.msra.mxu0 0.0
  %1211 = vmatprep.subr.mxu0 0.0
  %1212 = vmatpush1.msra.mxu0 0.0
  %1213 = vmatprep.subr.mxu0 0.0
  %1214 = vmatpush1.msra.mxu0 0.0
  %1215 = vmatprep.subr.mxu0 0.0
  %1216 = vmatpush1.msra.mxu0 0.0
  %1217 = vmatprep.subr.mxu0 0.0
  %1218 = vmatpush1.msra.mxu0 0.0
  %1219 = vmatprep.subr.mxu0 0.0
  %1220 = vmatpush1.msra.mxu0 0.0
  %1221 = vmatprep.subr.mxu0 0.0
  %1222 = vmatpush1.msra.mxu0 0.0
  %1223 = vmatprep.mubr.f32.mxu0 0.0
  %1224 = vmatmul.mubr.f32.gmra.mrb[0].mxu0 %v1151
  %v1225 = vpop.f32.mrb[0].mxu0
  %v1226 = vadd.f32 0.0, %v1225
  %v1227 = vpop.f32.mrb[0].mxu0
  %v1228 = vadd.f32 0.0, %v1227
  %1229 = vdwg.mxu0
  %1230 = vmatprep.subr.mxu0 %v387
  %1231 = vmatpush1.msra.mxu0 %v386
  %1232 = vmatprep.subr.mxu0 %v391
  %1233 = vmatpush1.msra.mxu0 %v390
  %1234 = vmatprep.subr.mxu0 %v395
  %1235 = vmatpush1.msra.mxu0 %v394
  %1236 = vmatprep.subr.mxu0 %v399
  %1237 = vmatpush1.msra.mxu0 %v398
  %1238 = vmatprep.subr.mxu0 %v403
  %1239 = vmatpush1.msra.mxu0 %v402
  %1240 = vmatprep.subr.mxu0 %v407
  %1241 = vmatpush1.msra.mxu0 %v406
  %1242 = vmatprep.subr.mxu0 %v411
  %1243 = vmatpush1.msra.mxu0 %v410
  %1244 = vmatprep.subr.mxu0 %v415
  %1245 = vmatpush1.msra.mxu0 %v414
  %1246 = vmatprep.subr.mxu0 %v419
  %1247 = vmatpush1.msra.mxu0 %v418
  %1248 = vmatprep.subr.mxu0 %v423
  %1249 = vmatpush1.msra.mxu0 %v422
  %1250 = vmatprep.subr.mxu0 %v427
  %1251 = vmatpush1.msra.mxu0 %v426
  %1252 = vmatprep.subr.mxu0 %v431
  %1253 = vmatpush1.msra.mxu0 %v430
  %1254 = vmatprep.subr.mxu0 %v435
  %1255 = vmatpush1.msra.mxu0 %v434
  %1256 = vmatprep.subr.mxu0 %v439
  %1257 = vmatpush1.msra.mxu0 %v438
  %1258 = vmatprep.subr.mxu0 %v443
  %1259 = vmatpush1.msra.mxu0 %v442
  %1260 = vmatprep.subr.mxu0 %v447
  %1261 = vmatpush1.msra.mxu0 %v446
  %1262 = vmatprep.subr.mxu0 0.0
  %1263 = vmatpush1.msra.mxu0 0.0
  %1264 = vmatprep.subr.mxu0 0.0
  %1265 = vmatpush1.msra.mxu0 0.0
  %1266 = vmatprep.subr.mxu0 0.0
  %1267 = vmatpush1.msra.mxu0 0.0
  %1268 = vmatprep.subr.mxu0 0.0
  %1269 = vmatpush1.msra.mxu0 0.0
  %1270 = vmatprep.subr.mxu0 0.0
  %1271 = vmatpush1.msra.mxu0 0.0
  %1272 = vmatprep.subr.mxu0 0.0
  %1273 = vmatpush1.msra.mxu0 0.0
  %1274 = vmatprep.subr.mxu0 0.0
  %1275 = vmatpush1.msra.mxu0 0.0
  %1276 = vmatprep.subr.mxu0 0.0
  %1277 = vmatpush1.msra.mxu0 0.0
  %1278 = vmatprep.subr.mxu0 0.0
  %1279 = vmatpush1.msra.mxu0 0.0
  %1280 = vmatprep.subr.mxu0 0.0
  %1281 = vmatpush1.msra.mxu0 0.0
  %1282 = vmatprep.subr.mxu0 0.0
  %1283 = vmatpush1.msra.mxu0 0.0
  %1284 = vmatprep.subr.mxu0 0.0
  %1285 = vmatpush1.msra.mxu0 0.0
  %1286 = vmatprep.subr.mxu0 0.0
  %1287 = vmatpush1.msra.mxu0 0.0
  %1288 = vmatprep.subr.mxu0 0.0
  %1289 = vmatpush1.msra.mxu0 0.0
  %1290 = vmatprep.subr.mxu0 0.0
  %1291 = vmatpush1.msra.mxu0 0.0
  %1292 = vmatprep.subr.mxu0 0.0
  %1293 = vmatpush1.msra.mxu0 0.0
  %1294 = vmatprep.mubr.f32.mxu0 0.0
  %1295 = vmatmul.mubr.f32.gmra.mrb[0].mxu0 %v1151
  %v1296 = vpop.f32.mrb[0].mxu0
  %v1297 = vadd.f32 0.0, %v1296
  %v1298 = vpop.f32.mrb[0].mxu0
  %v1299 = vadd.f32 0.0, %v1298
  %1300 = vdwg.mxu0
  %v1301 = vadd.f32 %v1155, %v1226
  %v1302 = vadd.f32 %v1156, %v1228
  %v1303 = vadd.f32 %v1157, %v1297
  %v1304 = vadd.f32 %v1158, %v1299
  %v1305 = vxor.u32 %v1301, 2147483648
  %v1306 = vmul.f32 %v1305, 1.442695
  %v1307 = vpow.pop %v1306
  %v1308 = vadd.f32 %v1307, 1.0
  %v1309 = vrcp.pop %v1308
  %v1310 = vmul.f32 1.0, %v1309
  %v1311 = vxor.u32 %v1302, 2147483648
  %v1312 = vmul.f32 %v1311, 1.442695
  %v1313 = vpow.pop %v1312
  %v1314 = vadd.f32 %v1313, 1.0
  %v1315 = vrcp.pop %v1314
  %v1316 = vmul.f32 1.0, %v1315
  %v1317 = vtanh.pop %v1303
  %v1318 = vxor.u32 %v1304, 2147483648
  %v1319 = vmul.f32 %v1318, 1.442695
  %v1320 = vpow.pop %v1319
  %v1321 = vadd.f32 %v1320, 1.0
  %v1322 = vrcp.pop %v1321
  %v1323 = vmul.f32 1.0, %v1322
  %v1324 = vmul.f32 %v1316, %v1149
  %v1325 = vmul.f32 %v1310, %v1317
  %v1326 = vadd.f32 %v1324, %v1325
  %v1327 = vtanh.pop %v1326
  %v1328 = vmul.f32 %v1323, %v1327
  %s1329 = scalar_lea.vmem [#allocation2], 32
  %1330 = vst [vmem:[%s1329] sm:$0xff] %v1328
  %s1331 = scalar_lea.vmem [#allocation3], 160
  %v1332 = vld [vmem:[%s1331] sm:$0xff]
  %v1333 = vld [vmem:[%s1331 + $0x8] sm:$0xff]
  %v1334 = vld [vmem:[%s1331 + $0x10] sm:$0xff]
  %v1335 = vld [vmem:[%s1331 + $0x18] sm:$0xff]
  %1336 = vmatprep.subr.mxu0 %v385
  %1337 = vmatpush1.msra.mxu0 %v384
  %1338 = vmatprep.subr.mxu0 %v389
  %1339 = vmatpush1.msra.mxu0 %v388
  %1340 = vmatprep.subr.mxu0 %v393
  %1341 = vmatpush1.msra.mxu0 %v392
  %1342 = vmatprep.subr.mxu0 %v397
  %1343 = vmatpush1.msra.mxu0 %v396
  %1344 = vmatprep.subr.mxu0 %v401
  %1345 = vmatpush1.msra.mxu0 %v400
  %1346 = vmatprep.subr.mxu0 %v405
  %1347 = vmatpush1.msra.mxu0 %v404
  %1348 = vmatprep.subr.mxu0 %v409
  %1349 = vmatpush1.msra.mxu0 %v408
  %1350 = vmatprep.subr.mxu0 %v413
  %1351 = vmatpush1.msra.mxu0 %v412
  %1352 = vmatprep.subr.mxu0 %v417
  %1353 = vmatpush1.msra.mxu0 %v416
  %1354 = vmatprep.subr.mxu0 %v421
  %1355 = vmatpush1.msra.mxu0 %v420
  %1356 = vmatprep.subr.mxu0 %v425
  %1357 = vmatpush1.msra.mxu0 %v424
  %1358 = vmatprep.subr.mxu0 %v429
  %1359 = vmatpush1.msra.mxu0 %v428
  %1360 = vmatprep.subr.mxu0 %v433
  %1361 = vmatpush1.msra.mxu0 %v432
  %1362 = vmatprep.subr.mxu0 %v437
  %1363 = vmatpush1.msra.mxu0 %v436
  %1364 = vmatprep.subr.mxu0 %v441
  %1365 = vmatpush1.msra.mxu0 %v440
  %1366 = vmatprep.subr.mxu0 %v445
  %1367 = vmatpush1.msra.mxu0 %v444
  %1368 = vmatprep.subr.mxu0 0.0
  %1369 = vmatpush1.msra.mxu0 0.0
  %1370 = vmatprep.subr.mxu0 0.0
  %1371 = vmatpush1.msra.mxu0 0.0
  %1372 = vmatprep.subr.mxu0 0.0
  %1373 = vmatpush1.msra.mxu0 0.0
  %1374 = vmatprep.subr.mxu0 0.0
  %1375 = vmatpush1.msra.mxu0 0.0
  %1376 = vmatprep.subr.mxu0 0.0
  %1377 = vmatpush1.msra.mxu0 0.0
  %1378 = vmatprep.subr.mxu0 0.0
  %1379 = vmatpush1.msra.mxu0 0.0
  %1380 = vmatprep.subr.mxu0 0.0
  %1381 = vmatpush1.msra.mxu0 0.0
  %1382 = vmatprep.subr.mxu0 0.0
  %1383 = vmatpush1.msra.mxu0 0.0
  %1384 = vmatprep.subr.mxu0 0.0
  %1385 = vmatpush1.msra.mxu0 0.0
  %1386 = vmatprep.subr.mxu0 0.0
  %1387 = vmatpush1.msra.mxu0 0.0
  %1388 = vmatprep.subr.mxu0 0.0
  %1389 = vmatpush1.msra.mxu0 0.0
  %1390 = vmatprep.subr.mxu0 0.0
  %1391 = vmatpush1.msra.mxu0 0.0
  %1392 = vmatprep.subr.mxu0 0.0
  %1393 = vmatpush1.msra.mxu0 0.0
  %1394 = vmatprep.subr.mxu0 0.0
  %1395 = vmatpush1.msra.mxu0 0.0
  %1396 = vmatprep.subr.mxu0 0.0
  %1397 = vmatpush1.msra.mxu0 0.0
  %1398 = vmatprep.subr.mxu0 0.0
  %1399 = vmatpush1.msra.mxu0 0.0
  %1400 = vmatprep.mubr.f32.mxu0 0.0
  %1401 = vmatmul.mubr.f32.gmra.mrb[0].mxu0 %v1328
  %v1402 = vpop.f32.mrb[0].mxu0
  %v1403 = vadd.f32 0.0, %v1402
  %v1404 = vpop.f32.mrb[0].mxu0
  %v1405 = vadd.f32 0.0, %v1404
  %1406 = vdwg.mxu0
  %1407 = vmatprep.subr.mxu0 %v387
  %1408 = vmatpush1.msra.mxu0 %v386
  %1409 = vmatprep.subr.mxu0 %v391
  %1410 = vmatpush1.msra.mxu0 %v390
  %1411 = vmatprep.subr.mxu0 %v395
  %1412 = vmatpush1.msra.mxu0 %v394
  %1413 = vmatprep.subr.mxu0 %v399
  %1414 = vmatpush1.msra.mxu0 %v398
  %1415 = vmatprep.subr.mxu0 %v403
  %1416 = vmatpush1.msra.mxu0 %v402
  %1417 = vmatprep.subr.mxu0 %v407
  %1418 = vmatpush1.msra.mxu0 %v406
  %1419 = vmatprep.subr.mxu0 %v411
  %1420 = vmatpush1.msra.mxu0 %v410
  %1421 = vmatprep.subr.mxu0 %v415
  %1422 = vmatpush1.msra.mxu0 %v414
  %1423 = vmatprep.subr.mxu0 %v419
  %1424 = vmatpush1.msra.mxu0 %v418
  %1425 = vmatprep.subr.mxu0 %v423
  %1426 = vmatpush1.msra.mxu0 %v422
  %1427 = vmatprep.subr.mxu0 %v427
  %1428 = vmatpush1.msra.mxu0 %v426
  %1429 = vmatprep.subr.mxu0 %v431
  %1430 = vmatpush1.msra.mxu0 %v430
  %1431 = vmatprep.subr.mxu0 %v435
  %1432 = vmatpush1.msra.mxu0 %v434
  %1433 = vmatprep.subr.mxu0 %v439
  %1434 = vmatpush1.msra.mxu0 %v438
  %1435 = vmatprep.subr.mxu0 %v443
  %1436 = vmatpush1.msra.mxu0 %v442
  %1437 = vmatprep.subr.mxu0 %v447
  %1438 = vmatpush1.msra.mxu0 %v446
  %1439 = vmatprep.subr.mxu0 0.0
  %1440 = vmatpush1.msra.mxu0 0.0
  %1441 = vmatprep.subr.mxu0 0.0
  %1442 = vmatpush1.msra.mxu0 0.0
  %1443 = vmatprep.subr.mxu0 0.0
  %1444 = vmatpush1.msra.mxu0 0.0
  %1445 = vmatprep.subr.mxu0 0.0
  %1446 = vmatpush1.msra.mxu0 0.0
  %1447 = vmatprep.subr.mxu0 0.0
  %1448 = vmatpush1.msra.mxu0 0.0
  %1449 = vmatprep.subr.mxu0 0.0
  %1450 = vmatpush1.msra.mxu0 0.0
  %1451 = vmatprep.subr.mxu0 0.0
  %1452 = vmatpush1.msra.mxu0 0.0
  %1453 = vmatprep.subr.mxu0 0.0
  %1454 = vmatpush1.msra.mxu0 0.0
  %1455 = vmatprep.subr.mxu0 0.0
  %1456 = vmatpush1.msra.mxu0 0.0
  %1457 = vmatprep.subr.mxu0 0.0
  %1458 = vmatpush1.msra.mxu0 0.0
  %1459 = vmatprep.subr.mxu0 0.0
  %1460 = vmatpush1.msra.mxu0 0.0
  %1461 = vmatprep.subr.mxu0 0.0
  %1462 = vmatpush1.msra.mxu0 0.0
  %1463 = vmatprep.subr.mxu0 0.0
  %1464 = vmatpush1.msra.mxu0 0.0
  %1465 = vmatprep.subr.mxu0 0.0
  %1466 = vmatpush1.msra.mxu0 0.0
  %1467 = vmatprep.subr.mxu0 0.0
  %1468 = vmatpush1.msra.mxu0 0.0
  %1469 = vmatprep.subr.mxu0 0.0
  %1470 = vmatpush1.msra.mxu0 0.0
  %1471 = vmatprep.mubr.f32.mxu0 0.0
  %1472 = vmatmul.mubr.f32.gmra.mrb[0].mxu0 %v1328
  %v1473 = vpop.f32.mrb[0].mxu0
  %v1474 = vadd.f32 0.0, %v1473
  %v1475 = vpop.f32.mrb[0].mxu0
  %v1476 = vadd.f32 0.0, %v1475
  %1477 = vdwg.mxu0
  %v1478 = vadd.f32 %v1332, %v1403
  %v1479 = vadd.f32 %v1333, %v1405
  %v1480 = vadd.f32 %v1334, %v1474
  %v1481 = vadd.f32 %v1335, %v1476
  %v1482 = vxor.u32 %v1478, 2147483648
  %v1483 = vmul.f32 %v1482, 1.442695
  %v1484 = vpow.pop %v1483
  %v1485 = vadd.f32 %v1484, 1.0
  %v1486 = vrcp.pop %v1485
  %v1487 = vmul.f32 1.0, %v1486
  %v1488 = vxor.u32 %v1479, 2147483648
  %v1489 = vmul.f32 %v1488, 1.442695
  %v1490 = vpow.pop %v1489
  %v1491 = vadd.f32 %v1490, 1.0
  %v1492 = vrcp.pop %v1491
  %v1493 = vmul.f32 1.0, %v1492
  %v1494 = vtanh.pop %v1480
  %v1495 = vxor.u32 %v1481, 2147483648
  %v1496 = vmul.f32 %v1495, 1.442695
  %v1497 = vpow.pop %v1496
  %v1498 = vadd.f32 %v1497, 1.0
  %v1499 = vrcp.pop %v1498
  %v1500 = vmul.f32 1.0, %v1499
  %v1501 = vmul.f32 %v1493, %v1326
  %v1502 = vmul.f32 %v1487, %v1494
  %v1503 = vadd.f32 %v1501, %v1502
  %v1504 = vtanh.pop %v1503
  %v1505 = vmul.f32 %v1500, %v1504
  %s1506 = scalar_lea.vmem [#allocation2], 40
  %1507 = vst [vmem:[%s1506] sm:$0xff] %v1505
  %s1508 = scalar_lea.vmem [#allocation3], 192
  %v1509 = vld [vmem:[%s1508] sm:$0xff]
  %v1510 = vld [vmem:[%s1508 + $0x8] sm:$0xff]
  %v1511 = vld [vmem:[%s1508 + $0x10] sm:$0xff]
  %v1512 = vld [vmem:[%s1508 + $0x18] sm:$0xff]
  %1513 = vmatprep.subr.mxu0 %v385
  %1514 = vmatpush1.msra.mxu0 %v384
  %1515 = vmatprep.subr.mxu0 %v389
  %1516 = vmatpush1.msra.mxu0 %v388
  %1517 = vmatprep.subr.mxu0 %v393
  %1518 = vmatpush1.msra.mxu0 %v392
  %1519 = vmatprep.subr.mxu0 %v397
  %1520 = vmatpush1.msra.mxu0 %v396
  %1521 = vmatprep.subr.mxu0 %v401
  %1522 = vmatpush1.msra.mxu0 %v400
  %1523 = vmatprep.subr.mxu0 %v405
  %1524 = vmatpush1.msra.mxu0 %v404
  %1525 = vmatprep.subr.mxu0 %v409
  %1526 = vmatpush1.msra.mxu0 %v408
  %1527 = vmatprep.subr.mxu0 %v413
  %1528 = vmatpush1.msra.mxu0 %v412
  %1529 = vmatprep.subr.mxu0 %v417
  %1530 = vmatpush1.msra.mxu0 %v416
  %1531 = vmatprep.subr.mxu0 %v421
  %1532 = vmatpush1.msra.mxu0 %v420
  %1533 = vmatprep.subr.mxu0 %v425
  %1534 = vmatpush1.msra.mxu0 %v424
  %1535 = vmatprep.subr.mxu0 %v429
  %1536 = vmatpush1.msra.mxu0 %v428
  %1537 = vmatprep.subr.mxu0 %v433
  %1538 = vmatpush1.msra.mxu0 %v432
  %1539 = vmatprep.subr.mxu0 %v437
  %1540 = vmatpush1.msra.mxu0 %v436
  %1541 = vmatprep.subr.mxu0 %v441
  %1542 = vmatpush1.msra.mxu0 %v440
  %1543 = vmatprep.subr.mxu0 %v445
  %1544 = vmatpush1.msra.mxu0 %v444
  %1545 = vmatprep.subr.mxu0 0.0
  %1546 = vmatpush1.msra.mxu0 0.0
  %1547 = vmatprep.subr.mxu0 0.0
  %1548 = vmatpush1.msra.mxu0 0.0
  %1549 = vmatprep.subr.mxu0 0.0
  %1550 = vmatpush1.msra.mxu0 0.0
  %1551 = vmatprep.subr.mxu0 0.0
  %1552 = vmatpush1.msra.mxu0 0.0
  %1553 = vmatprep.subr.mxu0 0.0
  %1554 = vmatpush1.msra.mxu0 0.0
  %1555 = vmatprep.subr.mxu0 0.0
  %1556 = vmatpush1.msra.mxu0 0.0
  %1557 = vmatprep.subr.mxu0 0.0
  %1558 = vmatpush1.msra.mxu0 0.0
  %1559 = vmatprep.subr.mxu0 0.0
  %1560 = vmatpush1.msra.mxu0 0.0
  %1561 = vmatprep.subr.mxu0 0.0
  %1562 = vmatpush1.msra.mxu0 0.0
  %1563 = vmatprep.subr.mxu0 0.0
  %1564 = vmatpush1.msra.mxu0 0.0
  %1565 = vmatprep.subr.mxu0 0.0
  %1566 = vmatpush1.msra.mxu0 0.0
  %1567 = vmatprep.subr.mxu0 0.0
  %1568 = vmatpush1.msra.mxu0 0.0
  %1569 = vmatprep.subr.mxu0 0.0
  %1570 = vmatpush1.msra.mxu0 0.0
  %1571 = vmatprep.subr.mxu0 0.0
  %1572 = vmatpush1.msra.mxu0 0.0
  %1573 = vmatprep.subr.mxu0 0.0
  %1574 = vmatpush1.msra.mxu0 0.0
  %1575 = vmatprep.subr.mxu0 0.0
  %1576 = vmatpush1.msra.mxu0 0.0
  %1577 = vmatprep.mubr.f32.mxu0 0.0
  %1578 = vmatmul.mubr.f32.gmra.mrb[0].mxu0 %v1505
  %v1579 = vpop.f32.mrb[0].mxu0
  %v1580 = vadd.f32 0.0, %v1579
  %v1581 = vpop.f32.mrb[0].mxu0
  %v1582 = vadd.f32 0.0, %v1581
  %1583 = vdwg.mxu0
  %1584 = vmatprep.subr.mxu0 %v387
  %1585 = vmatpush1.msra.mxu0 %v386
  %1586 = vmatprep.subr.mxu0 %v391
  %1587 = vmatpush1.msra.mxu0 %v390
  %1588 = vmatprep.subr.mxu0 %v395
  %1589 = vmatpush1.msra.mxu0 %v394
  %1590 = vmatprep.subr.mxu0 %v399
  %1591 = vmatpush1.msra.mxu0 %v398
  %1592 = vmatprep.subr.mxu0 %v403
  %1593 = vmatpush1.msra.mxu0 %v402
  %1594 = vmatprep.subr.mxu0 %v407
  %1595 = vmatpush1.msra.mxu0 %v406
  %1596 = vmatprep.subr.mxu0 %v411
  %1597 = vmatpush1.msra.mxu0 %v410
  %1598 = vmatprep.subr.mxu0 %v415
  %1599 = vmatpush1.msra.mxu0 %v414
  %1600 = vmatprep.subr.mxu0 %v419
  %1601 = vmatpush1.msra.mxu0 %v418
  %1602 = vmatprep.subr.mxu0 %v423
  %1603 = vmatpush1.msra.mxu0 %v422
  %1604 = vmatprep.subr.mxu0 %v427
  %1605 = vmatpush1.msra.mxu0 %v426
  %1606 = vmatprep.subr.mxu0 %v431
  %1607 = vmatpush1.msra.mxu0 %v430
  %1608 = vmatprep.subr.mxu0 %v435
  %1609 = vmatpush1.msra.mxu0 %v434
  %1610 = vmatprep.subr.mxu0 %v439
  %1611 = vmatpush1.msra.mxu0 %v438
  %1612 = vmatprep.subr.mxu0 %v443
  %1613 = vmatpush1.msra.mxu0 %v442
  %1614 = vmatprep.subr.mxu0 %v447
  %1615 = vmatpush1.msra.mxu0 %v446
  %1616 = vmatprep.subr.mxu0 0.0
  %1617 = vmatpush1.msra.mxu0 0.0
  %1618 = vmatprep.subr.mxu0 0.0
  %1619 = vmatpush1.msra.mxu0 0.0
  %1620 = vmatprep.subr.mxu0 0.0
  %1621 = vmatpush1.msra.mxu0 0.0
  %1622 = vmatprep.subr.mxu0 0.0
  %1623 = vmatpush1.msra.mxu0 0.0
  %1624 = vmatprep.subr.mxu0 0.0
  %1625 = vmatpush1.msra.mxu0 0.0
  %1626 = vmatprep.subr.mxu0 0.0
  %1627 = vmatpush1.msra.mxu0 0.0
  %1628 = vmatprep.subr.mxu0 0.0
  %1629 = vmatpush1.msra.mxu0 0.0
  %1630 = vmatprep.subr.mxu0 0.0
  %1631 = vmatpush1.msra.mxu0 0.0
  %1632 = vmatprep.subr.mxu0 0.0
  %1633 = vmatpush1.msra.mxu0 0.0
  %1634 = vmatprep.subr.mxu0 0.0
  %1635 = vmatpush1.msra.mxu0 0.0
  %1636 = vmatprep.subr.mxu0 0.0
  %1637 = vmatpush1.msra.mxu0 0.0
  %1638 = vmatprep.subr.mxu0 0.0
  %1639 = vmatpush1.msra.mxu0 0.0
  %1640 = vmatprep.subr.mxu0 0.0
  %1641 = vmatpush1.msra.mxu0 0.0
  %1642 = vmatprep.subr.mxu0 0.0
  %1643 = vmatpush1.msra.mxu0 0.0
  %1644 = vmatprep.subr.mxu0 0.0
  %1645 = vmatpush1.msra.mxu0 0.0
  %1646 = vmatprep.subr.mxu0 0.0
  %1647 = vmatpush1.msra.mxu0 0.0
  %1648 = vmatprep.mubr.f32.mxu0 0.0
  %1649 = vmatmul.mubr.f32.gmra.mrb[0].mxu0 %v1505
  %v1650 = vpop.f32.mrb[0].mxu0
  %v1651 = vadd.f32 0.0, %v1650
  %v1652 = vpop.f32.mrb[0].mxu0
  %v1653 = vadd.f32 0.0, %v1652
  %1654 = vdwg.mxu0
  %v1655 = vadd.f32 %v1509, %v1580
  %v1656 = vadd.f32 %v1510, %v1582
  %v1657 = vadd.f32 %v1511, %v1651
  %v1658 = vadd.f32 %v1512, %v1653
  %v1659 = vxor.u32 %v1655, 2147483648
  %v1660 = vmul.f32 %v1659, 1.442695
  %v1661 = vpow.pop %v1660
  %v1662 = vadd.f32 %v1661, 1.0
  %v1663 = vrcp.pop %v1662
  %v1664 = vmul.f32 1.0, %v1663
  %v1665 = vxor.u32 %v1656, 2147483648
  %v1666 = vmul.f32 %v1665, 1.442695
  %v1667 = vpow.pop %v1666
  %v1668 = vadd.f32 %v1667, 1.0
  %v1669 = vrcp.pop %v1668
  %v1670 = vmul.f32 1.0, %v1669
  %v1671 = vtanh.pop %v1657
  %v1672 = vxor.u32 %v1658, 2147483648
  %v1673 = vmul.f32 %v1672, 1.442695
  %v1674 = vpow.pop %v1673
  %v1675 = vadd.f32 %v1674, 1.0
  %v1676 = vrcp.pop %v1675
  %v1677 = vmul.f32 1.0, %v1676
  %v1678 = vmul.f32 %v1670, %v1503
  %v1679 = vmul.f32 %v1664, %v1671
  %v1680 = vadd.f32 %v1678, %v1679
  %v1681 = vtanh.pop %v1680
  %v1682 = vmul.f32 %v1677, %v1681
  %s1683 = scalar_lea.vmem [#allocation2], 48
  %1684 = vst [vmem:[%s1683] sm:$0xff] %v1682
  %s1685 = scalar_lea.vmem [#allocation3], 224
  %v1686 = vld [vmem:[%s1685] sm:$0xff]
  %v1687 = vld [vmem:[%s1685 + $0x8] sm:$0xff]
  %v1688 = vld [vmem:[%s1685 + $0x10] sm:$0xff]
  %v1689 = vld [vmem:[%s1685 + $0x18] sm:$0xff]
  %1690 = vmatprep.subr.mxu0 %v385
  %1691 = vmatpush1.msra.mxu0 %v384
  %1692 = vmatprep.subr.mxu0 %v389
  %1693 = vmatpush1.msra.mxu0 %v388
  %1694 = vmatprep.subr.mxu0 %v393
  %1695 = vmatpush1.msra.mxu0 %v392
  %1696 = vmatprep.subr.mxu0 %v397
  %1697 = vmatpush1.msra.mxu0 %v396
  %1698 = vmatprep.subr.mxu0 %v401
  %1699 = vmatpush1.msra.mxu0 %v400
  %1700 = vmatprep.subr.mxu0 %v405
  %1701 = vmatpush1.msra.mxu0 %v404
  %1702 = vmatprep.subr.mxu0 %v409
  %1703 = vmatpush1.msra.mxu0 %v408
  %1704 = vmatprep.subr.mxu0 %v413
  %1705 = vmatpush1.msra.mxu0 %v412
  %1706 = vmatprep.subr.mxu0 %v417
  %1707 = vmatpush1.msra.mxu0 %v416
  %1708 = vmatprep.subr.mxu0 %v421
  %1709 = vmatpush1.msra.mxu0 %v420
  %1710 = vmatprep.subr.mxu0 %v425
  %1711 = vmatpush1.msra.mxu0 %v424
  %1712 = vmatprep.subr.mxu0 %v429
  %1713 = vmatpush1.msra.mxu0 %v428
  %1714 = vmatprep.subr.mxu0 %v433
  %1715 = vmatpush1.msra.mxu0 %v432
  %1716 = vmatprep.subr.mxu0 %v437
  %1717 = vmatpush1.msra.mxu0 %v436
  %1718 = vmatprep.subr.mxu0 %v441
  %1719 = vmatpush1.msra.mxu0 %v440
  %1720 = vmatprep.subr.mxu0 %v445
  %1721 = vmatpush1.msra.mxu0 %v444
  %1722 = vmatprep.subr.mxu0 0.0
  %1723 = vmatpush1.msra.mxu0 0.0
  %1724 = vmatprep.subr.mxu0 0.0
  %1725 = vmatpush1.msra.mxu0 0.0
  %1726 = vmatprep.subr.mxu0 0.0
  %1727 = vmatpush1.msra.mxu0 0.0
  %1728 = vmatprep.subr.mxu0 0.0
  %1729 = vmatpush1.msra.mxu0 0.0
  %1730 = vmatprep.subr.mxu0 0.0
  %1731 = vmatpush1.msra.mxu0 0.0
  %1732 = vmatprep.subr.mxu0 0.0
  %1733 = vmatpush1.msra.mxu0 0.0
  %1734 = vmatprep.subr.mxu0 0.0
  %1735 = vmatpush1.msra.mxu0 0.0
  %1736 = vmatprep.subr.mxu0 0.0
  %1737 = vmatpush1.msra.mxu0 0.0
  %1738 = vmatprep.subr.mxu0 0.0
  %1739 = vmatpush1.msra.mxu0 0.0
  %1740 = vmatprep.subr.mxu0 0.0
  %1741 = vmatpush1.msra.mxu0 0.0
  %1742 = vmatprep.subr.mxu0 0.0
  %1743 = vmatpush1.msra.mxu0 0.0
  %1744 = vmatprep.subr.mxu0 0.0
  %1745 = vmatpush1.msra.mxu0 0.0
  %1746 = vmatprep.subr.mxu0 0.0
  %1747 = vmatpush1.msra.mxu0 0.0
  %1748 = vmatprep.subr.mxu0 0.0
  %1749 = vmatpush1.msra.mxu0 0.0
  %1750 = vmatprep.subr.mxu0 0.0
  %1751 = vmatpush1.msra.mxu0 0.0
  %1752 = vmatprep.subr.mxu0 0.0
  %1753 = vmatpush1.msra.mxu0 0.0
  %1754 = vmatprep.mubr.f32.mxu0 0.0
  %1755 = vmatmul.mubr.f32.gmra.mrb[0].mxu0 %v1682
  %v1756 = vpop.f32.mrb[0].mxu0
  %v1757 = vadd.f32 0.0, %v1756
  %v1758 = vpop.f32.mrb[0].mxu0
  %v1759 = vadd.f32 0.0, %v1758
  %1760 = vdwg.mxu0
  %1761 = vmatprep.subr.mxu0 %v387
  %1762 = vmatpush1.msra.mxu0 %v386
  %1763 = vmatprep.subr.mxu0 %v391
  %1764 = vmatpush1.msra.mxu0 %v390
  %1765 = vmatprep.subr.mxu0 %v395
  %1766 = vmatpush1.msra.mxu0 %v394
  %1767 = vmatprep.subr.mxu0 %v399
  %1768 = vmatpush1.msra.mxu0 %v398
  %1769 = vmatprep.subr.mxu0 %v403
  %1770 = vmatpush1.msra.mxu0 %v402
  %1771 = vmatprep.subr.mxu0 %v407
  %1772 = vmatpush1.msra.mxu0 %v406
  %1773 = vmatprep.subr.mxu0 %v411
  %1774 = vmatpush1.msra.mxu0 %v410
  %1775 = vmatprep.subr.mxu0 %v415
  %1776 = vmatpush1.msra.mxu0 %v414
  %1777 = vmatprep.subr.mxu0 %v419
  %1778 = vmatpush1.msra.mxu0 %v418
  %1779 = vmatprep.subr.mxu0 %v423
  %1780 = vmatpush1.msra.mxu0 %v422
  %1781 = vmatprep.subr.mxu0 %v427
  %1782 = vmatpush1.msra.mxu0 %v426
  %1783 = vmatprep.subr.mxu0 %v431
  %1784 = vmatpush1.msra.mxu0 %v430
  %1785 = vmatprep.subr.mxu0 %v435
  %1786 = vmatpush1.msra.mxu0 %v434
  %1787 = vmatprep.subr.mxu0 %v439
  %1788 = vmatpush1.msra.mxu0 %v438
  %1789 = vmatprep.subr.mxu0 %v443
  %1790 = vmatpush1.msra.mxu0 %v442
  %1791 = vmatprep.subr.mxu0 %v447
  %1792 = vmatpush1.msra.mxu0 %v446
  %1793 = vmatprep.subr.mxu0 0.0
  %1794 = vmatpush1.msra.mxu0 0.0
  %1795 = vmatprep.subr.mxu0 0.0
  %1796 = vmatpush1.msra.mxu0 0.0
  %1797 = vmatprep.subr.mxu0 0.0
  %1798 = vmatpush1.msra.mxu0 0.0
  %1799 = vmatprep.subr.mxu0 0.0
  %1800 = vmatpush1.msra.mxu0 0.0
  %1801 = vmatprep.subr.mxu0 0.0
  %1802 = vmatpush1.msra.mxu0 0.0
  %1803 = vmatprep.subr.mxu0 0.0
  %1804 = vmatpush1.msra.mxu0 0.0
  %1805 = vmatprep.subr.mxu0 0.0
  %1806 = vmatpush1.msra.mxu0 0.0
  %1807 = vmatprep.subr.mxu0 0.0
  %1808 = vmatpush1.msra.mxu0 0.0
  %1809 = vmatprep.subr.mxu0 0.0
  %1810 = vmatpush1.msra.mxu0 0.0
  %1811 = vmatprep.subr.mxu0 0.0
  %1812 = vmatpush1.msra.mxu0 0.0
  %1813 = vmatprep.subr.mxu0 0.0
  %1814 = vmatpush1.msra.mxu0 0.0
  %1815 = vmatprep.subr.mxu0 0.0
  %1816 = vmatpush1.msra.mxu0 0.0
  %1817 = vmatprep.subr.mxu0 0.0
  %1818 = vmatpush1.msra.mxu0 0.0
  %1819 = vmatprep.subr.mxu0 0.0
  %1820 = vmatpush1.msra.mxu0 0.0
  %1821 = vmatprep.subr.mxu0 0.0
  %1822 = vmatpush1.msra.mxu0 0.0
  %1823 = vmatprep.subr.mxu0 0.0
  %1824 = vmatpush1.msra.mxu0 0.0
  %1825 = vmatprep.mubr.f32.mxu0 0.0
  %1826 = vmatmul.mubr.f32.gmra.mrb[0].mxu0 %v1682
  %v1827 = vpop.f32.mrb[0].mxu0
  %v1828 = vadd.f32 0.0, %v1827
  %v1829 = vpop.f32.mrb[0].mxu0
  %v1830 = vadd.f32 0.0, %v1829
  %1831 = vdwg.mxu0
  %v1832 = vadd.f32 %v1686, %v1757
  %v1833 = vadd.f32 %v1687, %v1759
  %v1834 = vadd.f32 %v1688, %v1828
  %v1835 = vadd.f32 %v1689, %v1830
  %v1836 = vxor.u32 %v1832, 2147483648
  %v1837 = vmul.f32 %v1836, 1.442695
  %v1838 = vpow.pop %v1837
  %v1839 = vadd.f32 %v1838, 1.0
  %v1840 = vrcp.pop %v1839
  %v1841 = vmul.f32 1.0, %v1840
  %v1842 = vxor.u32 %v1833, 2147483648
  %v1843 = vmul.f32 %v1842, 1.442695
  %v1844 = vpow.pop %v1843
  %v1845 = vadd.f32 %v1844, 1.0
  %v1846 = vrcp.pop %v1845
  %v1847 = vmul.f32 1.0, %v1846
  %v1848 = vtanh.pop %v1834
  %v1849 = vxor.u32 %v1835, 2147483648
  %v1850 = vmul.f32 %v1849, 1.442695
  %v1851 = vpow.pop %v1850
  %v1852 = vadd.f32 %v1851, 1.0
  %v1853 = vrcp.pop %v1852
  %v1854 = vmul.f32 1.0, %v1853
  %v1855 = vmul.f32 %v1847, %v1680
  %v1856 = vmul.f32 %v1841, %v1848
  %v1857 = vadd.f32 %v1855, %v1856
  %v1858 = vtanh.pop %v1857
  %v1859 = vmul.f32 %v1854, %v1858
  %s1860 = scalar_lea.vmem [#allocation2], 56
  %1861 = vst [vmem:[%s1860] sm:$0xff] %v1859
  %v1862 = vld [vmem:[#allocation2] sm:$0xff]
  %v1863 = vld [vmem:[#allocation2 + $0x8] sm:$0xff]
  %v1864 = vld [vmem:[#allocation2 + $0x10] sm:$0xff]
  %v1865 = vld [vmem:[#allocation2 + $0x18] sm:$0xff]
  %v1866 = vld [vmem:[#allocation2 + $0x20] sm:$0xff]
  %v1867 = vld [vmem:[#allocation2 + $0x28] sm:$0xff]
  %v1868 = vld [vmem:[#allocation2 + $0x30] sm:$0xff]
  %v1869 = vld [vmem:[#allocation2 + $0x38] sm:$0xff]
  %v1870 = vld [vmem:[%s4] sm:$0xff]
  %v1871 = vld [vmem:[%s4 + $0x8] sm:$0xff]
  %v1872 = vld [vmem:[%s4 + $0x10] sm:$0xff]
  %v1873 = vld [vmem:[%s4 + $0x18] sm:$0xff]
  %v1874 = vld [vmem:[%s4 + $0x20] sm:$0xff]
  %v1875 = vld [vmem:[%s4 + $0x28] sm:$0xff]
  %v1876 = vld [vmem:[%s4 + $0x30] sm:$0xff]
  %v1877 = vld [vmem:[%s4 + $0x38] sm:$0xff]
  %v1878 = vld [vmem:[%s4 + $0x40] sm:$0xff]
  %v1879 = vld [vmem:[%s4 + $0x48] sm:$0xff]
  %v1880 = vld [vmem:[%s4 + $0x50] sm:$0xff]
  %v1881 = vld [vmem:[%s4 + $0x58] sm:$0xff]
  %v1882 = vld [vmem:[%s4 + $0x60] sm:$0xff]
  %v1883 = vld [vmem:[%s4 + $0x68] sm:$0xff]
  %v1884 = vld [vmem:[%s4 + $0x70] sm:$0xff]
  %v1885 = vld [vmem:[%s4 + $0x78] sm:$0xff]
  %v1886 = vld [vmem:[%s4 + $0x80] sm:$0xff]
  %v1887 = vld [vmem:[%s4 + $0x88] sm:$0xff]
  %v1888 = vld [vmem:[%s4 + $0x90] sm:$0xff]
  %v1889 = vld [vmem:[%s4 + $0x98] sm:$0xff]
  %v1890 = vld [vmem:[%s4 + $0xa0] sm:$0xff]
  %v1891 = vld [vmem:[%s4 + $0xa8] sm:$0xff]
  %v1892 = vld [vmem:[%s4 + $0xb0] sm:$0xff]
  %v1893 = vld [vmem:[%s4 + $0xb8] sm:$0xff]
  %v1894 = vld [vmem:[%s4 + $0xc0] sm:$0xff]
  %v1895 = vld [vmem:[%s4 + $0xc8] sm:$0xff]
  %v1896 = vld [vmem:[%s4 + $0xd0] sm:$0xff]
  %v1897 = vld [vmem:[%s4 + $0xd8] sm:$0xff]
  %v1898 = vld [vmem:[%s4 + $0xe0] sm:$0xff]
  %v1899 = vld [vmem:[%s4 + $0xe8] sm:$0xff]
  %v1900 = vld [vmem:[%s4 + $0xf0] sm:$0xff]
  %v1901 = vld [vmem:[%s4 + $0xf8] sm:$0xff]
  %v1902 = vld [vmem:[%s4 + $0x100] sm:$0xff]
  %v1903 = vld [vmem:[%s4 + $0x108] sm:$0xff]
  %v1904 = vld [vmem:[%s4 + $0x110] sm:$0xff]
  %v1905 = vld [vmem:[%s4 + $0x118] sm:$0xff]
  %v1906 = vld [vmem:[%s4 + $0x120] sm:$0xff]
  %v1907 = vld [vmem:[%s4 + $0x128] sm:$0xff]
  %v1908 = vld [vmem:[%s4 + $0x130] sm:$0xff]
  %v1909 = vld [vmem:[%s4 + $0x138] sm:$0xff]
  %v1910 = vld [vmem:[%s4 + $0x140] sm:$0xff]
  %v1911 = vld [vmem:[%s4 + $0x148] sm:$0xff]
  %v1912 = vld [vmem:[%s4 + $0x150] sm:$0xff]
  %v1913 = vld [vmem:[%s4 + $0x158] sm:$0xff]
  %v1914 = vld [vmem:[%s4 + $0x160] sm:$0xff]
  %v1915 = vld [vmem:[%s4 + $0x168] sm:$0xff]
  %v1916 = vld [vmem:[%s4 + $0x170] sm:$0xff]
  %v1917 = vld [vmem:[%s4 + $0x178] sm:$0xff]
  %v1918 = vld [vmem:[%s4 + $0x180] sm:$0xff]
  %v1919 = vld [vmem:[%s4 + $0x188] sm:$0xff]
  %v1920 = vld [vmem:[%s4 + $0x190] sm:$0xff]
  %v1921 = vld [vmem:[%s4 + $0x198] sm:$0xff]
  %v1922 = vld [vmem:[%s4 + $0x1a0] sm:$0xff]
  %v1923 = vld [vmem:[%s4 + $0x1a8] sm:$0xff]
  %v1924 = vld [vmem:[%s4 + $0x1b0] sm:$0xff]
  %v1925 = vld [vmem:[%s4 + $0x1b8] sm:$0xff]
  %v1926 = vld [vmem:[%s4 + $0x1c0] sm:$0xff]
  %v1927 = vld [vmem:[%s4 + $0x1c8] sm:$0xff]
  %v1928 = vld [vmem:[%s4 + $0x1d0] sm:$0xff]
  %v1929 = vld [vmem:[%s4 + $0x1d8] sm:$0xff]
  %v1930 = vld [vmem:[%s4 + $0x1e0] sm:$0xff]
  %v1931 = vld [vmem:[%s4 + $0x1e8] sm:$0xff]
  %v1932 = vld [vmem:[%s4 + $0x1f0] sm:$0xff]
  %v1933 = vld [vmem:[%s4 + $0x1f8] sm:$0xff]
  %v1934 = vld [vmem:[%s6] sm:$0xf]
  %v1936 = vlaneseq
  %v1937 = vshrl.u32 %v1936, 7
  %v1938 = vsub.s32 0, %v1937
  %v1939 = vrot.slane %v1934, %v1938
  %v1940 = vlaneseq
  %v1941 = vshrl.u32 %v1940, 7
  %v1942 = vsub.s32 1, %v1941
  %v1943 = vrot.slane %v1934, %v1942
  %v1944 = vlaneseq
  %v1945 = vshrl.u32 %v1944, 7
  %v1946 = vsub.s32 2, %v1945
  %v1947 = vrot.slane %v1934, %v1946
  %v1948 = vlaneseq
  %v1949 = vshrl.u32 %v1948, 7
  %v1950 = vsub.s32 3, %v1949
  %v1951 = vrot.slane %v1934, %v1950
  %1956 = vmatprep.subr.mxu0 %v1871
  %1957 = vmatpush1.msra.mxu0 %v1870
  %1958 = vmatprep.subr.mxu0 %v1875
  %1959 = vmatpush1.msra.mxu0 %v1874
  %1960 = vmatprep.subr.mxu0 %v1879
  %1961 = vmatpush1.msra.mxu0 %v1878
  %1962 = vmatprep.subr.mxu0 %v1883
  %1963 = vmatpush1.msra.mxu0 %v1882
  %1964 = vmatprep.subr.mxu0 %v1887
  %1965 = vmatpush1.msra.mxu0 %v1886
  %1966 = vmatprep.subr.mxu0 %v1891
  %1967 = vmatpush1.msra.mxu0 %v1890
  %1968 = vmatprep.subr.mxu0 %v1895
  %1969 = vmatpush1.msra.mxu0 %v1894
  %1970 = vmatprep.subr.mxu0 %v1899
  %1971 = vmatpush1.msra.mxu0 %v1898
  %1972 = vmatprep.subr.mxu0 %v1903
  %1973 = vmatpush1.msra.mxu0 %v1902
  %1974 = vmatprep.subr.mxu0 %v1907
  %1975 = vmatpush1.msra.mxu0 %v1906
  %1976 = vmatprep.subr.mxu0 %v1911
  %1977 = vmatpush1.msra.mxu0 %v1910
  %1978 = vmatprep.subr.mxu0 %v1915
  %1979 = vmatpush1.msra.mxu0 %v1914
  %1980 = vmatprep.subr.mxu0 %v1919
  %1981 = vmatpush1.msra.mxu0 %v1918
  %1982 = vmatprep.subr.mxu0 %v1923
  %1983 = vmatpush1.msra.mxu0 %v1922
  %1984 = vmatprep.subr.mxu0 %v1927
  %1985 = vmatpush1.msra.mxu0 %v1926
  %1986 = vmatprep.subr.mxu0 %v1931
  %1987 = vmatpush1.msra.mxu0 %v1930
  %1988 = vmatprep.subr.mxu0 0.0
  %1989 = vmatpush1.msra.mxu0 0.0
  %1990 = vmatprep.subr.mxu0 0.0
  %1991 = vmatpush1.msra.mxu0 0.0
  %1992 = vmatprep.subr.mxu0 0.0
  %1993 = vmatpush1.msra.mxu0 0.0
  %1994 = vmatprep.subr.mxu0 0.0
  %1995 = vmatpush1.msra.mxu0 0.0
  %1996 = vmatprep.subr.mxu0 0.0
  %1997 = vmatpush1.msra.mxu0 0.0
  %1998 = vmatprep.subr.mxu0 0.0
  %1999 = vmatpush1.msra.mxu0 0.0
  %2000 = vmatprep.subr.mxu0 0.0
  %2001 = vmatpush1.msra.mxu0 0.0
  %2002 = vmatprep.subr.mxu0 0.0
  %2003 = vmatpush1.msra.mxu0 0.0
  %2004 = vmatprep.subr.mxu0 0.0
  %2005 = vmatpush1.msra.mxu0 0.0
  %2006 = vmatprep.subr.mxu0 0.0
  %2007 = vmatpush1.msra.mxu0 0.0
  %2008 = vmatprep.subr.mxu0 0.0
  %2009 = vmatpush1.msra.mxu0 0.0
  %2010 = vmatprep.subr.mxu0 0.0
  %2011 = vmatpush1.msra.mxu0 0.0
  %2012 = vmatprep.subr.mxu0 0.0
  %2013 = vmatpush1.msra.mxu0 0.0
  %2014 = vmatprep.subr.mxu0 0.0
  %2015 = vmatpush1.msra.mxu0 0.0
  %2016 = vmatprep.subr.mxu0 0.0
  %2017 = vmatpush1.msra.mxu0 0.0
  %2018 = vmatprep.subr.mxu0 0.0
  %2019 = vmatpush1.msra.mxu0 0.0
  %2020 = vmatprep.mubr.f32.mxu0 0.0
  %2021 = vmatmul.mubr.f32.gmra.mrb[0].mxu0 %v1862
  %v2022 = vpop.f32.mrb[0].mxu0
  %v2023 = vadd.f32 %v1939, %v2022
  %v2024 = vpop.f32.mrb[0].mxu0
  %v2025 = vadd.f32 %v1943, %v2024
  %2026 = vmatprep.mubr.f32.mxu0 0.0
  %2027 = vmatmul.mubr.f32.gmra.mrb[0].mxu0 %v1863
  %v2028 = vpop.f32.mrb[0].mxu0
  %v2029 = vadd.f32 %v1939, %v2028
  %v2030 = vpop.f32.mrb[0].mxu0
  %v2031 = vadd.f32 %v1943, %v2030
  %2032 = vmatprep.mubr.f32.mxu0 0.0
  %2033 = vmatmul.mubr.f32.gmra.mrb[0].mxu0 %v1864
  %v2034 = vpop.f32.mrb[0].mxu0
  %v2035 = vadd.f32 %v1939, %v2034
  %v2036 = vpop.f32.mrb[0].mxu0
  %v2037 = vadd.f32 %v1943, %v2036
  %2038 = vmatprep.mubr.f32.mxu0 0.0
  %2039 = vmatmul.mubr.f32.gmra.mrb[0].mxu0 %v1865
  %v2040 = vpop.f32.mrb[0].mxu0
  %v2041 = vadd.f32 %v1939, %v2040
  %v2042 = vpop.f32.mrb[0].mxu0
  %v2043 = vadd.f32 %v1943, %v2042
  %2044 = vmatprep.mubr.f32.mxu0 0.0
  %2045 = vmatmul.mubr.f32.gmra.mrb[0].mxu0 %v1866
  %v2046 = vpop.f32.mrb[0].mxu0
  %v2047 = vadd.f32 %v1939, %v2046
  %v2048 = vpop.f32.mrb[0].mxu0
  %v2049 = vadd.f32 %v1943, %v2048
  %2050 = vmatprep.mubr.f32.mxu0 0.0
  %2051 = vmatmul.mubr.f32.gmra.mrb[0].mxu0 %v1867
  %v2052 = vpop.f32.mrb[0].mxu0
  %v2053 = vadd.f32 %v1939, %v2052
  %v2054 = vpop.f32.mrb[0].mxu0
  %v2055 = vadd.f32 %v1943, %v2054
  %2056 = vmatprep.mubr.f32.mxu0 0.0
  %2057 = vmatmul.mubr.f32.gmra.mrb[0].mxu0 %v1868
  %v2058 = vpop.f32.mrb[0].mxu0
  %v2059 = vadd.f32 %v1939, %v2058
  %v2060 = vpop.f32.mrb[0].mxu0
  %v2061 = vadd.f32 %v1943, %v2060
  %2062 = vmatprep.mubr.f32.mxu0 0.0
  %2063 = vmatmul.mubr.f32.gmra.mrb[0].mxu0 %v1869
  %v2064 = vpop.f32.mrb[0].mxu0
  %v2065 = vadd.f32 %v1939, %v2064
  %v2066 = vpop.f32.mrb[0].mxu0
  %v2067 = vadd.f32 %v1943, %v2066
  %2068 = vdwg.mxu0
  %2069 = vmatprep.subr.mxu0 %v1873
  %2070 = vmatpush1.msra.mxu0 %v1872
  %2071 = vmatprep.subr.mxu0 %v1877
  %2072 = vmatpush1.msra.mxu0 %v1876
  %2073 = vmatprep.subr.mxu0 %v1881
  %2074 = vmatpush1.msra.mxu0 %v1880
  %2075 = vmatprep.subr.mxu0 %v1885
  %2076 = vmatpush1.msra.mxu0 %v1884
  %2077 = vmatprep.subr.mxu0 %v1889
  %2078 = vmatpush1.msra.mxu0 %v1888
  %2079 = vmatprep.subr.mxu0 %v1893
  %2080 = vmatpush1.msra.mxu0 %v1892
  %2081 = vmatprep.subr.mxu0 %v1897
  %2082 = vmatpush1.msra.mxu0 %v1896
  %2083 = vmatprep.subr.mxu0 %v1901
  %2084 = vmatpush1.msra.mxu0 %v1900
  %2085 = vmatprep.subr.mxu0 %v1905
  %2086 = vmatpush1.msra.mxu0 %v1904
  %2087 = vmatprep.subr.mxu0 %v1909
  %2088 = vmatpush1.msra.mxu0 %v1908
  %2089 = vmatprep.subr.mxu0 %v1913
  %2090 = vmatpush1.msra.mxu0 %v1912
  %2091 = vmatprep.subr.mxu0 %v1917
  %2092 = vmatpush1.msra.mxu0 %v1916
  %2093 = vmatprep.subr.mxu0 %v1921
  %2094 = vmatpush1.msra.mxu0 %v1920
  %2095 = vmatprep.subr.mxu0 %v1925
  %2096 = vmatpush1.msra.mxu0 %v1924
  %2097 = vmatprep.subr.mxu0 %v1929
  %2098 = vmatpush1.msra.mxu0 %v1928
  %2099 = vmatprep.subr.mxu0 %v1933
  %2100 = vmatpush1.msra.mxu0 %v1932
  %2101 = vmatprep.subr.mxu0 0.0
  %2102 = vmatpush1.msra.mxu0 0.0
  %2103 = vmatprep.subr.mxu0 0.0
  %2104 = vmatpush1.msra.mxu0 0.0
  %2105 = vmatprep.subr.mxu0 0.0
  %2106 = vmatpush1.msra.mxu0 0.0
  %2107 = vmatprep.subr.mxu0 0.0
  %2108 = vmatpush1.msra.mxu0 0.0
  %2109 = vmatprep.subr.mxu0 0.0
  %2110 = vmatpush1.msra.mxu0 0.0
  %2111 = vmatprep.subr.mxu0 0.0
  %2112 = vmatpush1.msra.mxu0 0.0
  %2113 = vmatprep.subr.mxu0 0.0
  %2114 = vmatpush1.msra.mxu0 0.0
  %2115 = vmatprep.subr.mxu0 0.0
  %2116 = vmatpush1.msra.mxu0 0.0
  %2117 = vmatprep.subr.mxu0 0.0
  %2118 = vmatpush1.msra.mxu0 0.0
  %2119 = vmatprep.subr.mxu0 0.0
  %2120 = vmatpush1.msra.mxu0 0.0
  %2121 = vmatprep.subr.mxu0 0.0
  %2122 = vmatpush1.msra.mxu0 0.0
  %2123 = vmatprep.subr.mxu0 0.0
  %2124 = vmatpush1.msra.mxu0 0.0
  %2125 = vmatprep.subr.mxu0 0.0
  %2126 = vmatpush1.msra.mxu0 0.0
  %2127 = vmatprep.subr.mxu0 0.0
  %2128 = vmatpush1.msra.mxu0 0.0
  %2129 = vmatprep.subr.mxu0 0.0
  %2130 = vmatpush1.msra.mxu0 0.0
  %2131 = vmatprep.subr.mxu0 0.0
  %2132 = vmatpush1.msra.mxu0 0.0
  %2133 = vmatprep.mubr.f32.mxu0 0.0
  %2134 = vmatmul.mubr.f32.gmra.mrb[0].mxu0 %v1862
  %v2135 = vpop.f32.mrb[0].mxu0
  %v2136 = vadd.f32 %v1947, %v2135
  %v2137 = vpop.f32.mrb[0].mxu0
  %v2138 = vadd.f32 %v1951, %v2137
  %2139 = vmatprep.mubr.f32.mxu0 0.0
  %2140 = vmatmul.mubr.f32.gmra.mrb[0].mxu0 %v1863
  %v2141 = vpop.f32.mrb[0].mxu0
  %v2142 = vadd.f32 %v1947, %v2141
  %v2143 = vpop.f32.mrb[0].mxu0
  %v2144 = vadd.f32 %v1951, %v2143
  %2145 = vmatprep.mubr.f32.mxu0 0.0
  %2146 = vmatmul.mubr.f32.gmra.mrb[0].mxu0 %v1864
  %v2147 = vpop.f32.mrb[0].mxu0
  %v2148 = vadd.f32 %v1947, %v2147
  %v2149 = vpop.f32.mrb[0].mxu0
  %v2150 = vadd.f32 %v1951, %v2149
  %2151 = vmatprep.mubr.f32.mxu0 0.0
  %2152 = vmatmul.mubr.f32.gmra.mrb[0].mxu0 %v1865
  %v2153 = vpop.f32.mrb[0].mxu0
  %v2154 = vadd.f32 %v1947, %v2153
  %v2155 = vpop.f32.mrb[0].mxu0
  %v2156 = vadd.f32 %v1951, %v2155
  %2157 = vmatprep.mubr.f32.mxu0 0.0
  %2158 = vmatmul.mubr.f32.gmra.mrb[0].mxu0 %v1866
  %v2159 = vpop.f32.mrb[0].mxu0
  %v2160 = vadd.f32 %v1947, %v2159
  %v2161 = vpop.f32.mrb[0].mxu0
  %v2162 = vadd.f32 %v1951, %v2161
  %2163 = vmatprep.mubr.f32.mxu0 0.0
  %2164 = vmatmul.mubr.f32.gmra.mrb[0].mxu0 %v1867
  %v2165 = vpop.f32.mrb[0].mxu0
  %v2166 = vadd.f32 %v1947, %v2165
  %v2167 = vpop.f32.mrb[0].mxu0
  %v2168 = vadd.f32 %v1951, %v2167
  %2169 = vmatprep.mubr.f32.mxu0 0.0
  %2170 = vmatmul.mubr.f32.gmra.mrb[0].mxu0 %v1868
  %v2171 = vpop.f32.mrb[0].mxu0
  %v2172 = vadd.f32 %v1947, %v2171
  %v2173 = vpop.f32.mrb[0].mxu0
  %v2174 = vadd.f32 %v1951, %v2173
  %2175 = vmatprep.mubr.f32.mxu0 0.0
  %2176 = vmatmul.mubr.f32.gmra.mrb[0].mxu0 %v1869
  %v2177 = vpop.f32.mrb[0].mxu0
  %v2178 = vadd.f32 %v1947, %v2177
  %v2179 = vpop.f32.mrb[0].mxu0
  %v2180 = vadd.f32 %v1951, %v2179
  %2181 = vdwg.mxu0
  %2182 = vst [vmem:[#allocation3] sm:$0xff] %v2023
  %2183 = vst [vmem:[#allocation3 + $0x8] sm:$0xff] %v2025
  %2184 = vst [vmem:[#allocation3 + $0x10] sm:$0xff] %v2136
  %2185 = vst [vmem:[#allocation3 + $0x18] sm:$0xff] %v2138
  %2186 = vst [vmem:[#allocation3 + $0x20] sm:$0xff] %v2029
  %2187 = vst [vmem:[#allocation3 + $0x28] sm:$0xff] %v2031
  %2188 = vst [vmem:[#allocation3 + $0x30] sm:$0xff] %v2142
  %2189 = vst [vmem:[#allocation3 + $0x38] sm:$0xff] %v2144
  %2190 = vst [vmem:[#allocation3 + $0x40] sm:$0xff] %v2035
  %2191 = vst [vmem:[#allocation3 + $0x48] sm:$0xff] %v2037
  %2192 = vst [vmem:[#allocation3 + $0x50] sm:$0xff] %v2148
  %2193 = vst [vmem:[#allocation3 + $0x58] sm:$0xff] %v2150
  %2194 = vst [vmem:[#allocation3 + $0x60] sm:$0xff] %v2041
  %2195 = vst [vmem:[#allocation3 + $0x68] sm:$0xff] %v2043
  %2196 = vst [vmem:[#allocation3 + $0x70] sm:$0xff] %v2154
  %2197 = vst [vmem:[#allocation3 + $0x78] sm:$0xff] %v2156
  %2198 = vst [vmem:[#allocation3 + $0x80] sm:$0xff] %v2047
  %2199 = vst [vmem:[#allocation3 + $0x88] sm:$0xff] %v2049
  %2200 = vst [vmem:[#allocation3 + $0x90] sm:$0xff] %v2160
  %2201 = vst [vmem:[#allocation3 + $0x98] sm:$0xff] %v2162
  %2202 = vst [vmem:[#allocation3 + $0xa0] sm:$0xff] %v2053
  %2203 = vst [vmem:[#allocation3 + $0xa8] sm:$0xff] %v2055
  %2204 = vst [vmem:[#allocation3 + $0xb0] sm:$0xff] %v2166
  %2205 = vst [vmem:[#allocation3 + $0xb8] sm:$0xff] %v2168
  %2206 = vst [vmem:[#allocation3 + $0xc0] sm:$0xff] %v2059
  %2207 = vst [vmem:[#allocation3 + $0xc8] sm:$0xff] %v2061
  %2208 = vst [vmem:[#allocation3 + $0xd0] sm:$0xff] %v2172
  %2209 = vst [vmem:[#allocation3 + $0xd8] sm:$0xff] %v2174
  %2210 = vst [vmem:[#allocation3 + $0xe0] sm:$0xff] %v2065
  %2211 = vst [vmem:[#allocation3 + $0xe8] sm:$0xff] %v2067
  %2212 = vst [vmem:[#allocation3 + $0xf0] sm:$0xff] %v2178
  %2213 = vst [vmem:[#allocation3 + $0xf8] sm:$0xff] %v2180
  %v2214 = vld [vmem:[%s5] sm:$0xff]
  %v2215 = vld [vmem:[%s5 + $0x8] sm:$0xff]
  %v2216 = vld [vmem:[%s5 + $0x10] sm:$0xff]
  %v2217 = vld [vmem:[%s5 + $0x18] sm:$0xff]
  %v2218 = vld [vmem:[%s5 + $0x20] sm:$0xff]
  %v2219 = vld [vmem:[%s5 + $0x28] sm:$0xff]
  %v2220 = vld [vmem:[%s5 + $0x30] sm:$0xff]
  %v2221 = vld [vmem:[%s5 + $0x38] sm:$0xff]
  %v2222 = vld [vmem:[%s5 + $0x40] sm:$0xff]
  %v2223 = vld [vmem:[%s5 + $0x48] sm:$0xff]
  %v2224 = vld [vmem:[%s5 + $0x50] sm:$0xff]
  %v2225 = vld [vmem:[%s5 + $0x58] sm:$0xff]
  %v2226 = vld [vmem:[%s5 + $0x60] sm:$0xff]
  %v2227 = vld [vmem:[%s5 + $0x68] sm:$0xff]
  %v2228 = vld [vmem:[%s5 + $0x70] sm:$0xff]
  %v2229 = vld [vmem:[%s5 + $0x78] sm:$0xff]
  %v2230 = vld [vmem:[%s5 + $0x80] sm:$0xff]
  %v2231 = vld [vmem:[%s5 + $0x88] sm:$0xff]
  %v2232 = vld [vmem:[%s5 + $0x90] sm:$0xff]
  %v2233 = vld [vmem:[%s5 + $0x98] sm:$0xff]
  %v2234 = vld [vmem:[%s5 + $0xa0] sm:$0xff]
  %v2235 = vld [vmem:[%s5 + $0xa8] sm:$0xff]
  %v2236 = vld [vmem:[%s5 + $0xb0] sm:$0xff]
  %v2237 = vld [vmem:[%s5 + $0xb8] sm:$0xff]
  %v2238 = vld [vmem:[%s5 + $0xc0] sm:$0xff]
  %v2239 = vld [vmem:[%s5 + $0xc8] sm:$0xff]
  %v2240 = vld [vmem:[%s5 + $0xd0] sm:$0xff]
  %v2241 = vld [vmem:[%s5 + $0xd8] sm:$0xff]
  %v2242 = vld [vmem:[%s5 + $0xe0] sm:$0xff]
  %v2243 = vld [vmem:[%s5 + $0xe8] sm:$0xff]
  %v2244 = vld [vmem:[%s5 + $0xf0] sm:$0xff]
  %v2245 = vld [vmem:[%s5 + $0xf8] sm:$0xff]
  %v2246 = vld [vmem:[%s5 + $0x100] sm:$0xff]
  %v2247 = vld [vmem:[%s5 + $0x108] sm:$0xff]
  %v2248 = vld [vmem:[%s5 + $0x110] sm:$0xff]
  %v2249 = vld [vmem:[%s5 + $0x118] sm:$0xff]
  %v2250 = vld [vmem:[%s5 + $0x120] sm:$0xff]
  %v2251 = vld [vmem:[%s5 + $0x128] sm:$0xff]
  %v2252 = vld [vmem:[%s5 + $0x130] sm:$0xff]
  %v2253 = vld [vmem:[%s5 + $0x138] sm:$0xff]
  %v2254 = vld [vmem:[%s5 + $0x140] sm:$0xff]
  %v2255 = vld [vmem:[%s5 + $0x148] sm:$0xff]
  %v2256 = vld [vmem:[%s5 + $0x150] sm:$0xff]
  %v2257 = vld [vmem:[%s5 + $0x158] sm:$0xff]
  %v2258 = vld [vmem:[%s5 + $0x160] sm:$0xff]
  %v2259 = vld [vmem:[%s5 + $0x168] sm:$0xff]
  %v2260 = vld [vmem:[%s5 + $0x170] sm:$0xff]
  %v2261 = vld [vmem:[%s5 + $0x178] sm:$0xff]
  %v2262 = vld [vmem:[%s5 + $0x180] sm:$0xff]
  %v2263 = vld [vmem:[%s5 + $0x188] sm:$0xff]
  %v2264 = vld [vmem:[%s5 + $0x190] sm:$0xff]
  %v2265 = vld [vmem:[%s5 + $0x198] sm:$0xff]
  %v2266 = vld [vmem:[%s5 + $0x1a0] sm:$0xff]
  %v2267 = vld [vmem:[%s5 + $0x1a8] sm:$0xff]
  %v2268 = vld [vmem:[%s5 + $0x1b0] sm:$0xff]
  %v2269 = vld [vmem:[%s5 + $0x1b8] sm:$0xff]
  %v2270 = vld [vmem:[%s5 + $0x1c0] sm:$0xff]
  %v2271 = vld [vmem:[%s5 + $0x1c8] sm:$0xff]
  %v2272 = vld [vmem:[%s5 + $0x1d0] sm:$0xff]
  %v2273 = vld [vmem:[%s5 + $0x1d8] sm:$0xff]
  %v2274 = vld [vmem:[%s5 + $0x1e0] sm:$0xff]
  %v2275 = vld [vmem:[%s5 + $0x1e8] sm:$0xff]
  %v2276 = vld [vmem:[%s5 + $0x1f0] sm:$0xff]
  %v2277 = vld [vmem:[%s5 + $0x1f8] sm:$0xff]
  %v2278 = vld [vmem:[#allocation3] sm:$0xff]
  %v2279 = vld [vmem:[#allocation3 + $0x8] sm:$0xff]
  %v2280 = vld [vmem:[#allocation3 + $0x10] sm:$0xff]
  %v2281 = vld [vmem:[#allocation3 + $0x18] sm:$0xff]
  %2282 = vmatprep.subr.mxu0 %v2215
  %2283 = vmatpush1.msra.mxu0 %v2214
  %2284 = vmatprep.subr.mxu0 %v2219
  %2285 = vmatpush1.msra.mxu0 %v2218
  %2286 = vmatprep.subr.mxu0 %v2223
  %2287 = vmatpush1.msra.mxu0 %v2222
  %2288 = vmatprep.subr.mxu0 %v2227
  %2289 = vmatpush1.msra.mxu0 %v2226
  %2290 = vmatprep.subr.mxu0 %v2231
  %2291 = vmatpush1.msra.mxu0 %v2230
  %2292 = vmatprep.subr.mxu0 %v2235
  %2293 = vmatpush1.msra.mxu0 %v2234
  %2294 = vmatprep.subr.mxu0 %v2239
  %2295 = vmatpush1.msra.mxu0 %v2238
  %2296 = vmatprep.subr.mxu0 %v2243
  %2297 = vmatpush1.msra.mxu0 %v2242
  %2298 = vmatprep.subr.mxu0 %v2247
  %2299 = vmatpush1.msra.mxu0 %v2246
  %2300 = vmatprep.subr.mxu0 %v2251
  %2301 = vmatpush1.msra.mxu0 %v2250
  %2302 = vmatprep.subr.mxu0 %v2255
  %2303 = vmatpush1.msra.mxu0 %v2254
  %2304 = vmatprep.subr.mxu0 %v2259
  %2305 = vmatpush1.msra.mxu0 %v2258
  %2306 = vmatprep.subr.mxu0 %v2263
  %2307 = vmatpush1.msra.mxu0 %v2262
  %2308 = vmatprep.subr.mxu0 %v2267
  %2309 = vmatpush1.msra.mxu0 %v2266
  %2310 = vmatprep.subr.mxu0 %v2271
  %2311 = vmatpush1.msra.mxu0 %v2270
  %2312 = vmatprep.subr.mxu0 %v2275
  %2313 = vmatpush1.msra.mxu0 %v2274
  %2314 = vmatprep.subr.mxu0 0.0
  %2315 = vmatpush1.msra.mxu0 0.0
  %2316 = vmatprep.subr.mxu0 0.0
  %2317 = vmatpush1.msra.mxu0 0.0
  %2318 = vmatprep.subr.mxu0 0.0
  %2319 = vmatpush1.msra.mxu0 0.0
  %2320 = vmatprep.subr.mxu0 0.0
  %2321 = vmatpush1.msra.mxu0 0.0
  %2322 = vmatprep.subr.mxu0 0.0
  %2323 = vmatpush1.msra.mxu0 0.0
  %2324 = vmatprep.subr.mxu0 0.0
  %2325 = vmatpush1.msra.mxu0 0.0
  %2326 = vmatprep.subr.mxu0 0.0
  %2327 = vmatpush1.msra.mxu0 0.0
  %2328 = vmatprep.subr.mxu0 0.0
  %2329 = vmatpush1.msra.mxu0 0.0
  %2330 = vmatprep.subr.mxu0 0.0
  %2331 = vmatpush1.msra.mxu0 0.0
  %2332 = vmatprep.subr.mxu0 0.0
  %2333 = vmatpush1.msra.mxu0 0.0
  %2334 = vmatprep.subr.mxu0 0.0
  %2335 = vmatpush1.msra.mxu0 0.0
  %2336 = vmatprep.subr.mxu0 0.0
  %2337 = vmatpush1.msra.mxu0 0.0
  %2338 = vmatprep.subr.mxu0 0.0
  %2339 = vmatpush1.msra.mxu0 0.0
  %2340 = vmatprep.subr.mxu0 0.0
  %2341 = vmatpush1.msra.mxu0 0.0
  %2342 = vmatprep.subr.mxu0 0.0
  %2343 = vmatpush1.msra.mxu0 0.0
  %2344 = vmatprep.subr.mxu0 0.0
  %2345 = vmatpush1.msra.mxu0 0.0
  %2346 = vmatprep.mubr.f32.mxu0 0.0
  %2347 = vmatmul.mubr.f32.gmra.mrb[0].mxu0 0.0
  %v2348 = vpop.f32.mrb[0].mxu0
  %v2349 = vadd.f32 0.0, %v2348
  %v2350 = vpop.f32.mrb[0].mxu0
  %v2351 = vadd.f32 0.0, %v2350
  %2352 = vdwg.mxu0
  %2353 = vmatprep.subr.mxu0 %v2217
  %2354 = vmatpush1.msra.mxu0 %v2216
  %2355 = vmatprep.subr.mxu0 %v2221
  %2356 = vmatpush1.msra.mxu0 %v2220
  %2357 = vmatprep.subr.mxu0 %v2225
  %2358 = vmatpush1.msra.mxu0 %v2224
  %2359 = vmatprep.subr.mxu0 %v2229
  %2360 = vmatpush1.msra.mxu0 %v2228
  %2361 = vmatprep.subr.mxu0 %v2233
  %2362 = vmatpush1.msra.mxu0 %v2232
  %2363 = vmatprep.subr.mxu0 %v2237
  %2364 = vmatpush1.msra.mxu0 %v2236
  %2365 = vmatprep.subr.mxu0 %v2241
  %2366 = vmatpush1.msra.mxu0 %v2240
  %2367 = vmatprep.subr.mxu0 %v2245
  %2368 = vmatpush1.msra.mxu0 %v2244
  %2369 = vmatprep.subr.mxu0 %v2249
  %2370 = vmatpush1.msra.mxu0 %v2248
  %2371 = vmatprep.subr.mxu0 %v2253
  %2372 = vmatpush1.msra.mxu0 %v2252
  %2373 = vmatprep.subr.mxu0 %v2257
  %2374 = vmatpush1.msra.mxu0 %v2256
  %2375 = vmatprep.subr.mxu0 %v2261
  %2376 = vmatpush1.msra.mxu0 %v2260
  %2377 = vmatprep.subr.mxu0 %v2265
  %2378 = vmatpush1.msra.mxu0 %v2264
  %2379 = vmatprep.subr.mxu0 %v2269
  %2380 = vmatpush1.msra.mxu0 %v2268
  %2381 = vmatprep.subr.mxu0 %v2273
  %2382 = vmatpush1.msra.mxu0 %v2272
  %2383 = vmatprep.subr.mxu0 %v2277
  %2384 = vmatpush1.msra.mxu0 %v2276
  %2385 = vmatprep.subr.mxu0 0.0
  %2386 = vmatpush1.msra.mxu0 0.0
  %2387 = vmatprep.subr.mxu0 0.0
  %2388 = vmatpush1.msra.mxu0 0.0
  %2389 = vmatprep.subr.mxu0 0.0
  %2390 = vmatpush1.msra.mxu0 0.0
  %2391 = vmatprep.subr.mxu0 0.0
  %2392 = vmatpush1.msra.mxu0 0.0
  %2393 = vmatprep.subr.mxu0 0.0
  %2394 = vmatpush1.msra.mxu0 0.0
  %2395 = vmatprep.subr.mxu0 0.0
  %2396 = vmatpush1.msra.mxu0 0.0
  %2397 = vmatprep.subr.mxu0 0.0
  %2398 = vmatpush1.msra.mxu0 0.0
  %2399 = vmatprep.subr.mxu0 0.0
  %2400 = vmatpush1.msra.mxu0 0.0
  %2401 = vmatprep.subr.mxu0 0.0
  %2402 = vmatpush1.msra.mxu0 0.0
  %2403 = vmatprep.subr.mxu0 0.0
  %2404 = vmatpush1.msra.mxu0 0.0
  %2405 = vmatprep.subr.mxu0 0.0
  %2406 = vmatpush1.msra.mxu0 0.0
  %2407 = vmatprep.subr.mxu0 0.0
  %2408 = vmatpush1.msra.mxu0 0.0
  %2409 = vmatprep.subr.mxu0 0.0
  %2410 = vmatpush1.msra.mxu0 0.0
  %2411 = vmatprep.subr.mxu0 0.0
  %2412 = vmatpush1.msra.mxu0 0.0
  %2413 = vmatprep.subr.mxu0 0.0
  %2414 = vmatpush1.msra.mxu0 0.0
  %2415 = vmatprep.subr.mxu0 0.0
  %2416 = vmatpush1.msra.mxu0 0.0
  %2417 = vmatprep.mubr.f32.mxu0 0.0
  %2418 = vmatmul.mubr.f32.gmra.mrb[0].mxu0 0.0
  %v2419 = vpop.f32.mrb[0].mxu0
  %v2420 = vadd.f32 0.0, %v2419
  %v2421 = vpop.f32.mrb[0].mxu0
  %v2422 = vadd.f32 0.0, %v2421
  %2423 = vdwg.mxu0
  %v2424 = vadd.f32 %v2278, %v2349
  %v2425 = vadd.f32 %v2279, %v2351
  %v2426 = vadd.f32 %v2280, %v2420
  %v2427 = vadd.f32 %v2281, %v2422
  %v2428 = vxor.u32 %v2424, 2147483648
  %v2429 = vmul.f32 %v2428, 1.442695
  %v2430 = vpow.pop %v2429
  %v2431 = vadd.f32 %v2430, 1.0
  %v2432 = vrcp.pop %v2431
  %v2433 = vmul.f32 1.0, %v2432
  %v2434 = vxor.u32 %v2425, 2147483648
  %v2435 = vmul.f32 %v2434, 1.442695
  %v2436 = vpow.pop %v2435
  %v2437 = vadd.f32 %v2436, 1.0
  %v2438 = vrcp.pop %v2437
  %v2439 = vmul.f32 1.0, %v2438
  %v2440 = vtanh.pop %v2426
  %v2441 = vxor.u32 %v2427, 2147483648
  %v2442 = vmul.f32 %v2441, 1.442695
  %v2443 = vpow.pop %v2442
  %v2444 = vadd.f32 %v2443, 1.0
  %v2445 = vrcp.pop %v2444
  %v2446 = vmul.f32 1.0, %v2445
  %v2447 = vmul.f32 %v2439, 0.0
  %v2448 = vmul.f32 %v2433, %v2440
  %v2449 = vadd.f32 %v2447, %v2448
  %v2450 = vtanh.pop %v2449
  %v2451 = vmul.f32 %v2446, %v2450
  %2452 = vst [vmem:[#allocation2] sm:$0xff] %v2451
  %v2453 = vld [vmem:[%s623] sm:$0xff]
  %v2454 = vld [vmem:[%s623 + $0x8] sm:$0xff]
  %v2455 = vld [vmem:[%s623 + $0x10] sm:$0xff]
  %v2456 = vld [vmem:[%s623 + $0x18] sm:$0xff]
  %2457 = vmatprep.subr.mxu0 %v2215
  %2458 = vmatpush1.msra.mxu0 %v2214
  %2459 = vmatprep.subr.mxu0 %v2219
  %2460 = vmatpush1.msra.mxu0 %v2218
  %2461 = vmatprep.subr.mxu0 %v2223
  %2462 = vmatpush1.msra.mxu0 %v2222
  %2463 = vmatprep.subr.mxu0 %v2227
  %2464 = vmatpush1.msra.mxu0 %v2226
  %2465 = vmatprep.subr.mxu0 %v2231
  %2466 = vmatpush1.msra.mxu0 %v2230
  %2467 = vmatprep.subr.mxu0 %v2235
  %2468 = vmatpush1.msra.mxu0 %v2234
  %2469 = vmatprep.subr.mxu0 %v2239
  %2470 = vmatpush1.msra.mxu0 %v2238
  %2471 = vmatprep.subr.mxu0 %v2243
  %2472 = vmatpush1.msra.mxu0 %v2242
  %2473 = vmatprep.subr.mxu0 %v2247
  %2474 = vmatpush1.msra.mxu0 %v2246
  %2475 = vmatprep.subr.mxu0 %v2251
  %2476 = vmatpush1.msra.mxu0 %v2250
  %2477 = vmatprep.subr.mxu0 %v2255
  %2478 = vmatpush1.msra.mxu0 %v2254
  %2479 = vmatprep.subr.mxu0 %v2259
  %2480 = vmatpush1.msra.mxu0 %v2258
  %2481 = vmatprep.subr.mxu0 %v2263
  %2482 = vmatpush1.msra.mxu0 %v2262
  %2483 = vmatprep.subr.mxu0 %v2267
  %2484 = vmatpush1.msra.mxu0 %v2266
  %2485 = vmatprep.subr.mxu0 %v2271
  %2486 = vmatpush1.msra.mxu0 %v2270
  %2487 = vmatprep.subr.mxu0 %v2275
  %2488 = vmatpush1.msra.mxu0 %v2274
  %2489 = vmatprep.subr.mxu0 0.0
  %2490 = vmatpush1.msra.mxu0 0.0
  %2491 = vmatprep.subr.mxu0 0.0
  %2492 = vmatpush1.msra.mxu0 0.0
  %2493 = vmatprep.subr.mxu0 0.0
  %2494 = vmatpush1.msra.mxu0 0.0
  %2495 = vmatprep.subr.mxu0 0.0
  %2496 = vmatpush1.msra.mxu0 0.0
  %2497 = vmatprep.subr.mxu0 0.0
  %2498 = vmatpush1.msra.mxu0 0.0
  %2499 = vmatprep.subr.mxu0 0.0
  %2500 = vmatpush1.msra.mxu0 0.0
  %2501 = vmatprep.subr.mxu0 0.0
  %2502 = vmatpush1.msra.mxu0 0.0
  %2503 = vmatprep.subr.mxu0 0.0
  %2504 = vmatpush1.msra.mxu0 0.0
  %2505 = vmatprep.subr.mxu0 0.0
  %2506 = vmatpush1.msra.mxu0 0.0
  %2507 = vmatprep.subr.mxu0 0.0
  %2508 = vmatpush1.msra.mxu0 0.0
  %2509 = vmatprep.subr.mxu0 0.0
  %2510 = vmatpush1.msra.mxu0 0.0
  %2511 = vmatprep.subr.mxu0 0.0
  %2512 = vmatpush1.msra.mxu0 0.0
  %2513 = vmatprep.subr.mxu0 0.0
  %2514 = vmatpush1.msra.mxu0 0.0
  %2515 = vmatprep.subr.mxu0 0.0
  %2516 = vmatpush1.msra.mxu0 0.0
  %2517 = vmatprep.subr.mxu0 0.0
  %2518 = vmatpush1.msra.mxu0 0.0
  %2519 = vmatprep.subr.mxu0 0.0
  %2520 = vmatpush1.msra.mxu0 0.0
  %2521 = vmatprep.mubr.f32.mxu0 0.0
  %2522 = vmatmul.mubr.f32.gmra.mrb[0].mxu0 %v2451
  %v2523 = vpop.f32.mrb[0].mxu0
  %v2524 = vadd.f32 0.0, %v2523
  %v2525 = vpop.f32.mrb[0].mxu0
  %v2526 = vadd.f32 0.0, %v2525
  %2527 = vdwg.mxu0
  %2528 = vmatprep.subr.mxu0 %v2217
  %2529 = vmatpush1.msra.mxu0 %v2216
  %2530 = vmatprep.subr.mxu0 %v2221
  %2531 = vmatpush1.msra.mxu0 %v2220
  %2532 = vmatprep.subr.mxu0 %v2225
  %2533 = vmatpush1.msra.mxu0 %v2224
  %2534 = vmatprep.subr.mxu0 %v2229
  %2535 = vmatpush1.msra.mxu0 %v2228
  %2536 = vmatprep.subr.mxu0 %v2233
  %2537 = vmatpush1.msra.mxu0 %v2232
  %2538 = vmatprep.subr.mxu0 %v2237
  %2539 = vmatpush1.msra.mxu0 %v2236
  %2540 = vmatprep.subr.mxu0 %v2241
  %2541 = vmatpush1.msra.mxu0 %v2240
  %2542 = vmatprep.subr.mxu0 %v2245
  %2543 = vmatpush1.msra.mxu0 %v2244
  %2544 = vmatprep.subr.mxu0 %v2249
  %2545 = vmatpush1.msra.mxu0 %v2248
  %2546 = vmatprep.subr.mxu0 %v2253
  %2547 = vmatpush1.msra.mxu0 %v2252
  %2548 = vmatprep.subr.mxu0 %v2257
  %2549 = vmatpush1.msra.mxu0 %v2256
  %2550 = vmatprep.subr.mxu0 %v2261
  %2551 = vmatpush1.msra.mxu0 %v2260
  %2552 = vmatprep.subr.mxu0 %v2265
  %2553 = vmatpush1.msra.mxu0 %v2264
  %2554 = vmatprep.subr.mxu0 %v2269
  %2555 = vmatpush1.msra.mxu0 %v2268
  %2556 = vmatprep.subr.mxu0 %v2273
  %2557 = vmatpush1.msra.mxu0 %v2272
  %2558 = vmatprep.subr.mxu0 %v2277
  %2559 = vmatpush1.msra.mxu0 %v2276
  %2560 = vmatprep.subr.mxu0 0.0
  %2561 = vmatpush1.msra.mxu0 0.0
  %2562 = vmatprep.subr.mxu0 0.0
  %2563 = vmatpush1.msra.mxu0 0.0
  %2564 = vmatprep.subr.mxu0 0.0
  %2565 = vmatpush1.msra.mxu0 0.0
  %2566 = vmatprep.subr.mxu0 0.0
  %2567 = vmatpush1.msra.mxu0 0.0
  %2568 = vmatprep.subr.mxu0 0.0
  %2569 = vmatpush1.msra.mxu0 0.0
  %2570 = vmatprep.subr.mxu0 0.0
  %2571 = vmatpush1.msra.mxu0 0.0
  %2572 = vmatprep.subr.mxu0 0.0
  %2573 = vmatpush1.msra.mxu0 0.0
  %2574 = vmatprep.subr.mxu0 0.0
  %2575 = vmatpush1.msra.mxu0 0.0
  %2576 = vmatprep.subr.mxu0 0.0
  %2577 = vmatpush1.msra.mxu0 0.0
  %2578 = vmatprep.subr.mxu0 0.0
  %2579 = vmatpush1.msra.mxu0 0.0
  %2580 = vmatprep.subr.mxu0 0.0
  %2581 = vmatpush1.msra.mxu0 0.0
  %2582 = vmatprep.subr.mxu0 0.0
  %2583 = vmatpush1.msra.mxu0 0.0
  %2584 = vmatprep.subr.mxu0 0.0
  %2585 = vmatpush1.msra.mxu0 0.0
  %2586 = vmatprep.subr.mxu0 0.0
  %2587 = vmatpush1.msra.mxu0 0.0
  %2588 = vmatprep.subr.mxu0 0.0
  %2589 = vmatpush1.msra.mxu0 0.0
  %2590 = vmatprep.subr.mxu0 0.0
  %2591 = vmatpush1.msra.mxu0 0.0
  %2592 = vmatprep.mubr.f32.mxu0 0.0
  %2593 = vmatmul.mubr.f32.gmra.mrb[0].mxu0 %v2451
  %v2594 = vpop.f32.mrb[0].mxu0
  %v2595 = vadd.f32 0.0, %v2594
  %v2596 = vpop.f32.mrb[0].mxu0
  %v2597 = vadd.f32 0.0, %v2596
  %2598 = vdwg.mxu0
  %v2599 = vadd.f32 %v2453, %v2524
  %v2600 = vadd.f32 %v2454, %v2526
  %v2601 = vadd.f32 %v2455, %v2595
  %v2602 = vadd.f32 %v2456, %v2597
  %v2603 = vxor.u32 %v2599, 2147483648
  %v2604 = vmul.f32 %v2603, 1.442695
  %v2605 = vpow.pop %v2604
  %v2606 = vadd.f32 %v2605, 1.0
  %v2607 = vrcp.pop %v2606
  %v2608 = vmul.f32 1.0, %v2607
  %v2609 = vxor.u32 %v2600, 2147483648
  %v2610 = vmul.f32 %v2609, 1.442695
  %v2611 = vpow.pop %v2610
  %v2612 = vadd.f32 %v2611, 1.0
  %v2613 = vrcp.pop %v2612
  %v2614 = vmul.f32 1.0, %v2613
  %v2615 = vtanh.pop %v2601
  %v2616 = vxor.u32 %v2602, 2147483648
  %v2617 = vmul.f32 %v2616, 1.442695
  %v2618 = vpow.pop %v2617
  %v2619 = vadd.f32 %v2618, 1.0
  %v2620 = vrcp.pop %v2619
  %v2621 = vmul.f32 1.0, %v2620
  %v2622 = vmul.f32 %v2614, %v2449
  %v2623 = vmul.f32 %v2608, %v2615
  %v2624 = vadd.f32 %v2622, %v2623
  %v2625 = vtanh.pop %v2624
  %v2626 = vmul.f32 %v2621, %v2625
  %2627 = vst [vmem:[%s798] sm:$0xff] %v2626
  %v2628 = vld [vmem:[%s800] sm:$0xff]
  %v2629 = vld [vmem:[%s800 + $0x8] sm:$0xff]
  %v2630 = vld [vmem:[%s800 + $0x10] sm:$0xff]
  %v2631 = vld [vmem:[%s800 + $0x18] sm:$0xff]
  %2632 = vmatprep.subr.mxu0 %v2215
  %2633 = vmatpush1.msra.mxu0 %v2214
  %2634 = vmatprep.subr.mxu0 %v2219
  %2635 = vmatpush1.msra.mxu0 %v2218
  %2636 = vmatprep.subr.mxu0 %v2223
  %2637 = vmatpush1.msra.mxu0 %v2222
  %2638 = vmatprep.subr.mxu0 %v2227
  %2639 = vmatpush1.msra.mxu0 %v2226
  %2640 = vmatprep.subr.mxu0 %v2231
  %2641 = vmatpush1.msra.mxu0 %v2230
  %2642 = vmatprep.subr.mxu0 %v2235
  %2643 = vmatpush1.msra.mxu0 %v2234
  %2644 = vmatprep.subr.mxu0 %v2239
  %2645 = vmatpush1.msra.mxu0 %v2238
  %2646 = vmatprep.subr.mxu0 %v2243
  %2647 = vmatpush1.msra.mxu0 %v2242
  %2648 = vmatprep.subr.mxu0 %v2247
  %2649 = vmatpush1.msra.mxu0 %v2246
  %2650 = vmatprep.subr.mxu0 %v2251
  %2651 = vmatpush1.msra.mxu0 %v2250
  %2652 = vmatprep.subr.mxu0 %v2255
  %2653 = vmatpush1.msra.mxu0 %v2254
  %2654 = vmatprep.subr.mxu0 %v2259
  %2655 = vmatpush1.msra.mxu0 %v2258
  %2656 = vmatprep.subr.mxu0 %v2263
  %2657 = vmatpush1.msra.mxu0 %v2262
  %2658 = vmatprep.subr.mxu0 %v2267
  %2659 = vmatpush1.msra.mxu0 %v2266
  %2660 = vmatprep.subr.mxu0 %v2271
  %2661 = vmatpush1.msra.mxu0 %v2270
  %2662 = vmatprep.subr.mxu0 %v2275
  %2663 = vmatpush1.msra.mxu0 %v2274
  %2664 = vmatprep.subr.mxu0 0.0
  %2665 = vmatpush1.msra.mxu0 0.0
  %2666 = vmatprep.subr.mxu0 0.0
  %2667 = vmatpush1.msra.mxu0 0.0
  %2668 = vmatprep.subr.mxu0 0.0
  %2669 = vmatpush1.msra.mxu0 0.0
  %2670 = vmatprep.subr.mxu0 0.0
  %2671 = vmatpush1.msra.mxu0 0.0
  %2672 = vmatprep.subr.mxu0 0.0
  %2673 = vmatpush1.msra.mxu0 0.0
  %2674 = vmatprep.subr.mxu0 0.0
  %2675 = vmatpush1.msra.mxu0 0.0
  %2676 = vmatprep.subr.mxu0 0.0
  %2677 = vmatpush1.msra.mxu0 0.0
  %2678 = vmatprep.subr.mxu0 0.0
  %2679 = vmatpush1.msra.mxu0 0.0
  %2680 = vmatprep.subr.mxu0 0.0
  %2681 = vmatpush1.msra.mxu0 0.0
  %2682 = vmatprep.subr.mxu0 0.0
  %2683 = vmatpush1.msra.mxu0 0.0
  %2684 = vmatprep.subr.mxu0 0.0
  %2685 = vmatpush1.msra.mxu0 0.0
  %2686 = vmatprep.subr.mxu0 0.0
  %2687 = vmatpush1.msra.mxu0 0.0
  %2688 = vmatprep.subr.mxu0 0.0
  %2689 = vmatpush1.msra.mxu0 0.0
  %2690 = vmatprep.subr.mxu0 0.0
  %2691 = vmatpush1.msra.mxu0 0.0
  %2692 = vmatprep.subr.mxu0 0.0
  %2693 = vmatpush1.msra.mxu0 0.0
  %2694 = vmatprep.subr.mxu0 0.0
  %2695 = vmatpush1.msra.mxu0 0.0
  %2696 = vmatprep.mubr.f32.mxu0 0.0
  %2697 = vmatmul.mubr.f32.gmra.mrb[0].mxu0 %v2626
  %v2698 = vpop.f32.mrb[0].mxu0
  %v2699 = vadd.f32 0.0, %v2698
  %v2700 = vpop.f32.mrb[0].mxu0
  %v2701 = vadd.f32 0.0, %v2700
  %2702 = vdwg.mxu0
  %2703 = vmatprep.subr.mxu0 %v2217
  %2704 = vmatpush1.msra.mxu0 %v2216
  %2705 = vmatprep.subr.mxu0 %v2221
  %2706 = vmatpush1.msra.mxu0 %v2220
  %2707 = vmatprep.subr.mxu0 %v2225
  %2708 = vmatpush1.msra.mxu0 %v2224
  %2709 = vmatprep.subr.mxu0 %v2229
  %2710 = vmatpush1.msra.mxu0 %v2228
  %2711 = vmatprep.subr.mxu0 %v2233
  %2712 = vmatpush1.msra.mxu0 %v2232
  %2713 = vmatprep.subr.mxu0 %v2237
  %2714 = vmatpush1.msra.mxu0 %v2236
  %2715 = vmatprep.subr.mxu0 %v2241
  %2716 = vmatpush1.msra.mxu0 %v2240
  %2717 = vmatprep.subr.mxu0 %v2245
  %2718 = vmatpush1.msra.mxu0 %v2244
  %2719 = vmatprep.subr.mxu0 %v2249
  %2720 = vmatpush1.msra.mxu0 %v2248
  %2721 = vmatprep.subr.mxu0 %v2253
  %2722 = vmatpush1.msra.mxu0 %v2252
  %2723 = vmatprep.subr.mxu0 %v2257
  %2724 = vmatpush1.msra.mxu0 %v2256
  %2725 = vmatprep.subr.mxu0 %v2261
  %2726 = vmatpush1.msra.mxu0 %v2260
  %2727 = vmatprep.subr.mxu0 %v2265
  %2728 = vmatpush1.msra.mxu0 %v2264
  %2729 = vmatprep.subr.mxu0 %v2269
  %2730 = vmatpush1.msra.mxu0 %v2268
  %2731 = vmatprep.subr.mxu0 %v2273
  %2732 = vmatpush1.msra.mxu0 %v2272
  %2733 = vmatprep.subr.mxu0 %v2277
  %2734 = vmatpush1.msra.mxu0 %v2276
  %2735 = vmatprep.subr.mxu0 0.0
  %2736 = vmatpush1.msra.mxu0 0.0
  %2737 = vmatprep.subr.mxu0 0.0
  %2738 = vmatpush1.msra.mxu0 0.0
  %2739 = vmatprep.subr.mxu0 0.0
  %2740 = vmatpush1.msra.mxu0 0.0
  %2741 = vmatprep.subr.mxu0 0.0
  %2742 = vmatpush1.msra.mxu0 0.0
  %2743 = vmatprep.subr.mxu0 0.0
  %2744 = vmatpush1.msra.mxu0 0.0
  %2745 = vmatprep.subr.mxu0 0.0
  %2746 = vmatpush1.msra.mxu0 0.0
  %2747 = vmatprep.subr.mxu0 0.0
  %2748 = vmatpush1.msra.mxu0 0.0
  %2749 = vmatprep.subr.mxu0 0.0
  %2750 = vmatpush1.msra.mxu0 0.0
  %2751 = vmatprep.subr.mxu0 0.0
  %2752 = vmatpush1.msra.mxu0 0.0
  %2753 = vmatprep.subr.mxu0 0.0
  %2754 = vmatpush1.msra.mxu0 0.0
  %2755 = vmatprep.subr.mxu0 0.0
  %2756 = vmatpush1.msra.mxu0 0.0
  %2757 = vmatprep.subr.mxu0 0.0
  %2758 = vmatpush1.msra.mxu0 0.0
  %2759 = vmatprep.subr.mxu0 0.0
  %2760 = vmatpush1.msra.mxu0 0.0
  %2761 = vmatprep.subr.mxu0 0.0
  %2762 = vmatpush1.msra.mxu0 0.0
  %2763 = vmatprep.subr.mxu0 0.0
  %2764 = vmatpush1.msra.mxu0 0.0
  %2765 = vmatprep.subr.mxu0 0.0
  %2766 = vmatpush1.msra.mxu0 0.0
  %2767 = vmatprep.mubr.f32.mxu0 0.0
  %2768 = vmatmul.mubr.f32.gmra.mrb[0].mxu0 %v2626
  %v2769 = vpop.f32.mrb[0].mxu0
  %v2770 = vadd.f32 0.0, %v2769
  %v2771 = vpop.f32.mrb[0].mxu0
  %v2772 = vadd.f32 0.0, %v2771
  %2773 = vdwg.mxu0
  %v2774 = vadd.f32 %v2628, %v2699
  %v2775 = vadd.f32 %v2629, %v2701
  %v2776 = vadd.f32 %v2630, %v2770
  %v2777 = vadd.f32 %v2631, %v2772
  %v2778 = vxor.u32 %v2774, 2147483648
  %v2779 = vmul.f32 %v2778, 1.442695
  %v2780 = vpow.pop %v2779
  %v2781 = vadd.f32 %v2780, 1.0
  %v2782 = vrcp.pop %v2781
  %v2783 = vmul.f32 1.0, %v2782
  %v2784 = vxor.u32 %v2775, 2147483648
  %v2785 = vmul.f32 %v2784, 1.442695
  %v2786 = vpow.pop %v2785
  %v2787 = vadd.f32 %v2786, 1.0
  %v2788 = vrcp.pop %v2787
  %v2789 = vmul.f32 1.0, %v2788
  %v2790 = vtanh.pop %v2776
  %v2791 = vxor.u32 %v2777, 2147483648
  %v2792 = vmul.f32 %v2791, 1.442695
  %v2793 = vpow.pop %v2792
  %v2794 = vadd.f32 %v2793, 1.0
  %v2795 = vrcp.pop %v2794
  %v2796 = vmul.f32 1.0, %v2795
  %v2797 = vmul.f32 %v2789, %v2624
  %v2798 = vmul.f32 %v2783, %v2790
  %v2799 = vadd.f32 %v2797, %v2798
  %v2800 = vtanh.pop %v2799
  %v2801 = vmul.f32 %v2796, %v2800
  %2802 = vst [vmem:[%s975] sm:$0xff] %v2801
  %v2803 = vld [vmem:[%s977] sm:$0xff]
  %v2804 = vld [vmem:[%s977 + $0x8] sm:$0xff]
  %v2805 = vld [vmem:[%s977 + $0x10] sm:$0xff]
  %v2806 = vld [vmem:[%s977 + $0x18] sm:$0xff]
  %2807 = vmatprep.subr.mxu0 %v2215
  %2808 = vmatpush1.msra.mxu0 %v2214
  %2809 = vmatprep.subr.mxu0 %v2219
  %2810 = vmatpush1.msra.mxu0 %v2218
  %2811 = vmatprep.subr.mxu0 %v2223
  %2812 = vmatpush1.msra.mxu0 %v2222
  %2813 = vmatprep.subr.mxu0 %v2227
  %2814 = vmatpush1.msra.mxu0 %v2226
  %2815 = vmatprep.subr.mxu0 %v2231
  %2816 = vmatpush1.msra.mxu0 %v2230
  %2817 = vmatprep.subr.mxu0 %v2235
  %2818 = vmatpush1.msra.mxu0 %v2234
  %2819 = vmatprep.subr.mxu0 %v2239
  %2820 = vmatpush1.msra.mxu0 %v2238
  %2821 = vmatprep.subr.mxu0 %v2243
  %2822 = vmatpush1.msra.mxu0 %v2242
  %2823 = vmatprep.subr.mxu0 %v2247
  %2824 = vmatpush1.msra.mxu0 %v2246
  %2825 = vmatprep.subr.mxu0 %v2251
  %2826 = vmatpush1.msra.mxu0 %v2250
  %2827 = vmatprep.subr.mxu0 %v2255
  %2828 = vmatpush1.msra.mxu0 %v2254
  %2829 = vmatprep.subr.mxu0 %v2259
  %2830 = vmatpush1.msra.mxu0 %v2258
  %2831 = vmatprep.subr.mxu0 %v2263
  %2832 = vmatpush1.msra.mxu0 %v2262
  %2833 = vmatprep.subr.mxu0 %v2267
  %2834 = vmatpush1.msra.mxu0 %v2266
  %2835 = vmatprep.subr.mxu0 %v2271
  %2836 = vmatpush1.msra.mxu0 %v2270
  %2837 = vmatprep.subr.mxu0 %v2275
  %2838 = vmatpush1.msra.mxu0 %v2274
  %2839 = vmatprep.subr.mxu0 0.0
  %2840 = vmatpush1.msra.mxu0 0.0
  %2841 = vmatprep.subr.mxu0 0.0
  %2842 = vmatpush1.msra.mxu0 0.0
  %2843 = vmatprep.subr.mxu0 0.0
  %2844 = vmatpush1.msra.mxu0 0.0
  %2845 = vmatprep.subr.mxu0 0.0
  %2846 = vmatpush1.msra.mxu0 0.0
  %2847 = vmatprep.subr.mxu0 0.0
  %2848 = vmatpush1.msra.mxu0 0.0
  %2849 = vmatprep.subr.mxu0 0.0
  %2850 = vmatpush1.msra.mxu0 0.0
  %2851 = vmatprep.subr.mxu0 0.0
  %2852 = vmatpush1.msra.mxu0 0.0
  %2853 = vmatprep.subr.mxu0 0.0
  %2854 = vmatpush1.msra.mxu0 0.0
  %2855 = vmatprep.subr.mxu0 0.0
  %2856 = vmatpush1.msra.mxu0 0.0
  %2857 = vmatprep.subr.mxu0 0.0
  %2858 = vmatpush1.msra.mxu0 0.0
  %2859 = vmatprep.subr.mxu0 0.0
  %2860 = vmatpush1.msra.mxu0 0.0
  %2861 = vmatprep.subr.mxu0 0.0
  %2862 = vmatpush1.msra.mxu0 0.0
  %2863 = vmatprep.subr.mxu0 0.0
  %2864 = vmatpush1.msra.mxu0 0.0
  %2865 = vmatprep.subr.mxu0 0.0
  %2866 = vmatpush1.msra.mxu0 0.0
  %2867 = vmatprep.subr.mxu0 0.0
  %2868 = vmatpush1.msra.mxu0 0.0
  %2869 = vmatprep.subr.mxu0 0.0
  %2870 = vmatpush1.msra.mxu0 0.0
  %2871 = vmatprep.mubr.f32.mxu0 0.0
  %2872 = vmatmul.mubr.f32.gmra.mrb[0].mxu0 %v2801
  %v2873 = vpop.f32.mrb[0].mxu0
  %v2874 = vadd.f32 0.0, %v2873
  %v2875 = vpop.f32.mrb[0].mxu0
  %v2876 = vadd.f32 0.0, %v2875
  %2877 = vdwg.mxu0
  %2878 = vmatprep.subr.mxu0 %v2217
  %2879 = vmatpush1.msra.mxu0 %v2216
  %2880 = vmatprep.subr.mxu0 %v2221
  %2881 = vmatpush1.msra.mxu0 %v2220
  %2882 = vmatprep.subr.mxu0 %v2225
  %2883 = vmatpush1.msra.mxu0 %v2224
  %2884 = vmatprep.subr.mxu0 %v2229
  %2885 = vmatpush1.msra.mxu0 %v2228
  %2886 = vmatprep.subr.mxu0 %v2233
  %2887 = vmatpush1.msra.mxu0 %v2232
  %2888 = vmatprep.subr.mxu0 %v2237
  %2889 = vmatpush1.msra.mxu0 %v2236
  %2890 = vmatprep.subr.mxu0 %v2241
  %2891 = vmatpush1.msra.mxu0 %v2240
  %2892 = vmatprep.subr.mxu0 %v2245
  %2893 = vmatpush1.msra.mxu0 %v2244
  %2894 = vmatprep.subr.mxu0 %v2249
  %2895 = vmatpush1.msra.mxu0 %v2248
  %2896 = vmatprep.subr.mxu0 %v2253
  %2897 = vmatpush1.msra.mxu0 %v2252
  %2898 = vmatprep.subr.mxu0 %v2257
  %2899 = vmatpush1.msra.mxu0 %v2256
  %2900 = vmatprep.subr.mxu0 %v2261
  %2901 = vmatpush1.msra.mxu0 %v2260
  %2902 = vmatprep.subr.mxu0 %v2265
  %2903 = vmatpush1.msra.mxu0 %v2264
  %2904 = vmatprep.subr.mxu0 %v2269
  %2905 = vmatpush1.msra.mxu0 %v2268
  %2906 = vmatprep.subr.mxu0 %v2273
  %2907 = vmatpush1.msra.mxu0 %v2272
  %2908 = vmatprep.subr.mxu0 %v2277
  %2909 = vmatpush1.msra.mxu0 %v2276
  %2910 = vmatprep.subr.mxu0 0.0
  %2911 = vmatpush1.msra.mxu0 0.0
  %2912 = vmatprep.subr.mxu0 0.0
  %2913 = vmatpush1.msra.mxu0 0.0
  %2914 = vmatprep.subr.mxu0 0.0
  %2915 = vmatpush1.msra.mxu0 0.0
  %2916 = vmatprep.subr.mxu0 0.0
  %2917 = vmatpush1.msra.mxu0 0.0
  %2918 = vmatprep.subr.mxu0 0.0
  %2919 = vmatpush1.msra.mxu0 0.0
  %2920 = vmatprep.subr.mxu0 0.0
  %2921 = vmatpush1.msra.mxu0 0.0
  %2922 = vmatprep.subr.mxu0 0.0
  %2923 = vmatpush1.msra.mxu0 0.0
  %2924 = vmatprep.subr.mxu0 0.0
  %2925 = vmatpush1.msra.mxu0 0.0
  %2926 = vmatprep.subr.mxu0 0.0
  %2927 = vmatpush1.msra.mxu0 0.0
  %2928 = vmatprep.subr.mxu0 0.0
  %2929 = vmatpush1.msra.mxu0 0.0
  %2930 = vmatprep.subr.mxu0 0.0
  %2931 = vmatpush1.msra.mxu0 0.0
  %2932 = vmatprep.subr.mxu0 0.0
  %2933 = vmatpush1.msra.mxu0 0.0
  %2934 = vmatprep.subr.mxu0 0.0
  %2935 = vmatpush1.msra.mxu0 0.0
  %2936 = vmatprep.subr.mxu0 0.0
  %2937 = vmatpush1.msra.mxu0 0.0
  %2938 = vmatprep.subr.mxu0 0.0
  %2939 = vmatpush1.msra.mxu0 0.0
  %2940 = vmatprep.subr.mxu0 0.0
  %2941 = vmatpush1.msra.mxu0 0.0
  %2942 = vmatprep.mubr.f32.mxu0 0.0
  %2943 = vmatmul.mubr.f32.gmra.mrb[0].mxu0 %v2801
  %v2944 = vpop.f32.mrb[0].mxu0
  %v2945 = vadd.f32 0.0, %v2944
  %v2946 = vpop.f32.mrb[0].mxu0
  %v2947 = vadd.f32 0.0, %v2946
  %2948 = vdwg.mxu0
  %v2949 = vadd.f32 %v2803, %v2874
  %v2950 = vadd.f32 %v2804, %v2876
  %v2951 = vadd.f32 %v2805, %v2945
  %v2952 = vadd.f32 %v2806, %v2947
  %v2953 = vxor.u32 %v2949, 2147483648
  %v2954 = vmul.f32 %v2953, 1.442695
  %v2955 = vpow.pop %v2954
  %v2956 = vadd.f32 %v2955, 1.0
  %v2957 = vrcp.pop %v2956
  %v2958 = vmul.f32 1.0, %v2957
  %v2959 = vxor.u32 %v2950, 2147483648
  %v2960 = vmul.f32 %v2959, 1.442695
  %v2961 = vpow.pop %v2960
  %v2962 = vadd.f32 %v2961, 1.0
  %v2963 = vrcp.pop %v2962
  %v2964 = vmul.f32 1.0, %v2963
  %v2965 = vtanh.pop %v2951
  %v2966 = vxor.u32 %v2952, 2147483648
  %v2967 = vmul.f32 %v2966, 1.442695
  %v2968 = vpow.pop %v2967
  %v2969 = vadd.f32 %v2968, 1.0
  %v2970 = vrcp.pop %v2969
  %v2971 = vmul.f32 1.0, %v2970
  %v2972 = vmul.f32 %v2964, %v2799
  %v2973 = vmul.f32 %v2958, %v2965
  %v2974 = vadd.f32 %v2972, %v2973
  %v2975 = vtanh.pop %v2974
  %v2976 = vmul.f32 %v2971, %v2975
  %2977 = vst [vmem:[%s1152] sm:$0xff] %v2976
  %v2978 = vld [vmem:[%s1154] sm:$0xff]
  %v2979 = vld [vmem:[%s1154 + $0x8] sm:$0xff]
  %v2980 = vld [vmem:[%s1154 + $0x10] sm:$0xff]
  %v2981 = vld [vmem:[%s1154 + $0x18] sm:$0xff]
  %2982 = vmatprep.subr.mxu0 %v2215
  %2983 = vmatpush1.msra.mxu0 %v2214
  %2984 = vmatprep.subr.mxu0 %v2219
  %2985 = vmatpush1.msra.mxu0 %v2218
  %2986 = vmatprep.subr.mxu0 %v2223
  %2987 = vmatpush1.msra.mxu0 %v2222
  %2988 = vmatprep.subr.mxu0 %v2227
  %2989 = vmatpush1.msra.mxu0 %v2226
  %2990 = vmatprep.subr.mxu0 %v2231
  %2991 = vmatpush1.msra.mxu0 %v2230
  %2992 = vmatprep.subr.mxu0 %v2235
  %2993 = vmatpush1.msra.mxu0 %v2234
  %2994 = vmatprep.subr.mxu0 %v2239
  %2995 = vmatpush1.msra.mxu0 %v2238
  %2996 = vmatprep.subr.mxu0 %v2243
  %2997 = vmatpush1.msra.mxu0 %v2242
  %2998 = vmatprep.subr.mxu0 %v2247
  %2999 = vmatpush1.msra.mxu0 %v2246
  %3000 = vmatprep.subr.mxu0 %v2251
  %3001 = vmatpush1.msra.mxu0 %v2250
  %3002 = vmatprep.subr.mxu0 %v2255
  %3003 = vmatpush1.msra.mxu0 %v2254
  %3004 = vmatprep.subr.mxu0 %v2259
  %3005 = vmatpush1.msra.mxu0 %v2258
  %3006 = vmatprep.subr.mxu0 %v2263
  %3007 = vmatpush1.msra.mxu0 %v2262
  %3008 = vmatprep.subr.mxu0 %v2267
  %3009 = vmatpush1.msra.mxu0 %v2266
  %3010 = vmatprep.subr.mxu0 %v2271
  %3011 = vmatpush1.msra.mxu0 %v2270
  %3012 = vmatprep.subr.mxu0 %v2275
  %3013 = vmatpush1.msra.mxu0 %v2274
  %3014 = vmatprep.subr.mxu0 0.0
  %3015 = vmatpush1.msra.mxu0 0.0
  %3016 = vmatprep.subr.mxu0 0.0
  %3017 = vmatpush1.msra.mxu0 0.0
  %3018 = vmatprep.subr.mxu0 0.0
  %3019 = vmatpush1.msra.mxu0 0.0
  %3020 = vmatprep.subr.mxu0 0.0
  %3021 = vmatpush1.msra.mxu0 0.0
  %3022 = vmatprep.subr.mxu0 0.0
  %3023 = vmatpush1.msra.mxu0 0.0
  %3024 = vmatprep.subr.mxu0 0.0
  %3025 = vmatpush1.msra.mxu0 0.0
  %3026 = vmatprep.subr.mxu0 0.0
  %3027 = vmatpush1.msra.mxu0 0.0
  %3028 = vmatprep.subr.mxu0 0.0
  %3029 = vmatpush1.msra.mxu0 0.0
  %3030 = vmatprep.subr.mxu0 0.0
  %3031 = vmatpush1.msra.mxu0 0.0
  %3032 = vmatprep.subr.mxu0 0.0
  %3033 = vmatpush1.msra.mxu0 0.0
  %3034 = vmatprep.subr.mxu0 0.0
  %3035 = vmatpush1.msra.mxu0 0.0
  %3036 = vmatprep.subr.mxu0 0.0
  %3037 = vmatpush1.msra.mxu0 0.0
  %3038 = vmatprep.subr.mxu0 0.0
  %3039 = vmatpush1.msra.mxu0 0.0
  %3040 = vmatprep.subr.mxu0 0.0
  %3041 = vmatpush1.msra.mxu0 0.0
  %3042 = vmatprep.subr.mxu0 0.0
  %3043 = vmatpush1.msra.mxu0 0.0
  %3044 = vmatprep.subr.mxu0 0.0
  %3045 = vmatpush1.msra.mxu0 0.0
  %3046 = vmatprep.mubr.f32.mxu0 0.0
  %3047 = vmatmul.mubr.f32.gmra.mrb[0].mxu0 %v2976
  %v3048 = vpop.f32.mrb[0].mxu0
  %v3049 = vadd.f32 0.0, %v3048
  %v3050 = vpop.f32.mrb[0].mxu0
  %v3051 = vadd.f32 0.0, %v3050
  %3052 = vdwg.mxu0
  %3053 = vmatprep.subr.mxu0 %v2217
  %3054 = vmatpush1.msra.mxu0 %v2216
  %3055 = vmatprep.subr.mxu0 %v2221
  %3056 = vmatpush1.msra.mxu0 %v2220
  %3057 = vmatprep.subr.mxu0 %v2225
  %3058 = vmatpush1.msra.mxu0 %v2224
  %3059 = vmatprep.subr.mxu0 %v2229
  %3060 = vmatpush1.msra.mxu0 %v2228
  %3061 = vmatprep.subr.mxu0 %v2233
  %3062 = vmatpush1.msra.mxu0 %v2232
  %3063 = vmatprep.subr.mxu0 %v2237
  %3064 = vmatpush1.msra.mxu0 %v2236
  %3065 = vmatprep.subr.mxu0 %v2241
  %3066 = vmatpush1.msra.mxu0 %v2240
  %3067 = vmatprep.subr.mxu0 %v2245
  %3068 = vmatpush1.msra.mxu0 %v2244
  %3069 = vmatprep.subr.mxu0 %v2249
  %3070 = vmatpush1.msra.mxu0 %v2248
  %3071 = vmatprep.subr.mxu0 %v2253
  %3072 = vmatpush1.msra.mxu0 %v2252
  %3073 = vmatprep.subr.mxu0 %v2257
  %3074 = vmatpush1.msra.mxu0 %v2256
  %3075 = vmatprep.subr.mxu0 %v2261
  %3076 = vmatpush1.msra.mxu0 %v2260
  %3077 = vmatprep.subr.mxu0 %v2265
  %3078 = vmatpush1.msra.mxu0 %v2264
  %3079 = vmatprep.subr.mxu0 %v2269
  %3080 = vmatpush1.msra.mxu0 %v2268
  %3081 = vmatprep.subr.mxu0 %v2273
  %3082 = vmatpush1.msra.mxu0 %v2272
  %3083 = vmatprep.subr.mxu0 %v2277
  %3084 = vmatpush1.msra.mxu0 %v2276
  %3085 = vmatprep.subr.mxu0 0.0
  %3086 = vmatpush1.msra.mxu0 0.0
  %3087 = vmatprep.subr.mxu0 0.0
  %3088 = vmatpush1.msra.mxu0 0.0
  %3089 = vmatprep.subr.mxu0 0.0
  %3090 = vmatpush1.msra.mxu0 0.0
  %3091 = vmatprep.subr.mxu0 0.0
  %3092 = vmatpush1.msra.mxu0 0.0
  %3093 = vmatprep.subr.mxu0 0.0
  %3094 = vmatpush1.msra.mxu0 0.0
  %3095 = vmatprep.subr.mxu0 0.0
  %3096 = vmatpush1.msra.mxu0 0.0
  %3097 = vmatprep.subr.mxu0 0.0
  %3098 = vmatpush1.msra.mxu0 0.0
  %3099 = vmatprep.subr.mxu0 0.0
  %3100 = vmatpush1.msra.mxu0 0.0
  %3101 = vmatprep.subr.mxu0 0.0
  %3102 = vmatpush1.msra.mxu0 0.0
  %3103 = vmatprep.subr.mxu0 0.0
  %3104 = vmatpush1.msra.mxu0 0.0
  %3105 = vmatprep.subr.mxu0 0.0
  %3106 = vmatpush1.msra.mxu0 0.0
  %3107 = vmatprep.subr.mxu0 0.0
  %3108 = vmatpush1.msra.mxu0 0.0
  %3109 = vmatprep.subr.mxu0 0.0
  %3110 = vmatpush1.msra.mxu0 0.0
  %3111 = vmatprep.subr.mxu0 0.0
  %3112 = vmatpush1.msra.mxu0 0.0
  %3113 = vmatprep.subr.mxu0 0.0
  %3114 = vmatpush1.msra.mxu0 0.0
  %3115 = vmatprep.subr.mxu0 0.0
  %3116 = vmatpush1.msra.mxu0 0.0
  %3117 = vmatprep.mubr.f32.mxu0 0.0
  %3118 = vmatmul.mubr.f32.gmra.mrb[0].mxu0 %v2976
  %v3119 = vpop.f32.mrb[0].mxu0
  %v3120 = vadd.f32 0.0, %v3119
  %v3121 = vpop.f32.mrb[0].mxu0
  %v3122 = vadd.f32 0.0, %v3121
  %3123 = vdwg.mxu0
  %v3124 = vadd.f32 %v2978, %v3049
  %v3125 = vadd.f32 %v2979, %v3051
  %v3126 = vadd.f32 %v2980, %v3120
  %v3127 = vadd.f32 %v2981, %v3122
  %v3128 = vxor.u32 %v3124, 2147483648
  %v3129 = vmul.f32 %v3128, 1.442695
  %v3130 = vpow.pop %v3129
  %v3131 = vadd.f32 %v3130, 1.0
  %v3132 = vrcp.pop %v3131
  %v3133 = vmul.f32 1.0, %v3132
  %v3134 = vxor.u32 %v3125, 2147483648
  %v3135 = vmul.f32 %v3134, 1.442695
  %v3136 = vpow.pop %v3135
  %v3137 = vadd.f32 %v3136, 1.0
  %v3138 = vrcp.pop %v3137
  %v3139 = vmul.f32 1.0, %v3138
  %v3140 = vtanh.pop %v3126
  %v3141 = vxor.u32 %v3127, 2147483648
  %v3142 = vmul.f32 %v3141, 1.442695
  %v3143 = vpow.pop %v3142
  %v3144 = vadd.f32 %v3143, 1.0
  %v3145 = vrcp.pop %v3144
  %v3146 = vmul.f32 1.0, %v3145
  %v3147 = vmul.f32 %v3139, %v2974
  %v3148 = vmul.f32 %v3133, %v3140
  %v3149 = vadd.f32 %v3147, %v3148
  %v3150 = vtanh.pop %v3149
  %v3151 = vmul.f32 %v3146, %v3150
  %3152 = vst [vmem:[%s1329] sm:$0xff] %v3151
  %v3153 = vld [vmem:[%s1331] sm:$0xff]
  %v3154 = vld [vmem:[%s1331 + $0x8] sm:$0xff]
  %v3155 = vld [vmem:[%s1331 + $0x10] sm:$0xff]
  %v3156 = vld [vmem:[%s1331 + $0x18] sm:$0xff]
  %3157 = vmatprep.subr.mxu0 %v2215
  %3158 = vmatpush1.msra.mxu0 %v2214
  %3159 = vmatprep.subr.mxu0 %v2219
  %3160 = vmatpush1.msra.mxu0 %v2218
  %3161 = vmatprep.subr.mxu0 %v2223
  %3162 = vmatpush1.msra.mxu0 %v2222
  %3163 = vmatprep.subr.mxu0 %v2227
  %3164 = vmatpush1.msra.mxu0 %v2226
  %3165 = vmatprep.subr.mxu0 %v2231
  %3166 = vmatpush1.msra.mxu0 %v2230
  %3167 = vmatprep.subr.mxu0 %v2235
  %3168 = vmatpush1.msra.mxu0 %v2234
  %3169 = vmatprep.subr.mxu0 %v2239
  %3170 = vmatpush1.msra.mxu0 %v2238
  %3171 = vmatprep.subr.mxu0 %v2243
  %3172 = vmatpush1.msra.mxu0 %v2242
  %3173 = vmatprep.subr.mxu0 %v2247
  %3174 = vmatpush1.msra.mxu0 %v2246
  %3175 = vmatprep.subr.mxu0 %v2251
  %3176 = vmatpush1.msra.mxu0 %v2250
  %3177 = vmatprep.subr.mxu0 %v2255
  %3178 = vmatpush1.msra.mxu0 %v2254
  %3179 = vmatprep.subr.mxu0 %v2259
  %3180 = vmatpush1.msra.mxu0 %v2258
  %3181 = vmatprep.subr.mxu0 %v2263
  %3182 = vmatpush1.msra.mxu0 %v2262
  %3183 = vmatprep.subr.mxu0 %v2267
  %3184 = vmatpush1.msra.mxu0 %v2266
  %3185 = vmatprep.subr.mxu0 %v2271
  %3186 = vmatpush1.msra.mxu0 %v2270
  %3187 = vmatprep.subr.mxu0 %v2275
  %3188 = vmatpush1.msra.mxu0 %v2274
  %3189 = vmatprep.subr.mxu0 0.0
  %3190 = vmatpush1.msra.mxu0 0.0
  %3191 = vmatprep.subr.mxu0 0.0
  %3192 = vmatpush1.msra.mxu0 0.0
  %3193 = vmatprep.subr.mxu0 0.0
  %3194 = vmatpush1.msra.mxu0 0.0
  %3195 = vmatprep.subr.mxu0 0.0
  %3196 = vmatpush1.msra.mxu0 0.0
  %3197 = vmatprep.subr.mxu0 0.0
  %3198 = vmatpush1.msra.mxu0 0.0
  %3199 = vmatprep.subr.mxu0 0.0
  %3200 = vmatpush1.msra.mxu0 0.0
  %3201 = vmatprep.subr.mxu0 0.0
  %3202 = vmatpush1.msra.mxu0 0.0
  %3203 = vmatprep.subr.mxu0 0.0
  %3204 = vmatpush1.msra.mxu0 0.0
  %3205 = vmatprep.subr.mxu0 0.0
  %3206 = vmatpush1.msra.mxu0 0.0
  %3207 = vmatprep.subr.mxu0 0.0
  %3208 = vmatpush1.msra.mxu0 0.0
  %3209 = vmatprep.subr.mxu0 0.0
  %3210 = vmatpush1.msra.mxu0 0.0
  %3211 = vmatprep.subr.mxu0 0.0
  %3212 = vmatpush1.msra.mxu0 0.0
  %3213 = vmatprep.subr.mxu0 0.0
  %3214 = vmatpush1.msra.mxu0 0.0
  %3215 = vmatprep.subr.mxu0 0.0
  %3216 = vmatpush1.msra.mxu0 0.0
  %3217 = vmatprep.subr.mxu0 0.0
  %3218 = vmatpush1.msra.mxu0 0.0
  %3219 = vmatprep.subr.mxu0 0.0
  %3220 = vmatpush1.msra.mxu0 0.0
  %3221 = vmatprep.mubr.f32.mxu0 0.0
  %3222 = vmatmul.mubr.f32.gmra.mrb[0].mxu0 %v3151
  %v3223 = vpop.f32.mrb[0].mxu0
  %v3224 = vadd.f32 0.0, %v3223
  %v3225 = vpop.f32.mrb[0].mxu0
  %v3226 = vadd.f32 0.0, %v3225
  %3227 = vdwg.mxu0
  %3228 = vmatprep.subr.mxu0 %v2217
  %3229 = vmatpush1.msra.mxu0 %v2216
  %3230 = vmatprep.subr.mxu0 %v2221
  %3231 = vmatpush1.msra.mxu0 %v2220
  %3232 = vmatprep.subr.mxu0 %v2225
  %3233 = vmatpush1.msra.mxu0 %v2224
  %3234 = vmatprep.subr.mxu0 %v2229
  %3235 = vmatpush1.msra.mxu0 %v2228
  %3236 = vmatprep.subr.mxu0 %v2233
  %3237 = vmatpush1.msra.mxu0 %v2232
  %3238 = vmatprep.subr.mxu0 %v2237
  %3239 = vmatpush1.msra.mxu0 %v2236
  %3240 = vmatprep.subr.mxu0 %v2241
  %3241 = vmatpush1.msra.mxu0 %v2240
  %3242 = vmatprep.subr.mxu0 %v2245
  %3243 = vmatpush1.msra.mxu0 %v2244
  %3244 = vmatprep.subr.mxu0 %v2249
  %3245 = vmatpush1.msra.mxu0 %v2248
  %3246 = vmatprep.subr.mxu0 %v2253
  %3247 = vmatpush1.msra.mxu0 %v2252
  %3248 = vmatprep.subr.mxu0 %v2257
  %3249 = vmatpush1.msra.mxu0 %v2256
  %3250 = vmatprep.subr.mxu0 %v2261
  %3251 = vmatpush1.msra.mxu0 %v2260
  %3252 = vmatprep.subr.mxu0 %v2265
  %3253 = vmatpush1.msra.mxu0 %v2264
  %3254 = vmatprep.subr.mxu0 %v2269
  %3255 = vmatpush1.msra.mxu0 %v2268
  %3256 = vmatprep.subr.mxu0 %v2273
  %3257 = vmatpush1.msra.mxu0 %v2272
  %3258 = vmatprep.subr.mxu0 %v2277
  %3259 = vmatpush1.msra.mxu0 %v2276
  %3260 = vmatprep.subr.mxu0 0.0
  %3261 = vmatpush1.msra.mxu0 0.0
  %3262 = vmatprep.subr.mxu0 0.0
  %3263 = vmatpush1.msra.mxu0 0.0
  %3264 = vmatprep.subr.mxu0 0.0
  %3265 = vmatpush1.msra.mxu0 0.0
  %3266 = vmatprep.subr.mxu0 0.0
  %3267 = vmatpush1.msra.mxu0 0.0
  %3268 = vmatprep.subr.mxu0 0.0
  %3269 = vmatpush1.msra.mxu0 0.0
  %3270 = vmatprep.subr.mxu0 0.0
  %3271 = vmatpush1.msra.mxu0 0.0
  %3272 = vmatprep.subr.mxu0 0.0
  %3273 = vmatpush1.msra.mxu0 0.0
  %3274 = vmatprep.subr.mxu0 0.0
  %3275 = vmatpush1.msra.mxu0 0.0
  %3276 = vmatprep.subr.mxu0 0.0
  %3277 = vmatpush1.msra.mxu0 0.0
  %3278 = vmatprep.subr.mxu0 0.0
  %3279 = vmatpush1.msra.mxu0 0.0
  %3280 = vmatprep.subr.mxu0 0.0
  %3281 = vmatpush1.msra.mxu0 0.0
  %3282 = vmatprep.subr.mxu0 0.0
  %3283 = vmatpush1.msra.mxu0 0.0
  %3284 = vmatprep.subr.mxu0 0.0
  %3285 = vmatpush1.msra.mxu0 0.0
  %3286 = vmatprep.subr.mxu0 0.0
  %3287 = vmatpush1.msra.mxu0 0.0
  %3288 = vmatprep.subr.mxu0 0.0
  %3289 = vmatpush1.msra.mxu0 0.0
  %3290 = vmatprep.subr.mxu0 0.0
  %3291 = vmatpush1.msra.mxu0 0.0
  %3292 = vmatprep.mubr.f32.mxu0 0.0
  %3293 = vmatmul.mubr.f32.gmra.mrb[0].mxu0 %v3151
  %v3294 = vpop.f32.mrb[0].mxu0
  %v3295 = vadd.f32 0.0, %v3294
  %v3296 = vpop.f32.mrb[0].mxu0
  %v3297 = vadd.f32 0.0, %v3296
  %3298 = vdwg.mxu0
  %v3299 = vadd.f32 %v3153, %v3224
  %v3300 = vadd.f32 %v3154, %v3226
  %v3301 = vadd.f32 %v3155, %v3295
  %v3302 = vadd.f32 %v3156, %v3297
  %v3303 = vxor.u32 %v3299, 2147483648
  %v3304 = vmul.f32 %v3303, 1.442695
  %v3305 = vpow.pop %v3304
  %v3306 = vadd.f32 %v3305, 1.0
  %v3307 = vrcp.pop %v3306
  %v3308 = vmul.f32 1.0, %v3307
  %v3309 = vxor.u32 %v3300, 2147483648
  %v3310 = vmul.f32 %v3309, 1.442695
  %v3311 = vpow.pop %v3310
  %v3312 = vadd.f32 %v3311, 1.0
  %v3313 = vrcp.pop %v3312
  %v3314 = vmul.f32 1.0, %v3313
  %v3315 = vtanh.pop %v3301
  %v3316 = vxor.u32 %v3302, 2147483648
  %v3317 = vmul.f32 %v3316, 1.442695
  %v3318 = vpow.pop %v3317
  %v3319 = vadd.f32 %v3318, 1.0
  %v3320 = vrcp.pop %v3319
  %v3321 = vmul.f32 1.0, %v3320
  %v3322 = vmul.f32 %v3314, %v3149
  %v3323 = vmul.f32 %v3308, %v3315
  %v3324 = vadd.f32 %v3322, %v3323
  %v3325 = vtanh.pop %v3324
  %v3326 = vmul.f32 %v3321, %v3325
  %3327 = vst [vmem:[%s1506] sm:$0xff] %v3326
  %v3328 = vld [vmem:[%s1508] sm:$0xff]
  %v3329 = vld [vmem:[%s1508 + $0x8] sm:$0xff]
  %v3330 = vld [vmem:[%s1508 + $0x10] sm:$0xff]
  %v3331 = vld [vmem:[%s1508 + $0x18] sm:$0xff]
  %3332 = vmatprep.subr.mxu0 %v2215
  %3333 = vmatpush1.msra.mxu0 %v2214
  %3334 = vmatprep.subr.mxu0 %v2219
  %3335 = vmatpush1.msra.mxu0 %v2218
  %3336 = vmatprep.subr.mxu0 %v2223
  %3337 = vmatpush1.msra.mxu0 %v2222
  %3338 = vmatprep.subr.mxu0 %v2227
  %3339 = vmatpush1.msra.mxu0 %v2226
  %3340 = vmatprep.subr.mxu0 %v2231
  %3341 = vmatpush1.msra.mxu0 %v2230
  %3342 = vmatprep.subr.mxu0 %v2235
  %3343 = vmatpush1.msra.mxu0 %v2234
  %3344 = vmatprep.subr.mxu0 %v2239
  %3345 = vmatpush1.msra.mxu0 %v2238
  %3346 = vmatprep.subr.mxu0 %v2243
  %3347 = vmatpush1.msra.mxu0 %v2242
  %3348 = vmatprep.subr.mxu0 %v2247
  %3349 = vmatpush1.msra.mxu0 %v2246
  %3350 = vmatprep.subr.mxu0 %v2251
  %3351 = vmatpush1.msra.mxu0 %v2250
  %3352 = vmatprep.subr.mxu0 %v2255
  %3353 = vmatpush1.msra.mxu0 %v2254
  %3354 = vmatprep.subr.mxu0 %v2259
  %3355 = vmatpush1.msra.mxu0 %v2258
  %3356 = vmatprep.subr.mxu0 %v2263
  %3357 = vmatpush1.msra.mxu0 %v2262
  %3358 = vmatprep.subr.mxu0 %v2267
  %3359 = vmatpush1.msra.mxu0 %v2266
  %3360 = vmatprep.subr.mxu0 %v2271
  %3361 = vmatpush1.msra.mxu0 %v2270
  %3362 = vmatprep.subr.mxu0 %v2275
  %3363 = vmatpush1.msra.mxu0 %v2274
  %3364 = vmatprep.subr.mxu0 0.0
  %3365 = vmatpush1.msra.mxu0 0.0
  %3366 = vmatprep.subr.mxu0 0.0
  %3367 = vmatpush1.msra.mxu0 0.0
  %3368 = vmatprep.subr.mxu0 0.0
  %3369 = vmatpush1.msra.mxu0 0.0
  %3370 = vmatprep.subr.mxu0 0.0
  %3371 = vmatpush1.msra.mxu0 0.0
  %3372 = vmatprep.subr.mxu0 0.0
  %3373 = vmatpush1.msra.mxu0 0.0
  %3374 = vmatprep.subr.mxu0 0.0
  %3375 = vmatpush1.msra.mxu0 0.0
  %3376 = vmatprep.subr.mxu0 0.0
  %3377 = vmatpush1.msra.mxu0 0.0
  %3378 = vmatprep.subr.mxu0 0.0
  %3379 = vmatpush1.msra.mxu0 0.0
  %3380 = vmatprep.subr.mxu0 0.0
  %3381 = vmatpush1.msra.mxu0 0.0
  %3382 = vmatprep.subr.mxu0 0.0
  %3383 = vmatpush1.msra.mxu0 0.0
  %3384 = vmatprep.subr.mxu0 0.0
  %3385 = vmatpush1.msra.mxu0 0.0
  %3386 = vmatprep.subr.mxu0 0.0
  %3387 = vmatpush1.msra.mxu0 0.0
  %3388 = vmatprep.subr.mxu0 0.0
  %3389 = vmatpush1.msra.mxu0 0.0
  %3390 = vmatprep.subr.mxu0 0.0
  %3391 = vmatpush1.msra.mxu0 0.0
  %3392 = vmatprep.subr.mxu0 0.0
  %3393 = vmatpush1.msra.mxu0 0.0
  %3394 = vmatprep.subr.mxu0 0.0
  %3395 = vmatpush1.msra.mxu0 0.0
  %3396 = vmatprep.mubr.f32.mxu0 0.0
  %3397 = vmatmul.mubr.f32.gmra.mrb[0].mxu0 %v3326
  %v3398 = vpop.f32.mrb[0].mxu0
  %v3399 = vadd.f32 0.0, %v3398
  %v3400 = vpop.f32.mrb[0].mxu0
  %v3401 = vadd.f32 0.0, %v3400
  %3402 = vdwg.mxu0
  %3403 = vmatprep.subr.mxu0 %v2217
  %3404 = vmatpush1.msra.mxu0 %v2216
  %3405 = vmatprep.subr.mxu0 %v2221
  %3406 = vmatpush1.msra.mxu0 %v2220
  %3407 = vmatprep.subr.mxu0 %v2225
  %3408 = vmatpush1.msra.mxu0 %v2224
  %3409 = vmatprep.subr.mxu0 %v2229
  %3410 = vmatpush1.msra.mxu0 %v2228
  %3411 = vmatprep.subr.mxu0 %v2233
  %3412 = vmatpush1.msra.mxu0 %v2232
  %3413 = vmatprep.subr.mxu0 %v2237
  %3414 = vmatpush1.msra.mxu0 %v2236
  %3415 = vmatprep.subr.mxu0 %v2241
  %3416 = vmatpush1.msra.mxu0 %v2240
  %3417 = vmatprep.subr.mxu0 %v2245
  %3418 = vmatpush1.msra.mxu0 %v2244
  %3419 = vmatprep.subr.mxu0 %v2249
  %3420 = vmatpush1.msra.mxu0 %v2248
  %3421 = vmatprep.subr.mxu0 %v2253
  %3422 = vmatpush1.msra.mxu0 %v2252
  %3423 = vmatprep.subr.mxu0 %v2257
  %3424 = vmatpush1.msra.mxu0 %v2256
  %3425 = vmatprep.subr.mxu0 %v2261
  %3426 = vmatpush1.msra.mxu0 %v2260
  %3427 = vmatprep.subr.mxu0 %v2265
  %3428 = vmatpush1.msra.mxu0 %v2264
  %3429 = vmatprep.subr.mxu0 %v2269
  %3430 = vmatpush1.msra.mxu0 %v2268
  %3431 = vmatprep.subr.mxu0 %v2273
  %3432 = vmatpush1.msra.mxu0 %v2272
  %3433 = vmatprep.subr.mxu0 %v2277
  %3434 = vmatpush1.msra.mxu0 %v2276
  %3435 = vmatprep.subr.mxu0 0.0
  %3436 = vmatpush1.msra.mxu0 0.0
  %3437 = vmatprep.subr.mxu0 0.0
  %3438 = vmatpush1.msra.mxu0 0.0
  %3439 = vmatprep.subr.mxu0 0.0
  %3440 = vmatpush1.msra.mxu0 0.0
  %3441 = vmatprep.subr.mxu0 0.0
  %3442 = vmatpush1.msra.mxu0 0.0
  %3443 = vmatprep.subr.mxu0 0.0
  %3444 = vmatpush1.msra.mxu0 0.0
  %3445 = vmatprep.subr.mxu0 0.0
  %3446 = vmatpush1.msra.mxu0 0.0
  %3447 = vmatprep.subr.mxu0 0.0
  %3448 = vmatpush1.msra.mxu0 0.0
  %3449 = vmatprep.subr.mxu0 0.0
  %3450 = vmatpush1.msra.mxu0 0.0
  %3451 = vmatprep.subr.mxu0 0.0
  %3452 = vmatpush1.msra.mxu0 0.0
  %3453 = vmatprep.subr.mxu0 0.0
  %3454 = vmatpush1.msra.mxu0 0.0
  %3455 = vmatprep.subr.mxu0 0.0
  %3456 = vmatpush1.msra.mxu0 0.0
  %3457 = vmatprep.subr.mxu0 0.0
  %3458 = vmatpush1.msra.mxu0 0.0
  %3459 = vmatprep.subr.mxu0 0.0
  %3460 = vmatpush1.msra.mxu0 0.0
  %3461 = vmatprep.subr.mxu0 0.0
  %3462 = vmatpush1.msra.mxu0 0.0
  %3463 = vmatprep.subr.mxu0 0.0
  %3464 = vmatpush1.msra.mxu0 0.0
  %3465 = vmatprep.subr.mxu0 0.0
  %3466 = vmatpush1.msra.mxu0 0.0
  %3467 = vmatprep.mubr.f32.mxu0 0.0
  %3468 = vmatmul.mubr.f32.gmra.mrb[0].mxu0 %v3326
  %v3469 = vpop.f32.mrb[0].mxu0
  %v3470 = vadd.f32 0.0, %v3469
  %v3471 = vpop.f32.mrb[0].mxu0
  %v3472 = vadd.f32 0.0, %v3471
  %3473 = vdwg.mxu0
  %v3474 = vadd.f32 %v3328, %v3399
  %v3475 = vadd.f32 %v3329, %v3401
  %v3476 = vadd.f32 %v3330, %v3470
  %v3477 = vadd.f32 %v3331, %v3472
  %v3478 = vxor.u32 %v3474, 2147483648
  %v3479 = vmul.f32 %v3478, 1.442695
  %v3480 = vpow.pop %v3479
  %v3481 = vadd.f32 %v3480, 1.0
  %v3482 = vrcp.pop %v3481
  %v3483 = vmul.f32 1.0, %v3482
  %v3484 = vxor.u32 %v3475, 2147483648
  %v3485 = vmul.f32 %v3484, 1.442695
  %v3486 = vpow.pop %v3485
  %v3487 = vadd.f32 %v3486, 1.0
  %v3488 = vrcp.pop %v3487
  %v3489 = vmul.f32 1.0, %v3488
  %v3490 = vtanh.pop %v3476
  %v3491 = vxor.u32 %v3477, 2147483648
  %v3492 = vmul.f32 %v3491, 1.442695
  %v3493 = vpow.pop %v3492
  %v3494 = vadd.f32 %v3493, 1.0
  %v3495 = vrcp.pop %v3494
  %v3496 = vmul.f32 1.0, %v3495
  %v3497 = vmul.f32 %v3489, %v3324
  %v3498 = vmul.f32 %v3483, %v3490
  %v3499 = vadd.f32 %v3497, %v3498
  %v3500 = vtanh.pop %v3499
  %v3501 = vmul.f32 %v3496, %v3500
  %3502 = vst [vmem:[%s1683] sm:$0xff] %v3501
  %v3503 = vld [vmem:[%s1685] sm:$0xff]
  %v3504 = vld [vmem:[%s1685 + $0x8] sm:$0xff]
  %v3505 = vld [vmem:[%s1685 + $0x10] sm:$0xff]
  %v3506 = vld [vmem:[%s1685 + $0x18] sm:$0xff]
  %3507 = vmatprep.subr.mxu0 %v2215
  %3508 = vmatpush1.msra.mxu0 %v2214
  %3509 = vmatprep.subr.mxu0 %v2219
  %3510 = vmatpush1.msra.mxu0 %v2218
  %3511 = vmatprep.subr.mxu0 %v2223
  %3512 = vmatpush1.msra.mxu0 %v2222
  %3513 = vmatprep.subr.mxu0 %v2227
  %3514 = vmatpush1.msra.mxu0 %v2226
  %3515 = vmatprep.subr.mxu0 %v2231
  %3516 = vmatpush1.msra.mxu0 %v2230
  %3517 = vmatprep.subr.mxu0 %v2235
  %3518 = vmatpush1.msra.mxu0 %v2234
  %3519 = vmatprep.subr.mxu0 %v2239
  %3520 = vmatpush1.msra.mxu0 %v2238
  %3521 = vmatprep.subr.mxu0 %v2243
  %3522 = vmatpush1.msra.mxu0 %v2242
  %3523 = vmatprep.subr.mxu0 %v2247
  %3524 = vmatpush1.msra.mxu0 %v2246
  %3525 = vmatprep.subr.mxu0 %v2251
  %3526 = vmatpush1.msra.mxu0 %v2250
  %3527 = vmatprep.subr.mxu0 %v2255
  %3528 = vmatpush1.msra.mxu0 %v2254
  %3529 = vmatprep.subr.mxu0 %v2259
  %3530 = vmatpush1.msra.mxu0 %v2258
  %3531 = vmatprep.subr.mxu0 %v2263
  %3532 = vmatpush1.msra.mxu0 %v2262
  %3533 = vmatprep.subr.mxu0 %v2267
  %3534 = vmatpush1.msra.mxu0 %v2266
  %3535 = vmatprep.subr.mxu0 %v2271
  %3536 = vmatpush1.msra.mxu0 %v2270
  %3537 = vmatprep.subr.mxu0 %v2275
  %3538 = vmatpush1.msra.mxu0 %v2274
  %3539 = vmatprep.subr.mxu0 0.0
  %3540 = vmatpush1.msra.mxu0 0.0
  %3541 = vmatprep.subr.mxu0 0.0
  %3542 = vmatpush1.msra.mxu0 0.0
  %3543 = vmatprep.subr.mxu0 0.0
  %3544 = vmatpush1.msra.mxu0 0.0
  %3545 = vmatprep.subr.mxu0 0.0
  %3546 = vmatpush1.msra.mxu0 0.0
  %3547 = vmatprep.subr.mxu0 0.0
  %3548 = vmatpush1.msra.mxu0 0.0
  %3549 = vmatprep.subr.mxu0 0.0
  %3550 = vmatpush1.msra.mxu0 0.0
  %3551 = vmatprep.subr.mxu0 0.0
  %3552 = vmatpush1.msra.mxu0 0.0
  %3553 = vmatprep.subr.mxu0 0.0
  %3554 = vmatpush1.msra.mxu0 0.0
  %3555 = vmatprep.subr.mxu0 0.0
  %3556 = vmatpush1.msra.mxu0 0.0
  %3557 = vmatprep.subr.mxu0 0.0
  %3558 = vmatpush1.msra.mxu0 0.0
  %3559 = vmatprep.subr.mxu0 0.0
  %3560 = vmatpush1.msra.mxu0 0.0
  %3561 = vmatprep.subr.mxu0 0.0
  %3562 = vmatpush1.msra.mxu0 0.0
  %3563 = vmatprep.subr.mxu0 0.0
  %3564 = vmatpush1.msra.mxu0 0.0
  %3565 = vmatprep.subr.mxu0 0.0
  %3566 = vmatpush1.msra.mxu0 0.0
  %3567 = vmatprep.subr.mxu0 0.0
  %3568 = vmatpush1.msra.mxu0 0.0
  %3569 = vmatprep.subr.mxu0 0.0
  %3570 = vmatpush1.msra.mxu0 0.0
  %3571 = vmatprep.mubr.f32.mxu0 0.0
  %3572 = vmatmul.mubr.f32.gmra.mrb[0].mxu0 %v3501
  %v3573 = vpop.f32.mrb[0].mxu0
  %v3574 = vadd.f32 0.0, %v3573
  %v3575 = vpop.f32.mrb[0].mxu0
  %v3576 = vadd.f32 0.0, %v3575
  %3577 = vdwg.mxu0
  %3578 = vmatprep.subr.mxu0 %v2217
  %3579 = vmatpush1.msra.mxu0 %v2216
  %3580 = vmatprep.subr.mxu0 %v2221
  %3581 = vmatpush1.msra.mxu0 %v2220
  %3582 = vmatprep.subr.mxu0 %v2225
  %3583 = vmatpush1.msra.mxu0 %v2224
  %3584 = vmatprep.subr.mxu0 %v2229
  %3585 = vmatpush1.msra.mxu0 %v2228
  %3586 = vmatprep.subr.mxu0 %v2233
  %3587 = vmatpush1.msra.mxu0 %v2232
  %3588 = vmatprep.subr.mxu0 %v2237
  %3589 = vmatpush1.msra.mxu0 %v2236
  %3590 = vmatprep.subr.mxu0 %v2241
  %3591 = vmatpush1.msra.mxu0 %v2240
  %3592 = vmatprep.subr.mxu0 %v2245
  %3593 = vmatpush1.msra.mxu0 %v2244
  %3594 = vmatprep.subr.mxu0 %v2249
  %3595 = vmatpush1.msra.mxu0 %v2248
  %3596 = vmatprep.subr.mxu0 %v2253
  %3597 = vmatpush1.msra.mxu0 %v2252
  %3598 = vmatprep.subr.mxu0 %v2257
  %3599 = vmatpush1.msra.mxu0 %v2256
  %3600 = vmatprep.subr.mxu0 %v2261
  %3601 = vmatpush1.msra.mxu0 %v2260
  %3602 = vmatprep.subr.mxu0 %v2265
  %3603 = vmatpush1.msra.mxu0 %v2264
  %3604 = vmatprep.subr.mxu0 %v2269
  %3605 = vmatpush1.msra.mxu0 %v2268
  %3606 = vmatprep.subr.mxu0 %v2273
  %3607 = vmatpush1.msra.mxu0 %v2272
  %3608 = vmatprep.subr.mxu0 %v2277
  %3609 = vmatpush1.msra.mxu0 %v2276
  %3610 = vmatprep.subr.mxu0 0.0
  %3611 = vmatpush1.msra.mxu0 0.0
  %3612 = vmatprep.subr.mxu0 0.0
  %3613 = vmatpush1.msra.mxu0 0.0
  %3614 = vmatprep.subr.mxu0 0.0
  %3615 = vmatpush1.msra.mxu0 0.0
  %3616 = vmatprep.subr.mxu0 0.0
  %3617 = vmatpush1.msra.mxu0 0.0
  %3618 = vmatprep.subr.mxu0 0.0
  %3619 = vmatpush1.msra.mxu0 0.0
  %3620 = vmatprep.subr.mxu0 0.0
  %3621 = vmatpush1.msra.mxu0 0.0
  %3622 = vmatprep.subr.mxu0 0.0
  %3623 = vmatpush1.msra.mxu0 0.0
  %3624 = vmatprep.subr.mxu0 0.0
  %3625 = vmatpush1.msra.mxu0 0.0
  %3626 = vmatprep.subr.mxu0 0.0
  %3627 = vmatpush1.msra.mxu0 0.0
  %3628 = vmatprep.subr.mxu0 0.0
  %3629 = vmatpush1.msra.mxu0 0.0
  %3630 = vmatprep.subr.mxu0 0.0
  %3631 = vmatpush1.msra.mxu0 0.0
  %3632 = vmatprep.subr.mxu0 0.0
  %3633 = vmatpush1.msra.mxu0 0.0
  %3634 = vmatprep.subr.mxu0 0.0
  %3635 = vmatpush1.msra.mxu0 0.0
  %3636 = vmatprep.subr.mxu0 0.0
  %3637 = vmatpush1.msra.mxu0 0.0
  %3638 = vmatprep.subr.mxu0 0.0
  %3639 = vmatpush1.msra.mxu0 0.0
  %3640 = vmatprep.subr.mxu0 0.0
  %3641 = vmatpush1.msra.mxu0 0.0
  %3642 = vmatprep.mubr.f32.mxu0 0.0
  %3643 = vmatmul.mubr.f32.gmra.mrb[0].mxu0 %v3501
  %v3644 = vpop.f32.mrb[0].mxu0
  %v3645 = vadd.f32 0.0, %v3644
  %v3646 = vpop.f32.mrb[0].mxu0
  %v3647 = vadd.f32 0.0, %v3646
  %3648 = vdwg.mxu0
  %v3649 = vadd.f32 %v3503, %v3574
  %v3650 = vadd.f32 %v3504, %v3576
  %v3651 = vadd.f32 %v3505, %v3645
  %v3652 = vadd.f32 %v3506, %v3647
  %v3653 = vxor.u32 %v3649, 2147483648
  %v3654 = vmul.f32 %v3653, 1.442695
  %v3655 = vpow.pop %v3654
  %v3656 = vadd.f32 %v3655, 1.0
  %v3657 = vrcp.pop %v3656
  %v3658 = vmul.f32 1.0, %v3657
  %v3659 = vxor.u32 %v3650, 2147483648
  %v3660 = vmul.f32 %v3659, 1.442695
  %v3661 = vpow.pop %v3660
  %v3662 = vadd.f32 %v3661, 1.0
  %v3663 = vrcp.pop %v3662
  %v3664 = vmul.f32 1.0, %v3663
  %v3665 = vtanh.pop %v3651
  %v3666 = vxor.u32 %v3652, 2147483648
  %v3667 = vmul.f32 %v3666, 1.442695
  %v3668 = vpow.pop %v3667
  %v3669 = vadd.f32 %v3668, 1.0
  %v3670 = vrcp.pop %v3669
  %v3671 = vmul.f32 1.0, %v3670
  %v3672 = vmul.f32 %v3664, %v3499
  %v3673 = vmul.f32 %v3658, %v3665
  %v3674 = vadd.f32 %v3672, %v3673
  %v3675 = vtanh.pop %v3674
  %v3676 = vmul.f32 %v3671, %v3675
  %3677 = vst [vmem:[%s1860] sm:$0xff] %v3676
  %v3678 = vld [vmem:[%s7] sm:$0xff]
  %v3679 = vld [vmem:[%s7 + $0x8] sm:$0xff]
  %v3680 = vld [vmem:[%s7 + $0x10] sm:$0xff]
  %v3681 = vld [vmem:[%s7 + $0x18] sm:$0xff]
  %v3682 = vld [vmem:[%s7 + $0x20] sm:$0xff]
  %v3683 = vld [vmem:[%s7 + $0x28] sm:$0xff]
  %v3684 = vld [vmem:[%s7 + $0x30] sm:$0xff]
  %v3685 = vld [vmem:[%s7 + $0x38] sm:$0xff]
  %v3686 = vld [vmem:[%s7 + $0x40] sm:$0xff]
  %v3687 = vld [vmem:[%s7 + $0x48] sm:$0xff]
  %v3688 = vld [vmem:[%s7 + $0x50] sm:$0xff]
  %v3689 = vld [vmem:[%s7 + $0x58] sm:$0xff]
  %v3690 = vld [vmem:[%s7 + $0x60] sm:$0xff]
  %v3691 = vld [vmem:[%s7 + $0x68] sm:$0xff]
  %v3692 = vld [vmem:[%s7 + $0x70] sm:$0xff]
  %v3693 = vld [vmem:[%s7 + $0x78] sm:$0xff]
  %v3694 = vld [vmem:[%s8] sm:$0x1]
  %v3696 = vlaneseq
  %v3697 = vshrl.u32 %v3696, 7
  %v3698 = vsub.s32 0, %v3697
  %v3699 = vrot.slane %v3694, %v3698
  %3701 = vmatprep.subr.mxu0 0.0
  %3702 = vmatpush1.msra.mxu0 %v3678
  %3703 = vmatprep.subr.mxu0 0.0
  %3704 = vmatpush1.msra.mxu0 %v3679
  %3705 = vmatprep.subr.mxu0 0.0
  %3706 = vmatpush1.msra.mxu0 %v3680
  %3707 = vmatprep.subr.mxu0 0.0
  %3708 = vmatpush1.msra.mxu0 %v3681
  %3709 = vmatprep.subr.mxu0 0.0
  %3710 = vmatpush1.msra.mxu0 %v3682
  %3711 = vmatprep.subr.mxu0 0.0
  %3712 = vmatpush1.msra.mxu0 %v3683
  %3713 = vmatprep.subr.mxu0 0.0
  %3714 = vmatpush1.msra.mxu0 %v3684
  %3715 = vmatprep.subr.mxu0 0.0
  %3716 = vmatpush1.msra.mxu0 %v3685
  %3717 = vmatprep.subr.mxu0 0.0
  %3718 = vmatpush1.msra.mxu0 %v3686
  %3719 = vmatprep.subr.mxu0 0.0
  %3720 = vmatpush1.msra.mxu0 %v3687
  %3721 = vmatprep.subr.mxu0 0.0
  %3722 = vmatpush1.msra.mxu0 %v3688
  %3723 = vmatprep.subr.mxu0 0.0
  %3724 = vmatpush1.msra.mxu0 %v3689
  %3725 = vmatprep.subr.mxu0 0.0
  %3726 = vmatpush1.msra.mxu0 %v3690
  %3727 = vmatprep.subr.mxu0 0.0
  %3728 = vmatpush1.msra.mxu0 %v3691
  %3729 = vmatprep.subr.mxu0 0.0
  %3730 = vmatpush1.msra.mxu0 %v3692
  %3731 = vmatprep.subr.mxu0 0.0
  %3732 = vmatpush1.msra.mxu0 %v3693
  %3733 = vmatprep.subr.mxu0 0.0
  %3734 = vmatpush1.msra.mxu0 0.0
  %3735 = vmatprep.subr.mxu0 0.0
  %3736 = vmatpush1.msra.mxu0 0.0
  %3737 = vmatprep.subr.mxu0 0.0
  %3738 = vmatpush1.msra.mxu0 0.0
  %3739 = vmatprep.subr.mxu0 0.0
  %3740 = vmatpush1.msra.mxu0 0.0
  %3741 = vmatprep.subr.mxu0 0.0
  %3742 = vmatpush1.msra.mxu0 0.0
  %3743 = vmatprep.subr.mxu0 0.0
  %3744 = vmatpush1.msra.mxu0 0.0
  %3745 = vmatprep.subr.mxu0 0.0
  %3746 = vmatpush1.msra.mxu0 0.0
  %3747 = vmatprep.subr.mxu0 0.0
  %3748 = vmatpush1.msra.mxu0 0.0
  %3749 = vmatprep.subr.mxu0 0.0
  %3750 = vmatpush1.msra.mxu0 0.0
  %3751 = vmatprep.subr.mxu0 0.0
  %3752 = vmatpush1.msra.mxu0 0.0
  %3753 = vmatprep.subr.mxu0 0.0
  %3754 = vmatpush1.msra.mxu0 0.0
  %3755 = vmatprep.subr.mxu0 0.0
  %3756 = vmatpush1.msra.mxu0 0.0
  %3757 = vmatprep.subr.mxu0 0.0
  %3758 = vmatpush1.msra.mxu0 0.0
  %3759 = vmatprep.subr.mxu0 0.0
  %3760 = vmatpush1.msra.mxu0 0.0
  %3761 = vmatprep.subr.mxu0 0.0
  %3762 = vmatpush1.msra.mxu0 0.0
  %3763 = vmatprep.subr.mxu0 0.0
  %3764 = vmatpush1.msra.mxu0 0.0
  %3765 = vmatprep.mubr.f32.mxu0 0.0
  %3766 = vmatmul.mubr.f32.gmra.mrb[0].mxu0 %v3676
  %v3767 = vpop.f32.mrb[0].mxu0
  %v3768 = vadd.f32 %v3699, %v3767
  %v3769 = vpop.f32.mrb[0].mxu0
  %3770 = vdwg.mxu0
  %3771 = vst [vmem:[%s9] sm:$0xff] %v3768
  // Predicated region
  $region38: #{lstm_forward.1} parent=0 // pred_check
    _
  $region39: #{lstm_forward.1} parent=0 // pred_check_branch
    %3773 = sbr.rel (0) target = $region41
  $region40: #{lstm_forward.1} parent=0 // pred_region
    _
  $region41: #{lstm_forward.1} parent=0 // pred_fallthru
    _
  // Predicated region
  $region42: #{lstm_forward.1} parent=0 // pred_check
    _
  $region43: #{lstm_forward.1} parent=0 // pred_check_branch
    %3775 = sbr.rel (0) target = $region45
  $region44: #{lstm_forward.1} parent=0 // pred_region
    _
  $region45: #{lstm_forward.1} parent=0 // pred_fallthru
    _

</llo_original>
